<compile_context>
chip_gen: v6e
topology: v6e:2x2x1
jax: 0.10.0
libtpu: 0.0.40
codegen_flags: <defaults>
</compile_context>

<pallas_src>
import functools

import jax
import jax.numpy as jnp
from jax.experimental import pallas as pl
from jax.experimental.pallas import tpu as pltpu


# ----------------------------------------------------------------------------
# VMEM budget: ~3/4 of physical VMEM, capped at 96 MiB (fallback 48 MiB).
# ----------------------------------------------------------------------------
def _pick_vmem_limit():
    try:
        cap = pltpu.get_tpu_info().vmem_capacity_bytes
        return int(min(cap * 3 // 4, 96 * 1024 * 1024))
    except Exception:
        return 48 * 1024 * 1024


_VMEM_LIMIT = _pick_vmem_limit()


# ----------------------------------------------------------------------------
# In-kernel math helpers (operate on VMEM-resident jnp values)
# ----------------------------------------------------------------------------
def _layer_norm(x, g, b, eps=1e-5):
    mu = jnp.mean(x, axis=-1, keepdims=True)
    var = jnp.mean((x - mu) ** 2, axis=-1, keepdims=True)
    return (x - mu) * jax.lax.rsqrt(var + eps) * g + b


def _mm_bf16(a, b):
    # bf16 MXU operands, f32 accumulation.
    return jnp.dot(a.astype(jnp.bfloat16), b.astype(jnp.bfloat16),
                   preferred_element_type=jnp.float32)


def _flash_attn(q, k_cache_ref, v_cache_ref, num_k_tiles, tk, q0=None):
    """Online-softmax attention of a q tile against key/value tiles in VMEM.

    q:            (TQ, D); cast to bf16 for the MXU.
    k/v caches:   VMEM refs (L, D) bf16; consumed in tiles of `tk` rows.
    num_k_tiles:  may be traced (causal kernels skip fully-masked blocks).
    q0:           global row offset of the q tile; if given, a causal mask is
                  applied (the 1/sqrt(D) scale is folded into Wq at pack time).
    """
    q = q.astype(jnp.bfloat16)
    tq, d = q.shape
    m0 = jnp.full((tq, 1), -1e30, jnp.float32)
    l0 = jnp.zeros((tq, 1), jnp.float32)
    acc0 = jnp.zeros((tq, d), jnp.float32)

    def body(ko, carry):
        m, l, acc = carry
        k0 = pl.multiple_of(ko * tk, tk)
        k = k_cache_ref[pl.ds(k0, tk), :]
        v = v_cache_ref[pl.ds(k0, tk), :]
        # (TQ, D) x (TK, D) -> (TQ, TK), contracting over D (no transpose).
        s = jax.lax.dot_general(q, k,
                                dimension_numbers=(((1,), (1,)), ((), ())),
                                preferred_element_type=jnp.float32)
        if q0 is not None:
            row = q0 + jax.lax.broadcasted_iota(jnp.int32, (tq, tk), 0)
            col = k0 + jax.lax.broadcasted_iota(jnp.int32, (tq, tk), 1)
            s = jnp.where(col <= row, s, jnp.float32(-1e30))
        m_new = jnp.maximum(m, jnp.max(s, axis=-1, keepdims=True))
        alpha = jnp.exp(m - m_new)
        p = jnp.exp(s - m_new)
        l_new = alpha * l + jnp.sum(p, axis=-1, keepdims=True)
        acc_new = alpha * acc + jnp.dot(p.astype(jnp.bfloat16), v,
                                        preferred_element_type=jnp.float32)
        return m_new, l_new, acc_new

    _, l, acc = jax.lax.fori_loop(0, num_k_tiles, body, (m0, l0, acc0))
    return acc * pl.reciprocal(l, approx=True)


# ----------------------------------------------------------------------------
# Encoder layer kernel.  grid = (batch, query-tile); qi is "arbitrary" so the
# bf16 Q/K/V caches written at qi==0 persist for the remaining tiles of b.
# ----------------------------------------------------------------------------
def encoder_layer_kernel(xq_ref, xf_ref,
                         wqkv_ref, wo_ref,
                         w1_ref, b1_ref, w2_ref, b2_ref,
                         g1_ref, be1_ref, g2_ref, be2_ref,
                         out_ref,
                         q_cache, k_cache, v_cache):
    qi = pl.program_id(1)
    tq, d = out_ref.shape[1], out_ref.shape[2]
    s_len = xf_ref.shape[1]
    tk = tq
    n_kt = s_len // tk

    # --- once per batch element: LN(full seq) + fused QKV -> bf16 caches ---
    @pl.when(qi == 0)
    def _():
        hf = _layer_norm(xf_ref[0].astype(jnp.float32), g1_ref[...], be1_ref[...])
        qkv = _mm_bf16(hf, wqkv_ref[...])                 # (S, 3D) f32
        q_cache[...] = qkv[:, :d].astype(jnp.bfloat16)
        k_cache[...] = qkv[:, d:2 * d].astype(jnp.bfloat16)
        v_cache[...] = qkv[:, 2 * d:].astype(jnp.bfloat16)

    x = xq_ref[0].astype(jnp.float32)                     # (TQ, D) residual
    q0 = pl.multiple_of(qi * tq, tq)

    # --- self attention (pre-LN); Q sliced from the cache, flash over keys ---
    q = q_cache[pl.ds(q0, tq), :]
    a = _flash_attn(q, k_cache, v_cache, n_kt, tk)        # (TQ, D) f32
    x = x + _mm_bf16(a, wo_ref[...])

    # --- feed forward (pre-LN) ---
    h = _layer_norm(x, g2_ref[...], be2_ref[...])
    f = jnp.maximum(_mm_bf16(h, w1_ref[...]) + b1_ref[...], 0.0)
    x = x + _mm_bf16(f, w2_ref[...]) + b2_ref[...]

    out_ref[0] = x.astype(out_ref.dtype)


# ----------------------------------------------------------------------------
# Decoder layer kernel: causal self-attention (masked key blocks skipped) +
# cross-attention over the bf16 encoder memory + FFN.
# ----------------------------------------------------------------------------
def decoder_layer_kernel(zq_ref, zf_ref, c_ref,
                         sqkv_ref, swo_ref,
                         cwq_ref, cwkv_ref, cwo_ref,
                         w1_ref, b1_ref, w2_ref, b2_ref,
                         g1_ref, be1_ref, g2_ref, be2_ref, g3_ref, be3_ref,
                         out_ref,
                         sq_cache, sk_cache, sv_cache, ck_cache, cv_cache):
    qi = pl.program_id(1)
    tq, d = out_ref.shape[1], out_ref.shape[2]
    s_len = c_ref.shape[1]
    tk = tq
    n_ct = s_len // tk

    # --- once per batch element: self QKV over LN(zf) and cross KV over c ---
    @pl.when(qi == 0)
    def _():
        hf = _layer_norm(zf_ref[0].astype(jnp.float32), g1_ref[...], be1_ref[...])
        qkv = _mm_bf16(hf, sqkv_ref[...])                 # (T, 3D) f32
        sq_cache[...] = qkv[:, :d].astype(jnp.bfloat16)
        sk_cache[...] = qkv[:, d:2 * d].astype(jnp.bfloat16)
        sv_cache[...] = qkv[:, 2 * d:].astype(jnp.bfloat16)
        ckv = _mm_bf16(c_ref[0], cwkv_ref[...])           # (S, 2D); c is bf16
        ck_cache[...] = ckv[:, :d].astype(jnp.bfloat16)
        cv_cache[...] = ckv[:, d:].astype(jnp.bfloat16)

    z = zq_ref[0].astype(jnp.float32)                     # (TQ, D) residual
    q0 = pl.multiple_of(qi * tq, tq)

    # --- causal self attention: only key tiles up to (and incl.) diagonal ---
    q = sq_cache[pl.ds(q0, tq), :]
    a = _flash_attn(q, sk_cache, sv_cache, qi + 1, tk, q0=q0)
    z = z + _mm_bf16(a, swo_ref[...])

    # --- cross attention over encoder memory (pre-LN on queries) ---
    h = _layer_norm(z, g2_ref[...], be2_ref[...])
    qc = _mm_bf16(h, cwq_ref[...])
    a = _flash_attn(qc, ck_cache, cv_cache, n_ct, tk)
    z = z + _mm_bf16(a, cwo_ref[...])

    # --- feed forward (pre-LN) ---
    h = _layer_norm(z, g3_ref[...], be3_ref[...])
    f = jnp.maximum(_mm_bf16(h, w1_ref[...]) + b1_ref[...], 0.0)
    z = z + _mm_bf16(f, w2_ref[...]) + b2_ref[...]

    out_ref[0] = z.astype(out_ref.dtype)


# ----------------------------------------------------------------------------
# Wrappers
# ----------------------------------------------------------------------------
def _wspec(shape):
    return pl.BlockSpec(shape, lambda b, qi: (0, 0))


@functools.partial(jax.jit, static_argnames=("tq",))
def encoder_forward(x, p, *, tq):
    B, S, D = x.shape
    F = p["w1"].shape[1]
    TQ = min(tq, S)
    assert S % TQ == 0
    NQ = S // TQ

    x_bf = x.astype(jnp.bfloat16)        # bf16 full-seq stream (read once / b)

    xq_spec = pl.BlockSpec((1, TQ, D), lambda b, qi: (b, qi, 0))
    xf_spec = pl.BlockSpec((1, S, D), lambda b, qi: (b, 0, 0))

    return pl.pallas_call(
        encoder_layer_kernel,
        out_shape=jax.ShapeDtypeStruct((B, S, D), jnp.bfloat16),
        grid=(B, NQ),
        in_specs=[xq_spec, xf_spec,
                  _wspec((D, 3 * D)), _wspec((D, D)),
                  _wspec((D, F)), _wspec((1, F)), _wspec((F, D)), _wspec((1, D)),
                  _wspec((1, D)), _wspec((1, D)), _wspec((1, D)), _wspec((1, D))],
        out_specs=xq_spec,
        scratch_shapes=[pltpu.VMEM((S, D), jnp.bfloat16),
                        pltpu.VMEM((S, D), jnp.bfloat16),
                        pltpu.VMEM((S, D), jnp.bfloat16)],
        compiler_params=pltpu.CompilerParams(
            dimension_semantics=("parallel", "arbitrary"),
            vmem_limit_bytes=_VMEM_LIMIT),
    )(x, x_bf,
      p["wqkv"], p["wo"],
      p["w1"], p["b1"], p["w2"], p["b2"],
      p["g1"], p["be1"], p["g2"], p["be2"])


@functools.partial(jax.jit, static_argnames=("tq",))
def decoder_forward(z, c, p, *, tq):
    B, T, D = z.shape
    _, S, _ = c.shape
    F = p["w1"].shape[1]
    TQ = min(tq, T)
    assert T % TQ == 0 and S % TQ == 0
    NQ = T // TQ

    z_bf = z.astype(jnp.bfloat16)        # bf16 full-seq stream (read once / b)

    zq_spec = pl.BlockSpec((1, TQ, D), lambda b, qi: (b, qi, 0))
    zf_spec = pl.BlockSpec((1, T, D), lambda b, qi: (b, 0, 0))
    c_spec = pl.BlockSpec((1, S, D), lambda b, qi: (b, 0, 0))

    return pl.pallas_call(
        decoder_layer_kernel,
        out_shape=jax.ShapeDtypeStruct((B, T, D), jnp.bfloat16),
        grid=(B, NQ),
        in_specs=[zq_spec, zf_spec, c_spec,
                  _wspec((D, 3 * D)), _wspec((D, D)),
                  _wspec((D, D)), _wspec((D, 2 * D)), _wspec((D, D)),
                  _wspec((D, F)), _wspec((1, F)), _wspec((F, D)), _wspec((1, D)),
                  _wspec((1, D)), _wspec((1, D)), _wspec((1, D)), _wspec((1, D)),
                  _wspec((1, D)), _wspec((1, D))],
        out_specs=zq_spec,
        scratch_shapes=[pltpu.VMEM((T, D), jnp.bfloat16),
                        pltpu.VMEM((T, D), jnp.bfloat16),
                        pltpu.VMEM((T, D), jnp.bfloat16),
                        pltpu.VMEM((S, D), jnp.bfloat16),
                        pltpu.VMEM((S, D), jnp.bfloat16)],
        compiler_params=pltpu.CompilerParams(
            dimension_semantics=("parallel", "arbitrary"),
            vmem_limit_bytes=_VMEM_LIMIT),
    )(z, z_bf, c,
      p["sqkv"], p["swo"],
      p["cwq"], p["cwkv"], p["cwo"],
      p["w1"], p["b1"], p["w2"], p["b2"],
      p["g1"], p["be1"], p["g2"], p["be2"], p["g3"], p["be3"])


def transformer_forward(x, z, enc_packed, dec_packed, *, tq):
    c = encoder_forward(x, enc_packed, tq=tq)       # encode (bf16 memory)
    y = decoder_forward(z, c, dec_packed, tq=tq)    # decode: decoder(z, c)
    return y


# ----------------------------------------------------------------------------
# Host-side weight packing: fuse Q|K|V, fold 1/sqrt(D) into Wq, cast to bf16
# ----------------------------------------------------------------------------
def pack_encoder_params(p):
    d = p["wq"].shape[0]
    scale = 1.0 / jnp.sqrt(jnp.float32(d))
    bf = lambda a: a.astype(jnp.bfloat16)
    return dict(
        wqkv=bf(jnp.concatenate([p["wq"] * scale, p["wk"], p["wv"]], axis=1)),
        wo=bf(p["wo"]),
        w1=bf(p["w1"]), b1=p["b1"], w2=bf(p["w2"]), b2=p["b2"],
        g1=p["g1"], be1=p["be1"], g2=p["g2"], be2=p["be2"],
    )


def pack_decoder_params(p):
    d = p["swq"].shape[0]
    scale = 1.0 / jnp.sqrt(jnp.float32(d))
    bf = lambda a: a.astype(jnp.bfloat16)
    return dict(
        sqkv=bf(jnp.concatenate([p["swq"] * scale, p["swk"], p["swv"]], axis=1)),
        swo=bf(p["swo"]),
        cwq=bf(p["cwq"] * scale),
        cwkv=bf(jnp.concatenate([p["cwk"], p["cwv"]], axis=1)),
        cwo=bf(p["cwo"]),
        w1=bf(p["w1"]), b1=p["b1"], w2=bf(p["w2"]), b2=p["b2"],
        g1=p["g1"], be1=p["be1"], g2=p["g2"], be2=p["be2"],
        g3=p["g3"], be3=p["be3"],
    )


# ----------------------------------------------------------------------------
# Pure-JAX reference (f32 everywhere) for a numerical sanity check
# ----------------------------------------------------------------------------
def _ref_ln(x, g, b, eps=1e-5):
    mu = jnp.mean(x, axis=-1, keepdims=True)
    var = jnp.mean((x - mu) ** 2, axis=-1, keepdims=True)
    return (x - mu) / jnp.sqrt(var + eps) * g + b


def _ref_encoder(x, p):
    d = x.shape[-1]
    h = _ref_ln(x, p["g1"], p["be1"])
    q, k, v = h @ p["wq"], h @ p["wk"], h @ p["wv"]
    s = jnp.einsum("bqd,bkd->bqk", q, k) / jnp.sqrt(d)
    x = x + jax.nn.softmax(s, axis=-1) @ v @ p["wo"]
    h = _ref_ln(x, p["g2"], p["be2"])
    return x + jax.nn.relu(h @ p["w1"] + p["b1"]) @ p["w2"] + p["b2"]


def _ref_decoder(z, c, p):
    d = z.shape[-1]
    t = z.shape[1]
    h = _ref_ln(z, p["g1"], p["be1"])
    q, k, v = h @ p["swq"], h @ p["swk"], h @ p["swv"]
    s = jnp.einsum("bqd,bkd->bqk", q, k) / jnp.sqrt(d)
    mask = jnp.tril(jnp.ones((t, t), bool))
    s = jnp.where(mask[None], s, -1e30)
    z = z + jax.nn.softmax(s, axis=-1) @ v @ p["swo"]
    h = _ref_ln(z, p["g2"], p["be2"])
    q, k, v = h @ p["cwq"], c @ p["cwk"], c @ p["cwv"]
    s = jnp.einsum("bqd,bkd->bqk", q, k) / jnp.sqrt(d)
    z = z + jax.nn.softmax(s, axis=-1) @ v @ p["cwo"]
    h = _ref_ln(z, p["g3"], p["be3"])
    return z + jax.nn.relu(h @ p["w1"] + p["b1"]) @ p["w2"] + p["b2"]


# ----------------------------------------------------------------------------
# Deterministic parameter init (unfused f32; packing happens separately)
# ----------------------------------------------------------------------------
def init_params(key, d_model, d_ff):
    keys = iter(jax.random.split(key, 24))

    def w(shape, scale=0.05):
        return (scale * jax.random.normal(next(keys), shape)).astype(jnp.float32)

    def ones(shape):
        return jnp.ones(shape, jnp.float32)

    def zeros(shape):
        return jnp.zeros(shape, jnp.float32)

    enc = dict(
        wq=w((d_model, d_model)), wk=w((d_model, d_model)),
        wv=w((d_model, d_model)), wo=w((d_model, d_model)),
        w1=w((d_model, d_ff)), b1=zeros((1, d_ff)),
        w2=w((d_ff, d_model)), b2=zeros((1, d_model)),
        g1=ones((1, d_model)), be1=zeros((1, d_model)),
        g2=ones((1, d_model)), be2=zeros((1, d_model)),
    )
    dec = dict(
        swq=w((d_model, d_model)), swk=w((d_model, d_model)),
        swv=w((d_model, d_model)), swo=w((d_model, d_model)),
        cwq=w((d_model, d_model)), cwk=w((d_model, d_model)),
        cwv=w((d_model, d_model)), cwo=w((d_model, d_model)),
        w1=w((d_model, d_ff)), b1=zeros((1, d_ff)),
        w2=w((d_ff, d_model)), b2=zeros((1, d_model)),
        g1=ones((1, d_model)), be1=zeros((1, d_model)),
        g2=ones((1, d_model)), be2=zeros((1, d_model)),
        g3=ones((1, d_model)), be3=zeros((1, d_model)),
    )
    return enc, dec


if __name__ == "__main__":
    # lane-dense model dim (multiple of 128); two query tiles per sequence so
    # the cache-at-qi==0 and causal block-skipping paths are exercised.
    B, S, T, D, F = 2, 256, 256, 128, 256
    TQ = 128

    key = jax.random.PRNGKey(0)
    kx, kz, kp = jax.random.split(key, 3)
    x = jax.random.normal(kx, (B, S, D), jnp.float32)   # encoder input
    z = jax.random.normal(kz, (B, T, D), jnp.float32)   # decoder input
    enc_params, dec_params = init_params(kp, D, F)

    enc_packed = pack_encoder_params(enc_params)
    dec_packed = pack_decoder_params(dec_params)

    y = transformer_forward(x, z, enc_packed, dec_packed, tq=TQ)
    y = jax.block_until_ready(y)

    # sanity check against plain-JAX f32 reference (bf16 MXU path -> loose tol)
    c_ref = _ref_encoder(x, enc_params)
    y_ref = _ref_decoder(z, c_ref, dec_params)
    assert y.shape == (B, T, D)
    assert jnp.allclose(y.astype(jnp.float32), y_ref, rtol=5e-2, atol=5e-2), \
        "mismatch vs reference"

    print("KERNEL_OK")
</pallas_src>

<mosaic_0001>
module attributes {stable_mosaic.version = 11 : i64} {
  func.func @encoder_layer_kernel(%arg0: i32, %arg1: i32, %arg2: memref<1x128x128xf32, #tpu.memory_space<vmem>>, %arg3: memref<1x256x128xbf16, #tpu.memory_space<vmem>>, %arg4: memref<128x384xbf16, #tpu.memory_space<vmem>>, %arg5: memref<128x128xbf16, #tpu.memory_space<vmem>>, %arg6: memref<128x256xbf16, #tpu.memory_space<vmem>>, %arg7: memref<1x256xf32, #tpu.memory_space<vmem>>, %arg8: memref<256x128xbf16, #tpu.memory_space<vmem>>, %arg9: memref<1x128xf32, #tpu.memory_space<vmem>>, %arg10: memref<1x128xf32, #tpu.memory_space<vmem>>, %arg11: memref<1x128xf32, #tpu.memory_space<vmem>>, %arg12: memref<1x128xf32, #tpu.memory_space<vmem>>, %arg13: memref<1x128xf32, #tpu.memory_space<vmem>>, %arg14: memref<1x128x128xbf16, #tpu.memory_space<vmem>>, %arg15: memref<256x128xbf16, #tpu.memory_space<vmem>>, %arg16: memref<256x128xbf16, #tpu.memory_space<vmem>>, %arg17: memref<256x128xbf16, #tpu.memory_space<vmem>>) attributes {dimension_semantics = [#tpu.dimension_semantics<parallel>, #tpu.dimension_semantics<arbitrary>], iteration_bounds = array<i64: 2, 2>, scalar_prefetch = 0 : i64, scratch_operands = 3 : i64, tpu.core_type = #tpu.core_type<tc>, window_params = [{transform_indices = @transform_0, window_bounds = array<i64: 1, 128, 128>}, {transform_indices = @transform_1, window_bounds = array<i64: 1, 256, 128>}, {pipeline_mode = #tpu.pipeline_mode<synchronous>, transform_indices = @transform_2, window_bounds = array<i64: 128, 384>}, {pipeline_mode = #tpu.pipeline_mode<synchronous>, transform_indices = @transform_3, window_bounds = array<i64: 128, 128>}, {pipeline_mode = #tpu.pipeline_mode<synchronous>, transform_indices = @transform_4, window_bounds = array<i64: 128, 256>}, {pipeline_mode = #tpu.pipeline_mode<synchronous>, transform_indices = @transform_5, window_bounds = array<i64: 1, 256>}, {pipeline_mode = #tpu.pipeline_mode<synchronous>, transform_indices = @transform_6, window_bounds = array<i64: 256, 128>}, {pipeline_mode = #tpu.pipeline_mode<synchronous>, transform_indices = @transform_7, window_bounds = array<i64: 1, 128>}, {pipeline_mode = #tpu.pipeline_mode<synchronous>, transform_indices = @transform_8, window_bounds = array<i64: 1, 128>}, {pipeline_mode = #tpu.pipeline_mode<synchronous>, transform_indices = @transform_9, window_bounds = array<i64: 1, 128>}, {pipeline_mode = #tpu.pipeline_mode<synchronous>, transform_indices = @transform_10, window_bounds = array<i64: 1, 128>}, {pipeline_mode = #tpu.pipeline_mode<synchronous>, transform_indices = @transform_11, window_bounds = array<i64: 1, 128>}, {transform_indices = @transform_12, window_bounds = array<i64: 1, 128, 128>}]} {
    %c0_i32 = arith.constant 0 : i32
    %0 = arith.cmpi eq, %arg1, %c0_i32 : i32
    %1 = arith.extui %0 : i1 to i32
    %c0_i32_0 = arith.constant 0 : i32
    %2 = arith.cmpi ne, %1, %c0_i32_0 : i32
    scf.if %2 {
      %c0_34 = arith.constant 0 : index
      %c0_35 = arith.constant 0 : index
      %c0_36 = arith.constant 0 : index
      %64 = vector.load %arg3[%c0_34, %c0_35, %c0_36] : memref<1x256x128xbf16, #tpu.memory_space<vmem>>, vector<1x256x128xbf16>
      %65 = vector.shape_cast %64 : vector<1x256x128xbf16> to vector<256x128xbf16>
      %66 = arith.extf %65 : vector<256x128xbf16> to vector<256x128xf32>
      %c0_37 = arith.constant 0 : index
      %c0_38 = arith.constant 0 : index
      %67 = vector.load %arg10[%c0_37, %c0_38] : memref<1x128xf32, #tpu.memory_space<vmem>>, vector<1x128xf32>
      %c0_39 = arith.constant 0 : index
      %c0_40 = arith.constant 0 : index
      %68 = vector.load %arg11[%c0_39, %c0_40] : memref<1x128xf32, #tpu.memory_space<vmem>>, vector<1x128xf32>
      %cst_41 = arith.constant dense<0.000000e+00> : vector<256xf32>
      %69 = vector.multi_reduction <add>, %66, %cst_41 [1] : vector<256x128xf32> to vector<256xf32>
      %70 = vector.shape_cast %69 : vector<256xf32> to vector<256x1xf32>
      %cst_42 = arith.constant 1.280000e+02 : f32
      %71 = vector.broadcast %cst_42 : f32 to vector<256x1xf32>
      %72 = arith.divf %70, %71 : vector<256x1xf32>
      %73 = vector.broadcast %72 : vector<256x1xf32> to vector<256x128xf32>
      %74 = arith.subf %66, %73 : vector<256x128xf32>
      %75 = arith.mulf %74, %74 : vector<256x128xf32>
      %cst_43 = arith.constant dense<0.000000e+00> : vector<256xf32>
      %76 = vector.multi_reduction <add>, %75, %cst_43 [1] : vector<256x128xf32> to vector<256xf32>
      %77 = vector.shape_cast %76 : vector<256xf32> to vector<256x1xf32>
      %cst_44 = arith.constant 1.280000e+02 : f32
      %78 = vector.broadcast %cst_44 : f32 to vector<256x1xf32>
      %79 = arith.divf %77, %78 : vector<256x1xf32>
      %80 = vector.broadcast %72 : vector<256x1xf32> to vector<256x128xf32>
      %81 = arith.subf %66, %80 : vector<256x128xf32>
      %cst_45 = arith.constant 9.99999974E-6 : f32
      %82 = vector.broadcast %cst_45 : f32 to vector<256x1xf32>
      %83 = arith.addf %79, %82 : vector<256x1xf32>
      %84 = math.rsqrt %83 : vector<256x1xf32>
      %85 = vector.broadcast %84 : vector<256x1xf32> to vector<256x128xf32>
      %86 = arith.mulf %81, %85 : vector<256x128xf32>
      %87 = vector.broadcast %67 : vector<1x128xf32> to vector<256x128xf32>
      %88 = arith.mulf %86, %87 : vector<256x128xf32>
      %89 = vector.broadcast %68 : vector<1x128xf32> to vector<256x128xf32>
      %90 = arith.addf %88, %89 : vector<256x128xf32>
      %c0_46 = arith.constant 0 : index
      %c0_47 = arith.constant 0 : index
      %91 = vector.load %arg4[%c0_46, %c0_47] : memref<128x384xbf16, #tpu.memory_space<vmem>>, vector<128x384xbf16>
      %92 = arith.truncf %90 : vector<256x128xf32> to vector<256x128xbf16>
      %cst_48 = arith.constant dense<0.000000e+00> : vector<256x384xf32>
      %93 = tpu.matmul %92, %91, %cst_48 {dimension_numbers = #tpu.dot_dimension_numbers<[1], [0], [0], [1], [0, 0, 1, 1], [], []>} : vector<256x128xbf16>, vector<128x384xbf16>, vector<256x384xf32> -> vector<256x384xf32>
      %94 = vector.extract_strided_slice %93 {offsets = [0, 0], sizes = [256, 128], strides = [1, 1]} : vector<256x384xf32> to vector<256x128xf32>
      %95 = arith.truncf %94 : vector<256x128xf32> to vector<256x128xbf16>
      %c0_49 = arith.constant 0 : index
      %c0_50 = arith.constant 0 : index
      %96 = vector.load %arg15[%c0_49, %c0_50] : memref<256x128xbf16, #tpu.memory_space<vmem>>, vector<256x128xbf16>
      tpu.vector_store %arg15[%c0_49, %c0_50], %95 {strides = array<i32>} : memref<256x128xbf16, #tpu.memory_space<vmem>>, vector<256x128xbf16>,
      %97 = vector.extract_strided_slice %93 {offsets = [0, 128], sizes = [256, 128], strides = [1, 1]} : vector<256x384xf32> to vector<256x128xf32>
      %98 = arith.truncf %97 : vector<256x128xf32> to vector<256x128xbf16>
      %c0_51 = arith.constant 0 : index
      %c0_52 = arith.constant 0 : index
      %99 = vector.load %arg16[%c0_51, %c0_52] : memref<256x128xbf16, #tpu.memory_space<vmem>>, vector<256x128xbf16>
      tpu.vector_store %arg16[%c0_51, %c0_52], %98 {strides = array<i32>} : memref<256x128xbf16, #tpu.memory_space<vmem>>, vector<256x128xbf16>,
      %100 = vector.extract_strided_slice %93 {offsets = [0, 256], sizes = [256, 128], strides = [1, 1]} : vector<256x384xf32> to vector<256x128xf32>
      %101 = arith.truncf %100 : vector<256x128xf32> to vector<256x128xbf16>
      %c0_53 = arith.constant 0 : index
      %c0_54 = arith.constant 0 : index
      %102 = vector.load %arg17[%c0_53, %c0_54] : memref<256x128xbf16, #tpu.memory_space<vmem>>, vector<256x128xbf16>
      tpu.vector_store %arg17[%c0_53, %c0_54], %101 {strides = array<i32>} : memref<256x128xbf16, #tpu.memory_space<vmem>>, vector<256x128xbf16>,
    } else {
    }
    %c0 = arith.constant 0 : index
    %c0_1 = arith.constant 0 : index
    %c0_2 = arith.constant 0 : index
    %3 = vector.load %arg2[%c0, %c0_1, %c0_2] : memref<1x128x128xf32, #tpu.memory_space<vmem>>, vector<1x128x128xf32>
    %4 = vector.shape_cast %3 : vector<1x128x128xf32> to vector<128x128xf32>
    %c128_i32 = arith.constant 128 : i32
    %5 = arith.muli %arg1, %c128_i32 : i32
    %6 = tpu.assume_multiple %5, 128 : i32
    %7 = arith.index_cast %6 : i32 to index
    %c0_3 = arith.constant 0 : index
    %8 = vector.load %arg15[%7, %c0_3] : memref<256x128xbf16, #tpu.memory_space<vmem>>, vector<128x128xbf16>
    %cst = arith.constant -1.000000e+30 : f32
    %9 = vector.broadcast %cst : f32 to vector<128x1xf32>
    %cst_4 = arith.constant 0.000000e+00 : f32
    %10 = vector.broadcast %cst_4 : f32 to vector<128x1xf32>
    %cst_5 = arith.constant 0.000000e+00 : f32
    %11 = vector.broadcast %cst_5 : f32 to vector<128x128xf32>
    %c0_i32_6 = arith.constant 0 : i32
    %c2_i32 = arith.constant 2 : i32
    %12 = arith.addi %c0_i32_6, %c2_i32 : i32
    %c1_i32 = arith.constant 1 : i32
    %13:3 = scf.for %arg18 = %c0_i32_6 to %12 step %c1_i32 iter_args(%arg19 = %9, %arg20 = %10, %arg21 = %11) -> (vector<128x1xf32>, vector<128x1xf32>, vector<128x128xf32>)  : i32 {
      %c128_i32_34 = arith.constant 128 : i32
      %64 = arith.muli %arg18, %c128_i32_34 : i32
      %65 = tpu.assume_multiple %64, 128 : i32
      %66 = arith.index_cast %65 : i32 to index
      %c0_35 = arith.constant 0 : index
      %67 = vector.load %arg16[%66, %c0_35] : memref<256x128xbf16, #tpu.memory_space<vmem>>, vector<128x128xbf16>
      %68 = arith.index_cast %65 : i32 to index
      %c0_36 = arith.constant 0 : index
      %69 = vector.load %arg17[%68, %c0_36] : memref<256x128xbf16, #tpu.memory_space<vmem>>, vector<128x128xbf16>
      %cst_37 = arith.constant dense<0.000000e+00> : vector<128x128xf32>
      %70 = tpu.matmul %8, %67, %cst_37 {dimension_numbers = #tpu.dot_dimension_numbers<[1], [1], [0], [0], [0, 0, 1, 0], [], []>} : vector<128x128xbf16>, vector<128x128xbf16>, vector<128x128xf32> -> vector<128x128xf32>
      %cst_38 = arith.constant dense<0xFF800000> : vector<128xf32>
      %71 = vector.multi_reduction <maximumf>, %70, %cst_38 [1] : vector<128x128xf32> to vector<128xf32>
      %72 = vector.shape_cast %71 : vector<128xf32> to vector<128x1xf32>
      %73 = arith.maximumf %arg19, %72 : vector<128x1xf32>
      %74 = arith.subf %arg19, %73 : vector<128x1xf32>
      %75 = math.exp %74 : vector<128x1xf32>
      %76 = vector.broadcast %73 : vector<128x1xf32> to vector<128x128xf32>
      %77 = arith.subf %70, %76 : vector<128x128xf32>
      %78 = math.exp %77 : vector<128x128xf32>
      %79 = arith.mulf %75, %arg20 : vector<128x1xf32>
      %cst_39 = arith.constant dense<0.000000e+00> : vector<128xf32>
      %80 = vector.multi_reduction <add>, %78, %cst_39 [1] : vector<128x128xf32> to vector<128xf32>
      %81 = vector.shape_cast %80 : vector<128xf32> to vector<128x1xf32>
      %82 = arith.addf %79, %81 : vector<128x1xf32>
      %83 = vector.broadcast %75 : vector<128x1xf32> to vector<128x128xf32>
      %84 = arith.mulf %83, %arg21 : vector<128x128xf32>
      %85 = arith.truncf %78 : vector<128x128xf32> to vector<128x128xbf16>
      %cst_40 = arith.constant dense<0.000000e+00> : vector<128x128xf32>
      %86 = tpu.matmul %85, %69, %cst_40 {dimension_numbers = #tpu.dot_dimension_numbers<[1], [0], [0], [1], [0, 0, 1, 1], [], []>} : vector<128x128xbf16>, vector<128x128xbf16>, vector<128x128xf32> -> vector<128x128xf32>
      %87 = arith.addf %84, %86 : vector<128x128xf32>
      scf.yield %73, %82, %87 : vector<128x1xf32>, vector<128x1xf32>, vector<128x128xf32>
    }
    %c2_i32_7 = arith.constant 2 : i32
    %14 = tpu.reciprocal %13#1 {approx = true} : vector<128x1xf32> -> vector<128x1xf32>
    %15 = vector.broadcast %14 : vector<128x1xf32> to vector<128x128xf32>
    %16 = arith.mulf %13#2, %15 : vector<128x128xf32>
    %c0_8 = arith.constant 0 : index
    %c0_9 = arith.constant 0 : index
    %17 = vector.load %arg5[%c0_8, %c0_9] : memref<128x128xbf16, #tpu.memory_space<vmem>>, vector<128x128xbf16>
    %18 = arith.truncf %16 : vector<128x128xf32> to vector<128x128xbf16>
    %cst_10 = arith.constant dense<0.000000e+00> : vector<128x128xf32>
    %19 = tpu.matmul %18, %17, %cst_10 {dimension_numbers = #tpu.dot_dimension_numbers<[1], [0], [0], [1], [0, 0, 1, 1], [], []>} : vector<128x128xbf16>, vector<128x128xbf16>, vector<128x128xf32> -> vector<128x128xf32>
    %20 = arith.addf %4, %19 : vector<128x128xf32>
    %c0_11 = arith.constant 0 : index
    %c0_12 = arith.constant 0 : index
    %21 = vector.load %arg12[%c0_11, %c0_12] : memref<1x128xf32, #tpu.memory_space<vmem>>, vector<1x128xf32>
    %c0_13 = arith.constant 0 : index
    %c0_14 = arith.constant 0 : index
    %22 = vector.load %arg13[%c0_13, %c0_14] : memref<1x128xf32, #tpu.memory_space<vmem>>, vector<1x128xf32>
    %cst_15 = arith.constant dense<0.000000e+00> : vector<128xf32>
    %23 = vector.multi_reduction <add>, %20, %cst_15 [1] : vector<128x128xf32> to vector<128xf32>
    %24 = vector.shape_cast %23 : vector<128xf32> to vector<128x1xf32>
    %cst_16 = arith.constant 1.280000e+02 : f32
    %25 = vector.broadcast %cst_16 : f32 to vector<128x1xf32>
    %26 = arith.divf %24, %25 : vector<128x1xf32>
    %27 = vector.broadcast %26 : vector<128x1xf32> to vector<128x128xf32>
    %28 = arith.subf %20, %27 : vector<128x128xf32>
    %29 = arith.mulf %28, %28 : vector<128x128xf32>
    %cst_17 = arith.constant dense<0.000000e+00> : vector<128xf32>
    %30 = vector.multi_reduction <add>, %29, %cst_17 [1] : vector<128x128xf32> to vector<128xf32>
    %31 = vector.shape_cast %30 : vector<128xf32> to vector<128x1xf32>
    %cst_18 = arith.constant 1.280000e+02 : f32
    %32 = vector.broadcast %cst_18 : f32 to vector<128x1xf32>
    %33 = arith.divf %31, %32 : vector<128x1xf32>
    %34 = vector.broadcast %26 : vector<128x1xf32> to vector<128x128xf32>
    %35 = arith.subf %20, %34 : vector<128x128xf32>
    %cst_19 = arith.constant 9.99999974E-6 : f32
    %36 = vector.broadcast %cst_19 : f32 to vector<128x1xf32>
    %37 = arith.addf %33, %36 : vector<128x1xf32>
    %38 = math.rsqrt %37 : vector<128x1xf32>
    %39 = vector.broadcast %38 : vector<128x1xf32> to vector<128x128xf32>
    %40 = arith.mulf %35, %39 : vector<128x128xf32>
    %41 = vector.broadcast %21 : vector<1x128xf32> to vector<128x128xf32>
    %42 = arith.mulf %40, %41 : vector<128x128xf32>
    %43 = vector.broadcast %22 : vector<1x128xf32> to vector<128x128xf32>
    %44 = arith.addf %42, %43 : vector<128x128xf32>
    %c0_20 = arith.constant 0 : index
    %c0_21 = arith.constant 0 : index
    %45 = vector.load %arg6[%c0_20, %c0_21] : memref<128x256xbf16, #tpu.memory_space<vmem>>, vector<128x256xbf16>
    %46 = arith.truncf %44 : vector<128x128xf32> to vector<128x128xbf16>
    %cst_22 = arith.constant dense<0.000000e+00> : vector<128x256xf32>
    %47 = tpu.matmul %46, %45, %cst_22 {dimension_numbers = #tpu.dot_dimension_numbers<[1], [0], [0], [1], [0, 0, 1, 1], [], []>} : vector<128x128xbf16>, vector<128x256xbf16>, vector<128x256xf32> -> vector<128x256xf32>
    %c0_23 = arith.constant 0 : index
    %c0_24 = arith.constant 0 : index
    %48 = vector.load %arg7[%c0_23, %c0_24] : memref<1x256xf32, #tpu.memory_space<vmem>>, vector<1x256xf32>
    %49 = vector.broadcast %48 : vector<1x256xf32> to vector<128x256xf32>
    %50 = arith.addf %47, %49 : vector<128x256xf32>
    %cst_25 = arith.constant 0.000000e+00 : f32
    %51 = vector.broadcast %cst_25 : f32 to vector<128x256xf32>
    %52 = arith.maximumf %50, %51 : vector<128x256xf32>
    %c0_26 = arith.constant 0 : index
    %c0_27 = arith.constant 0 : index
    %53 = vector.load %arg8[%c0_26, %c0_27] : memref<256x128xbf16, #tpu.memory_space<vmem>>, vector<256x128xbf16>
    %54 = arith.truncf %52 : vector<128x256xf32> to vector<128x256xbf16>
    %cst_28 = arith.constant dense<0.000000e+00> : vector<128x128xf32>
    %55 = tpu.matmul %54, %53, %cst_28 {dimension_numbers = #tpu.dot_dimension_numbers<[1], [0], [0], [1], [0, 0, 1, 1], [], []>} : vector<128x256xbf16>, vector<256x128xbf16>, vector<128x128xf32> -> vector<128x128xf32>
    %56 = arith.addf %20, %55 : vector<128x128xf32>
    %c0_29 = arith.constant 0 : index
    %c0_30 = arith.constant 0 : index
    %57 = vector.load %arg9[%c0_29, %c0_30] : memref<1x128xf32, #tpu.memory_space<vmem>>, vector<1x128xf32>
    %58 = vector.broadcast %57 : vector<1x128xf32> to vector<128x128xf32>
    %59 = arith.addf %56, %58 : vector<128x128xf32>
    %60 = arith.truncf %59 : vector<128x128xf32> to vector<128x128xbf16>
    %c0_31 = arith.constant 0 : index
    %c0_32 = arith.constant 0 : index
    %c0_33 = arith.constant 0 : index
    %61 = vector.load %arg14[%c0_31, %c0_32, %c0_33] : memref<1x128x128xbf16, #tpu.memory_space<vmem>>, vector<1x128x128xbf16>
    %62 = vector.shape_cast %61 : vector<1x128x128xbf16> to vector<128x128xbf16>
    %63 = vector.shape_cast %60 : vector<128x128xbf16> to vector<1x128x128xbf16>
    tpu.vector_store %arg14[%c0_31, %c0_32, %c0_33], %63 {strides = array<i32>} : memref<1x128x128xbf16, #tpu.memory_space<vmem>>, vector<1x128x128xbf16>,
    return
  }
  func.func @transform_0(%arg0: i32, %arg1: i32) -> (i32, i32, i32) {
    %c0_i32 = arith.constant 0 : i32
    %c0_i32_0 = arith.constant 0 : i32
    return %arg0, %arg1, %c0_i32 : i32, i32, i32
  }
  func.func @transform_1(%arg0: i32, %arg1: i32) -> (i32, i32, i32) {
    %c0_i32 = arith.constant 0 : i32
    %c0_i32_0 = arith.constant 0 : i32
    %c0_i32_1 = arith.constant 0 : i32
    return %arg0, %c0_i32, %c0_i32_0 : i32, i32, i32
  }
  func.func @transform_2(%arg0: i32, %arg1: i32) -> (i32, i32) {
    %c0_i32 = arith.constant 0 : i32
    %c0_i32_0 = arith.constant 0 : i32
    %c0_i32_1 = arith.constant 0 : i32
    return %c0_i32, %c0_i32_0 : i32, i32
  }
  func.func @transform_3(%arg0: i32, %arg1: i32) -> (i32, i32) {
    %c0_i32 = arith.constant 0 : i32
    %c0_i32_0 = arith.constant 0 : i32
    %c0_i32_1 = arith.constant 0 : i32
    return %c0_i32, %c0_i32_0 : i32, i32
  }
  func.func @transform_4(%arg0: i32, %arg1: i32) -> (i32, i32) {
    %c0_i32 = arith.constant 0 : i32
    %c0_i32_0 = arith.constant 0 : i32
    %c0_i32_1 = arith.constant 0 : i32
    return %c0_i32, %c0_i32_0 : i32, i32
  }
  func.func @transform_5(%arg0: i32, %arg1: i32) -> (i32, i32) {
    %c0_i32 = arith.constant 0 : i32
    %c0_i32_0 = arith.constant 0 : i32
    %c0_i32_1 = arith.constant 0 : i32
    return %c0_i32, %c0_i32_0 : i32, i32
  }
  func.func @transform_6(%arg0: i32, %arg1: i32) -> (i32, i32) {
    %c0_i32 = arith.constant 0 : i32
    %c0_i32_0 = arith.constant 0 : i32
    %c0_i32_1 = arith.constant 0 : i32
    return %c0_i32, %c0_i32_0 : i32, i32
  }
  func.func @transform_7(%arg0: i32, %arg1: i32) -> (i32, i32) {
    %c0_i32 = arith.constant 0 : i32
    %c0_i32_0 = arith.constant 0 : i32
    %c0_i32_1 = arith.constant 0 : i32
    return %c0_i32, %c0_i32_0 : i32, i32
  }
  func.func @transform_8(%arg0: i32, %arg1: i32) -> (i32, i32) {
    %c0_i32 = arith.constant 0 : i32
    %c0_i32_0 = arith.constant 0 : i32
    %c0_i32_1 = arith.constant 0 : i32
    return %c0_i32, %c0_i32_0 : i32, i32
  }
  func.func @transform_9(%arg0: i32, %arg1: i32) -> (i32, i32) {
    %c0_i32 = arith.constant 0 : i32
    %c0_i32_0 = arith.constant 0 : i32
    %c0_i32_1 = arith.constant 0 : i32
    return %c0_i32, %c0_i32_0 : i32, i32
  }
  func.func @transform_10(%arg0: i32, %arg1: i32) -> (i32, i32) {
    %c0_i32 = arith.constant 0 : i32
    %c0_i32_0 = arith.constant 0 : i32
    %c0_i32_1 = arith.constant 0 : i32
    return %c0_i32, %c0_i32_0 : i32, i32
  }
  func.func @transform_11(%arg0: i32, %arg1: i32) -> (i32, i32) {
    %c0_i32 = arith.constant 0 : i32
    %c0_i32_0 = arith.constant 0 : i32
    %c0_i32_1 = arith.constant 0 : i32
    return %c0_i32, %c0_i32_0 : i32, i32
  }
  func.func @transform_12(%arg0: i32, %arg1: i32) -> (i32, i32, i32) {
    %c0_i32 = arith.constant 0 : i32
    %c0_i32_0 = arith.constant 0 : i32
    return %arg0, %arg1, %c0_i32 : i32, i32, i32
  }
}

</mosaic_0001>

<llo_original>
// kernel: encoder_forward.1
$region0: #{encoder_forward.1}
  #allocation0 [shape = 'u32[]', space=smem, size = 0x4, offset = 0x4, fixed_abs, tag = 'smem constant byte address 0x4 - core index']
  #allocation1 [shape = 'u32[144,128]{1,0:T(1,128)}', space=vmem, size = 0x12000, scoped, tag = 'internal scratch']
  #allocation2 [shape = 'bf16[256,128]{1,0:T(8,128)(2,1)}', space=vmem, size = 0x10000, scoped, tag = 'scratch operand']
  #allocation3 [shape = 'bf16[256,128]{1,0:T(8,128)(2,1)}', space=vmem, size = 0x10000, scoped, tag = 'scratch operand']
  #allocation4 [shape = 'bf16[256,128]{1,0:T(8,128)(2,1)}', space=vmem, size = 0x10000, scoped, tag = 'scratch operand']
  %s0 = inlined_call_operand.vmem [shape: f32[2,256,128], index: 0, kind: input, shape index: {}]
  %s1 = inlined_call_operand.vmem [shape: bf16[2,256,128], index: 1, kind: input, shape index: {}]
  %s2 = inlined_call_operand.vmem [shape: bf16[128,384], index: 2, kind: input, shape index: {}]
  %s3 = inlined_call_operand.vmem [shape: bf16[128,128], index: 3, kind: input, shape index: {}]
  %s4 = inlined_call_operand.hbm [shape: bf16[128,256], index: 4, kind: input, shape index: {}]
  %s5 = inlined_call_operand.vmem [shape: f32[1,256], index: 5, kind: input, shape index: {}]
  %s6 = inlined_call_operand.hbm [shape: bf16[256,128], index: 6, kind: input, shape index: {}]
  %s7 = inlined_call_operand.vmem [shape: f32[1,128], index: 7, kind: input, shape index: {}]
  %s8 = inlined_call_operand.vmem [shape: f32[1,128], index: 8, kind: input, shape index: {}]
  %s9 = inlined_call_operand.vmem [shape: f32[1,128], index: 9, kind: input, shape index: {}]
  %s10 = inlined_call_operand.vmem [shape: f32[1,128], index: 10, kind: input, shape index: {}]
  %s11 = inlined_call_operand.vmem [shape: f32[1,128], index: 11, kind: input, shape index: {}]
  %s12 = inlined_call_operand.hbm [shape: bf16[2,256,128], index: 12, kind: output, shape index: {}]
  %s13 = sld [smem:[#allocation0]]
  $region100: #{encoder_forward.1} parent=0
    _
  %s15 = ssub.s32 1, %s13
  %s16 = scalar_select 0, %s15, %s13
  $region1: #{encoder_forward.1} parent=0
    #allocation5 [shape = 'u8[65536]{0}', space=vmem, size = 0x10000, scoped, tag = 'input window, operand 4, single buffered']
    #allocation6 [shape = 's32[2]{0}', space=sflag, size = 0x8, scoped, tag = 'scoped memory for encoder_forward.1']
    #allocation7 [shape = 's32[2]{0}', space=sflag, size = 0x8, scoped, tag = 'scoped memory for encoder_forward.1']
    #allocation8 [shape = 'u8[65536]{0}', space=vmem, size = 0x10000, scoped, tag = 'input window, operand 6, single buffered']
    #allocation9 [shape = 's32[1]{0}', space=sflag, size = 0x4, scoped, tag = 'scoped memory for encoder_forward.1']
    #allocation10 [shape = 'u8[65536]{0}', space=vmem, size = 0x10000, scoped, tag = 'output window, operand 0']
    %17 = vsyncpa [#allocation6], 0
    %18 = vsyncpa [#allocation9], 0
    %19 = vsyncpa [#allocation7], 0
    %s20 = scalar_lea.sflag [#allocation7], 1
    %21 = vsyncpa %s20, 0
    loop: start=0, step=1, limit=6
    $region2: #{encoder_forward.1} parent=1 // loop_pre_header
      _
    $region3: #{encoder_forward.1} parent=1 // loop_header
      %s23 = sphi 0, %s27
      %p24 = scmp.ge.s32.totalorder %s23, 6
      %s30 = sphi 0, %s42
      %s31 = sphi 0, %s38
      %s32 = sphi 0, %s30
      %s33 = sphi 0, %s31
      %s34 = sphi 0, %s32
      %s35 = sphi 0, %s33
      %s47 = sphi 0, %s49
      %s50 = sphi 0, %s47
      %s51 = sphi 0, %s50
      %s67 = sphi 0, %s51
      %s73 = sphi 0, %s75
      %s76 = sphi 0, %s73
      %s77 = sphi 0, %s76
      %s93 = sphi 0, %s77
      %s97 = sphi 0, %s97
      %s99 = sphi 0, %s97
      %s100 = sphi 0, %s99
      %s114 = sphi 0, %s100
      %s118 = sphi 0, %s118
      %s120 = sphi 0, %s118
      %s121 = sphi 0, %s120
      %s135 = sphi 0, %s121
      %s139 = sphi 0, %s139
      %s141 = sphi 0, %s139
      %s142 = sphi 0, %s141
      %s156 = sphi 0, %s142
      %s160 = sphi 0, %s160
      %s162 = sphi 0, %s160
      %s163 = sphi 0, %s162
      %s177 = sphi 0, %s163
      %s181 = sphi 0, %s181
      %s183 = sphi 0, %s181
      %s184 = sphi 0, %s183
      %s198 = sphi 0, %s184
      %s202 = sphi 0, %s202
      %s204 = sphi 0, %s202
      %s205 = sphi 0, %s204
      %s219 = sphi 0, %s205
      %s223 = sphi 0, %s223
      %s225 = sphi 0, %s223
      %s226 = sphi 0, %s225
      %s240 = sphi 0, %s226
      %s244 = sphi 0, %s244
      %s246 = sphi 0, %s244
      %s247 = sphi 0, %s246
      %s261 = sphi 0, %s247
      %s265 = sphi 0, %s265
      %s267 = sphi 0, %s265
      %s268 = sphi 0, %s267
      %s282 = sphi 0, %s268
      %s286 = sphi 0, %s286
      %s288 = sphi 0, %s286
      %s289 = sphi 0, %s288
      %s303 = sphi 0, %s289
      %s311 = sphi 0, %s313
      %s314 = sphi 0, %s311
      %s315 = sphi 0, %s314
      %s331 = sphi 0, %s315
    $region4: #{encoder_forward.1} parent=1 // loop_header_branch
      %26 = sbr.rel (%p24) target = $region8
    $region5: #{encoder_forward.1} parent=1 // loop_body
      %s28 = ssub.s32 %s23, 1
      %s29 = ssub.s32 %s23, 2
      %s36 = sadd.s32 1, %s31
      %p37 = scmp.ge.s32.totalorder %s36, 2
      %s38 = scalar_select %p37, 0, %s36
      %s39 = sadd.s32 1, %s30
      %s40 = scalar_select %p37, %s39, %s30
      %p41 = scmp.ge.s32.totalorder %s40, 2
      %s42 = scalar_select %p41, 0, %s40
      %s43 = ssub.s32 %s30, %s42
      %s44 = ssub.s32 %s31, %s38
      %s45 = sor.u32 %s43, %s44
      %p46 = scmp.eq.s32.totalorder %s45, 0
      %s48 = sadd.s32 %s47, 1
      %s49 = scalar_select %p46, %s47, %s48
      %p52 = pneg %p46
      %p53 = scmp.eq.s32.totalorder %s23, 3
      %p54 = por %p52, %p53
      %p55 = scmp.ne.s32.totalorder %s47, %s50
      %p56 = scmp.eq.s32.totalorder %s23, 0
      %p57 = por %p55, %p56
      %p58 = scmp.ne.s32.totalorder %s47, %s50
      %p59 = scmp.eq.s32.totalorder %s28, 3
      %p60 = por %p58, %p59
      %p61 = scmp.ne.s32.totalorder %s50, %s51
      %p62 = scmp.eq.s32.totalorder %s28, 0
      %p63 = por %p61, %p62
      %p64 = scmp.ne.s32.totalorder %s50, %s51
      %p65 = scmp.eq.s32.totalorder %s29, 3
      %p66 = por %p64, %p65
      %p68 = scmp.ne.s32.totalorder %s51, %s67
      %p69 = scmp.eq.s32.totalorder %s29, 0
      %p70 = por %p68, %p69
      %s71 = ssub.s32 %s30, %s42
      %p72 = scmp.eq.s32.totalorder %s71, 0
      %s74 = sadd.s32 %s73, 1
      %s75 = scalar_select %p72, %s73, %s74
      %p78 = pneg %p72
      %p79 = scmp.eq.s32.totalorder %s23, 3
      %p80 = por %p78, %p79
      %p81 = scmp.ne.s32.totalorder %s73, %s76
      %p82 = scmp.eq.s32.totalorder %s23, 0
      %p83 = por %p81, %p82
      %p84 = scmp.ne.s32.totalorder %s73, %s76
      %p85 = scmp.eq.s32.totalorder %s28, 3
      %p86 = por %p84, %p85
      %p87 = scmp.ne.s32.totalorder %s76, %s77
      %p88 = scmp.eq.s32.totalorder %s28, 0
      %p89 = por %p87, %p88
      %p90 = scmp.ne.s32.totalorder %s76, %s77
      %p91 = scmp.eq.s32.totalorder %s29, 3
      %p92 = por %p90, %p91
      %p94 = scmp.ne.s32.totalorder %s77, %s93
      %p95 = scmp.eq.s32.totalorder %s29, 0
      %p96 = por %p94, %p95
      %s98 = sadd.s32 %s97, 1
      %p101 = scmp.eq.s32.totalorder %s23, 3
      %p102 = scmp.ne.s32.totalorder %s97, %s99
      %p103 = scmp.eq.s32.totalorder %s23, 0
      %p104 = por %p102, %p103
      %p105 = scmp.ne.s32.totalorder %s97, %s99
      %p106 = scmp.eq.s32.totalorder %s28, 3
      %p107 = por %p105, %p106
      %p108 = scmp.ne.s32.totalorder %s99, %s100
      %p109 = scmp.eq.s32.totalorder %s28, 0
      %p110 = por %p108, %p109
      %p111 = scmp.ne.s32.totalorder %s99, %s100
      %p112 = scmp.eq.s32.totalorder %s29, 3
      %p113 = por %p111, %p112
      %p115 = scmp.ne.s32.totalorder %s100, %s114
      %p116 = scmp.eq.s32.totalorder %s29, 0
      %p117 = por %p115, %p116
      %s119 = sadd.s32 %s118, 1
      %p122 = scmp.eq.s32.totalorder %s23, 3
      %p123 = scmp.ne.s32.totalorder %s118, %s120
      %p124 = scmp.eq.s32.totalorder %s23, 0
      %p125 = por %p123, %p124
      %p126 = scmp.ne.s32.totalorder %s118, %s120
      %p127 = scmp.eq.s32.totalorder %s28, 3
      %p128 = por %p126, %p127
      %p129 = scmp.ne.s32.totalorder %s120, %s121
      %p130 = scmp.eq.s32.totalorder %s28, 0
      %p131 = por %p129, %p130
      %p132 = scmp.ne.s32.totalorder %s120, %s121
      %p133 = scmp.eq.s32.totalorder %s29, 3
      %p134 = por %p132, %p133
      %p136 = scmp.ne.s32.totalorder %s121, %s135
      %p137 = scmp.eq.s32.totalorder %s29, 0
      %p138 = por %p136, %p137
      %s140 = sadd.s32 %s139, 1
      %p143 = scmp.eq.s32.totalorder %s23, 3
      %p144 = scmp.ne.s32.totalorder %s139, %s141
      %p145 = scmp.eq.s32.totalorder %s23, 0
      %p146 = por %p144, %p145
      %p147 = scmp.ne.s32.totalorder %s139, %s141
      %p148 = scmp.eq.s32.totalorder %s28, 3
      %p149 = por %p147, %p148
      %p150 = scmp.ne.s32.totalorder %s141, %s142
      %p151 = scmp.eq.s32.totalorder %s28, 0
      %p152 = por %p150, %p151
      %p153 = scmp.ne.s32.totalorder %s141, %s142
      %p154 = scmp.eq.s32.totalorder %s29, 3
      %p155 = por %p153, %p154
      %p157 = scmp.ne.s32.totalorder %s142, %s156
      %p158 = scmp.eq.s32.totalorder %s29, 0
      %p159 = por %p157, %p158
      %s161 = sadd.s32 %s160, 1
      %p164 = scmp.eq.s32.totalorder %s23, 3
      %p165 = scmp.ne.s32.totalorder %s160, %s162
      %p166 = scmp.eq.s32.totalorder %s23, 0
      %p167 = por %p165, %p166
      %p168 = scmp.ne.s32.totalorder %s160, %s162
      %p169 = scmp.eq.s32.totalorder %s28, 3
      %p170 = por %p168, %p169
      %p171 = scmp.ne.s32.totalorder %s162, %s163
      %p172 = scmp.eq.s32.totalorder %s28, 0
      %p173 = por %p171, %p172
      %p174 = scmp.ne.s32.totalorder %s162, %s163
      %p175 = scmp.eq.s32.totalorder %s29, 3
      %p176 = por %p174, %p175
      %p178 = scmp.ne.s32.totalorder %s163, %s177
      %p179 = scmp.eq.s32.totalorder %s29, 0
      %p180 = por %p178, %p179
      %s182 = sadd.s32 %s181, 1
      %p185 = scmp.eq.s32.totalorder %s23, 3
      %p186 = scmp.ne.s32.totalorder %s181, %s183
      %p187 = scmp.eq.s32.totalorder %s23, 0
      %p188 = por %p186, %p187
      %p189 = scmp.ne.s32.totalorder %s181, %s183
      %p190 = scmp.eq.s32.totalorder %s28, 3
      %p191 = por %p189, %p190
      %p192 = scmp.ne.s32.totalorder %s183, %s184
      %p193 = scmp.eq.s32.totalorder %s28, 0
      %p194 = por %p192, %p193
      %p195 = scmp.ne.s32.totalorder %s183, %s184
      %p196 = scmp.eq.s32.totalorder %s29, 3
      %p197 = por %p195, %p196
      %p199 = scmp.ne.s32.totalorder %s184, %s198
      %p200 = scmp.eq.s32.totalorder %s29, 0
      %p201 = por %p199, %p200
      %s203 = sadd.s32 %s202, 1
      %p206 = scmp.eq.s32.totalorder %s23, 3
      %p207 = scmp.ne.s32.totalorder %s202, %s204
      %p208 = scmp.eq.s32.totalorder %s23, 0
      %p209 = por %p207, %p208
      %p210 = scmp.ne.s32.totalorder %s202, %s204
      %p211 = scmp.eq.s32.totalorder %s28, 3
      %p212 = por %p210, %p211
      %p213 = scmp.ne.s32.totalorder %s204, %s205
      %p214 = scmp.eq.s32.totalorder %s28, 0
      %p215 = por %p213, %p214
      %p216 = scmp.ne.s32.totalorder %s204, %s205
      %p217 = scmp.eq.s32.totalorder %s29, 3
      %p218 = por %p216, %p217
      %p220 = scmp.ne.s32.totalorder %s205, %s219
      %p221 = scmp.eq.s32.totalorder %s29, 0
      %p222 = por %p220, %p221
      %s224 = sadd.s32 %s223, 1
      %p227 = scmp.eq.s32.totalorder %s23, 3
      %p228 = scmp.ne.s32.totalorder %s223, %s225
      %p229 = scmp.eq.s32.totalorder %s23, 0
      %p230 = por %p228, %p229
      %p231 = scmp.ne.s32.totalorder %s223, %s225
      %p232 = scmp.eq.s32.totalorder %s28, 3
      %p233 = por %p231, %p232
      %p234 = scmp.ne.s32.totalorder %s225, %s226
      %p235 = scmp.eq.s32.totalorder %s28, 0
      %p236 = por %p234, %p235
      %p237 = scmp.ne.s32.totalorder %s225, %s226
      %p238 = scmp.eq.s32.totalorder %s29, 3
      %p239 = por %p237, %p238
      %p241 = scmp.ne.s32.totalorder %s226, %s240
      %p242 = scmp.eq.s32.totalorder %s29, 0
      %p243 = por %p241, %p242
      %s245 = sadd.s32 %s244, 1
      %p248 = scmp.eq.s32.totalorder %s23, 3
      %p249 = scmp.ne.s32.totalorder %s244, %s246
      %p250 = scmp.eq.s32.totalorder %s23, 0
      %p251 = por %p249, %p250
      %p252 = scmp.ne.s32.totalorder %s244, %s246
      %p253 = scmp.eq.s32.totalorder %s28, 3
      %p254 = por %p252, %p253
      %p255 = scmp.ne.s32.totalorder %s246, %s247
      %p256 = scmp.eq.s32.totalorder %s28, 0
      %p257 = por %p255, %p256
      %p258 = scmp.ne.s32.totalorder %s246, %s247
      %p259 = scmp.eq.s32.totalorder %s29, 3
      %p260 = por %p258, %p259
      %p262 = scmp.ne.s32.totalorder %s247, %s261
      %p263 = scmp.eq.s32.totalorder %s29, 0
      %p264 = por %p262, %p263
      %s266 = sadd.s32 %s265, 1
      %p269 = scmp.eq.s32.totalorder %s23, 3
      %p270 = scmp.ne.s32.totalorder %s265, %s267
      %p271 = scmp.eq.s32.totalorder %s23, 0
      %p272 = por %p270, %p271
      %p273 = scmp.ne.s32.totalorder %s265, %s267
      %p274 = scmp.eq.s32.totalorder %s28, 3
      %p275 = por %p273, %p274
      %p276 = scmp.ne.s32.totalorder %s267, %s268
      %p277 = scmp.eq.s32.totalorder %s28, 0
      %p278 = por %p276, %p277
      %p279 = scmp.ne.s32.totalorder %s267, %s268
      %p280 = scmp.eq.s32.totalorder %s29, 3
      %p281 = por %p279, %p280
      %p283 = scmp.ne.s32.totalorder %s268, %s282
      %p284 = scmp.eq.s32.totalorder %s29, 0
      %p285 = por %p283, %p284
      %s287 = sadd.s32 %s286, 1
      %p290 = scmp.eq.s32.totalorder %s23, 3
      %p291 = scmp.ne.s32.totalorder %s286, %s288
      %p292 = scmp.eq.s32.totalorder %s23, 0
      %p293 = por %p291, %p292
      %p294 = scmp.ne.s32.totalorder %s286, %s288
      %p295 = scmp.eq.s32.totalorder %s28, 3
      %p296 = por %p294, %p295
      %p297 = scmp.ne.s32.totalorder %s288, %s289
      %p298 = scmp.eq.s32.totalorder %s28, 0
      %p299 = por %p297, %p298
      %p300 = scmp.ne.s32.totalorder %s288, %s289
      %p301 = scmp.eq.s32.totalorder %s29, 3
      %p302 = por %p300, %p301
      %p304 = scmp.ne.s32.totalorder %s289, %s303
      %p305 = scmp.eq.s32.totalorder %s29, 0
      %p306 = por %p304, %p305
      %s307 = ssub.s32 %s30, %s42
      %s308 = ssub.s32 %s31, %s38
      %s309 = sor.u32 %s307, %s308
      %p310 = scmp.eq.s32.totalorder %s309, 0
      %s312 = sadd.s32 %s311, 1
      %s313 = scalar_select %p310, %s311, %s312
      %p316 = pneg %p310
      %p317 = scmp.eq.s32.totalorder %s23, 3
      %p318 = por %p316, %p317
      %p319 = scmp.ne.s32.totalorder %s311, %s314
      %p320 = scmp.eq.s32.totalorder %s23, 0
      %p321 = por %p319, %p320
      %p322 = scmp.ne.s32.totalorder %s311, %s314
      %p323 = scmp.eq.s32.totalorder %s28, 3
      %p324 = por %p322, %p323
      %p325 = scmp.ne.s32.totalorder %s314, %s315
      %p326 = scmp.eq.s32.totalorder %s28, 0
      %p327 = por %p325, %p326
      %p328 = scmp.ne.s32.totalorder %s314, %s315
      %p329 = scmp.eq.s32.totalorder %s29, 3
      %p330 = por %p328, %p329
      %p332 = scmp.ne.s32.totalorder %s315, %s331
      %p333 = scmp.eq.s32.totalorder %s29, 0
      %p334 = por %p332, %p333
      %p335 = scmp.le.s32.totalorder 1, %s23
      %p336 = scmp.lt.s32.totalorder %s23, 5
      %p337 = pnand %p335, %p336
      %p338 = pneg %p337
      // Predicated region
      $region9: #{encoder_forward.1} parent=5 // pred_check
        _
      $region10: #{encoder_forward.1} parent=5 // pred_check_branch
        %340 = sbr.rel (%p337) target = $region12
      $region11: #{encoder_forward.1} parent=5 // pred_region
        %s341 = ssub.s32 %s23, 1
        // Predicated region
        $region13: #{encoder_forward.1} parent=11 // pred_check
          %p342 = pneg %p110
        $region14: #{encoder_forward.1} parent=11 // pred_check_branch
          %344 = sbr.rel (%p342) target = $region16
        $region15: #{encoder_forward.1} parent=11 // pred_region
          _
        $region16: #{encoder_forward.1} parent=11 // pred_fallthru
          _
        // Predicated region
        $region17: #{encoder_forward.1} parent=11 // pred_check
          %p345 = pneg %p131
        $region18: #{encoder_forward.1} parent=11 // pred_check_branch
          %347 = sbr.rel (%p345) target = $region20
        $region19: #{encoder_forward.1} parent=11 // pred_region
          _
        $region20: #{encoder_forward.1} parent=11 // pred_fallthru
          _
        // Predicated region
        $region21: #{encoder_forward.1} parent=11 // pred_check
          %p348 = pneg %p152
        $region22: #{encoder_forward.1} parent=11 // pred_check_branch
          %350 = sbr.rel (%p348) target = $region24
        $region23: #{encoder_forward.1} parent=11 // pred_region
          %s352 = ssub.s32 2048, 2048
          %353 = vsyncadd [#allocation6], %s352
          %s354 = sshll.u32 [#allocation5], 4
          %s355 = int_to_ptr.vmem [resolvable:$true] %s354
          %360 = dma.hbm_to_vmem [thread:$0]  %s4, 2048, %s355, [#allocation6], 128, 128, 8
        $region24: #{encoder_forward.1} parent=11 // pred_fallthru
          _
        // Predicated region
        $region25: #{encoder_forward.1} parent=11 // pred_check
          %p361 = pneg %p173
        $region26: #{encoder_forward.1} parent=11 // pred_check_branch
          %363 = sbr.rel (%p361) target = $region28
        $region27: #{encoder_forward.1} parent=11 // pred_region
          _
        $region28: #{encoder_forward.1} parent=11 // pred_fallthru
          _
        // Predicated region
        $region29: #{encoder_forward.1} parent=11 // pred_check
          %p364 = pneg %p194
        $region30: #{encoder_forward.1} parent=11 // pred_check_branch
          %366 = sbr.rel (%p364) target = $region32
        $region31: #{encoder_forward.1} parent=11 // pred_region
          %s368 = ssub.s32 2048, 2048
          %369 = vsyncadd [#allocation9], %s368
          %s370 = sshll.u32 [#allocation8], 4
          %s371 = int_to_ptr.vmem [resolvable:$true] %s370
          %376 = dma.hbm_to_vmem [thread:$0]  %s6, 2048, %s371, [#allocation9], 64, 64, 4
        $region32: #{encoder_forward.1} parent=11 // pred_fallthru
          _
        // Predicated region
        $region33: #{encoder_forward.1} parent=11 // pred_check
          %p377 = pneg %p215
        $region34: #{encoder_forward.1} parent=11 // pred_check_branch
          %379 = sbr.rel (%p377) target = $region36
        $region35: #{encoder_forward.1} parent=11 // pred_region
          _
        $region36: #{encoder_forward.1} parent=11 // pred_fallthru
          _
        // Predicated region
        $region37: #{encoder_forward.1} parent=11 // pred_check
          %p380 = pneg %p236
        $region38: #{encoder_forward.1} parent=11 // pred_check_branch
          %382 = sbr.rel (%p380) target = $region40
        $region39: #{encoder_forward.1} parent=11 // pred_region
          _
        $region40: #{encoder_forward.1} parent=11 // pred_fallthru
          _
        // Predicated region
        $region41: #{encoder_forward.1} parent=11 // pred_check
          %p383 = pneg %p257
        $region42: #{encoder_forward.1} parent=11 // pred_check_branch
          %385 = sbr.rel (%p383) target = $region44
        $region43: #{encoder_forward.1} parent=11 // pred_region
          _
        $region44: #{encoder_forward.1} parent=11 // pred_fallthru
          _
        // Predicated region
        $region45: #{encoder_forward.1} parent=11 // pred_check
          %p386 = pneg %p278
        $region46: #{encoder_forward.1} parent=11 // pred_check_branch
          %388 = sbr.rel (%p386) target = $region48
        $region47: #{encoder_forward.1} parent=11 // pred_region
          _
        $region48: #{encoder_forward.1} parent=11 // pred_fallthru
          _
        // Predicated region
        $region49: #{encoder_forward.1} parent=11 // pred_check
          %p389 = pneg %p299
        $region50: #{encoder_forward.1} parent=11 // pred_check_branch
          %391 = sbr.rel (%p389) target = $region52
        $region51: #{encoder_forward.1} parent=11 // pred_region
          _
        $region52: #{encoder_forward.1} parent=11 // pred_fallthru
          _
      $region12: #{encoder_forward.1} parent=5 // pred_fallthru
        _
      %p392 = scmp.lt.s32.totalorder %s23, 4
      // Predicated region
      $region53: #{encoder_forward.1} parent=5 // pred_check
        %p393 = pneg %p392
      $region54: #{encoder_forward.1} parent=5 // pred_check_branch
        %395 = sbr.rel (%p393) target = $region56
      $region55: #{encoder_forward.1} parent=5 // pred_region
        // Predicated region
        $region57: #{encoder_forward.1} parent=55 // pred_check
          %p396 = pneg %p57
        $region58: #{encoder_forward.1} parent=55 // pred_check_branch
          %398 = sbr.rel (%p396) target = $region60
        $region59: #{encoder_forward.1} parent=55 // pred_region
          %s399 = smul.u32 16, %s31
          %p400 = scmp.lt.s32.totalorder %s30, 1
          %s401 = scalar_select %p400, %s30, 1
          %p402 = scmp.lt.s32.totalorder %s399, 31
          %s403 = scalar_select %p402, %s399, 31
          %s404 = smul.addr %s401, 32
          %s405 = sadd.s32 %s403, %s404
          %s406 = smul.addr %s405, 8
          %s407 = scalar_lea.vmem %s0, %s406
          %s408 = smul.u32 16, %s31
        $region60: #{encoder_forward.1} parent=55 // pred_fallthru
          _
        // Predicated region
        $region61: #{encoder_forward.1} parent=55 // pred_check
          %p409 = pneg %p83
        $region62: #{encoder_forward.1} parent=55 // pred_check_branch
          %411 = sbr.rel (%p409) target = $region64
        $region63: #{encoder_forward.1} parent=55 // pred_region
          %p412 = scmp.lt.s32.totalorder %s30, 1
          %s413 = scalar_select %p412, %s30, 1
          %s414 = smul.addr %s413, 32
          %s415 = smul.addr %s414, 4
          %s416 = scalar_lea.vmem %s1, %s415
        $region64: #{encoder_forward.1} parent=55 // pred_fallthru
          _
      $region56: #{encoder_forward.1} parent=5 // pred_fallthru
        _
      %p417 = scmp.le.s32.totalorder 1, %s23
      %p418 = scmp.lt.s32.totalorder %s23, 5
      %p419 = pnand %p417, %p418
      %p420 = pneg %p419
      // Predicated region
      $region65: #{encoder_forward.1} parent=5 // pred_check
        _
      $region66: #{encoder_forward.1} parent=5 // pred_check_branch
        %422 = sbr.rel (%p419) target = $region68
      $region67: #{encoder_forward.1} parent=5 // pred_region
        %s423 = ssub.s32 %s23, 1
        // Predicated region
        $region69: #{encoder_forward.1} parent=67 // pred_check
          %p424 = pneg %p152
        $region70: #{encoder_forward.1} parent=67 // pred_check_branch
          %426 = sbr.rel (%p424) target = $region72
        $region71: #{encoder_forward.1} parent=67 // pred_region
          %427 = dma.done [#allocation6], 2048
        $region72: #{encoder_forward.1} parent=67 // pred_fallthru
          _
        // Predicated region
        $region73: #{encoder_forward.1} parent=67 // pred_check
          %p428 = pneg %p194
        $region74: #{encoder_forward.1} parent=67 // pred_check_branch
          %430 = sbr.rel (%p428) target = $region76
        $region75: #{encoder_forward.1} parent=67 // pred_region
          %431 = dma.done [#allocation9], 2048
        $region76: #{encoder_forward.1} parent=67 // pred_fallthru
          _
        %s432 = smul.u32 16, %s33
        %p433 = scmp.lt.s32.totalorder %s32, 1
        %s434 = scalar_select %p433, %s32, 1
        %p435 = scmp.lt.s32.totalorder %s432, 31
        %s436 = scalar_select %p435, %s432, 31
        %s437 = smul.addr %s434, 32
        %s438 = sadd.s32 %s436, %s437
        %s439 = smul.addr %s438, 8
        %s440 = scalar_lea.vmem %s0, %s439
        %p441 = pneg %p63
        %p442 = pneg %p60
        %p443 = scmp.lt.s32.totalorder %s32, 1
        %s444 = scalar_select %p443, %s32, 1
        %s445 = smul.addr %s444, 32
        %s446 = smul.addr %s445, 4
        %s447 = scalar_lea.vmem %s1, %s446
        %p448 = pneg %p89
        %p449 = pneg %p86
        %p450 = pneg %p110
        %p451 = pneg %p107
        %p452 = pneg %p131
        %p453 = pneg %p128
        %p454 = pneg %p152
        %p455 = pneg %p149
        %p456 = pneg %p173
        %p457 = pneg %p170
        %p458 = pneg %p194
        %p459 = pneg %p191
        %p460 = pneg %p215
        %p461 = pneg %p212
        %p462 = pneg %p236
        %p463 = pneg %p233
        %p464 = pneg %p257
        %p465 = pneg %p254
        %p466 = pneg %p278
        %p467 = pneg %p275
        %p468 = pneg %p299
        %p469 = pneg %p296
        %p470 = pneg %p327
        %p471 = pneg %p324
        %s472 = sand.u32 %s314, 1
        %s473 = scalar_lea.sflag [#allocation7], %s472
        %s474 = sand.u32 %s314, 1
        %s475 = smul.addr %s474, 64
        %s476 = scalar_lea.vmem [#allocation10], %s475
        %s477 = smul.u32 16, %s33
        %p478 = scmp.lt.s32.totalorder %s32, 1
        %s479 = scalar_select %p478, %s32, 1
        %p480 = scmp.lt.s32.totalorder %s477, 31
        %s481 = scalar_select %p480, %s477, 31
        %s482 = smul.addr %s479, 32
        %s483 = sadd.s32 %s481, %s482
        %s484 = smul.addr %s483, 8
        %s485 = scalar_lea.vmem %s0, %s484
        %s486 = smul.u32 16, %s33
        %p487 = scmp.lt.s32.totalorder %s32, 1
        %s488 = scalar_select %p487, %s32, 1
        %s489 = smul.addr %s488, 32
        %s490 = smul.addr %s489, 4
        %s491 = scalar_lea.vmem %s1, %s490
        %s492 = smul.u32 16, %s33
        %p494 = scmp.eq.s32.totalorder %s33, 0
        // Predicated region
        $region77: #{encoder_forward.1} parent=67 // pred_check
          %p495 = pneg %p494
        $region78: #{encoder_forward.1} parent=67 // pred_check_branch
          %497 = sbr.rel (%p495) target = $region80
        $region79: #{encoder_forward.1} parent=67 // pred_region
          %v498 = vld [vmem:[%s491] sm:$0xf]
          %v499 = vld [vmem:[%s491 + $0x4] sm:$0xf]
          %v500 = vld [vmem:[%s491 + $0x8] sm:$0xf]
          %v501 = vld [vmem:[%s491 + $0xc] sm:$0xf]
          %v502 = vld [vmem:[%s491 + $0x10] sm:$0xf]
          %v503 = vld [vmem:[%s491 + $0x14] sm:$0xf]
          %v504 = vld [vmem:[%s491 + $0x18] sm:$0xf]
          %v505 = vld [vmem:[%s491 + $0x1c] sm:$0xf]
          %v506 = vld [vmem:[%s491 + $0x20] sm:$0xf]
          %v507 = vld [vmem:[%s491 + $0x24] sm:$0xf]
          %v508 = vld [vmem:[%s491 + $0x28] sm:$0xf]
          %v509 = vld [vmem:[%s491 + $0x2c] sm:$0xf]
          %v510 = vld [vmem:[%s491 + $0x30] sm:$0xf]
          %v511 = vld [vmem:[%s491 + $0x34] sm:$0xf]
          %v512 = vld [vmem:[%s491 + $0x38] sm:$0xf]
          %v513 = vld [vmem:[%s491 + $0x3c] sm:$0xf]
          %v514 = vld [vmem:[%s491 + $0x40] sm:$0xf]
          %v515 = vld [vmem:[%s491 + $0x44] sm:$0xf]
          %v516 = vld [vmem:[%s491 + $0x48] sm:$0xf]
          %v517 = vld [vmem:[%s491 + $0x4c] sm:$0xf]
          %v518 = vld [vmem:[%s491 + $0x50] sm:$0xf]
          %v519 = vld [vmem:[%s491 + $0x54] sm:$0xf]
          %v520 = vld [vmem:[%s491 + $0x58] sm:$0xf]
          %v521 = vld [vmem:[%s491 + $0x5c] sm:$0xf]
          %v522 = vld [vmem:[%s491 + $0x60] sm:$0xf]
          %v523 = vld [vmem:[%s491 + $0x64] sm:$0xf]
          %v524 = vld [vmem:[%s491 + $0x68] sm:$0xf]
          %v525 = vld [vmem:[%s491 + $0x6c] sm:$0xf]
          %v526 = vld [vmem:[%s491 + $0x70] sm:$0xf]
          %v527 = vld [vmem:[%s491 + $0x74] sm:$0xf]
          %v528 = vld [vmem:[%s491 + $0x78] sm:$0xf]
          %v529 = vld [vmem:[%s491 + $0x7c] sm:$0xf]
          %v530 = vunpack.c.l.bf16 %v498
          %v531 = vunpack.c.l.bf16 %v499
          %v532 = vunpack.c.l.bf16 %v500
          %v533 = vunpack.c.l.bf16 %v501
          %v534 = vunpack.c.l.bf16 %v502
          %v535 = vunpack.c.l.bf16 %v503
          %v536 = vunpack.c.l.bf16 %v504
          %v537 = vunpack.c.l.bf16 %v505
          %v538 = vunpack.c.l.bf16 %v506
          %v539 = vunpack.c.l.bf16 %v507
          %v540 = vunpack.c.l.bf16 %v508
          %v541 = vunpack.c.l.bf16 %v509
          %v542 = vunpack.c.l.bf16 %v510
          %v543 = vunpack.c.l.bf16 %v511
          %v544 = vunpack.c.l.bf16 %v512
          %v545 = vunpack.c.l.bf16 %v513
          %v546 = vunpack.c.l.bf16 %v514
          %v547 = vunpack.c.l.bf16 %v515
          %v548 = vunpack.c.l.bf16 %v516
          %v549 = vunpack.c.l.bf16 %v517
          %v550 = vunpack.c.l.bf16 %v518
          %v551 = vunpack.c.l.bf16 %v519
          %v552 = vunpack.c.l.bf16 %v520
          %v553 = vunpack.c.l.bf16 %v521
          %v554 = vunpack.c.l.bf16 %v522
          %v555 = vunpack.c.l.bf16 %v523
          %v556 = vunpack.c.l.bf16 %v524
          %v557 = vunpack.c.l.bf16 %v525
          %v558 = vunpack.c.l.bf16 %v526
          %v559 = vunpack.c.l.bf16 %v527
          %v560 = vunpack.c.l.bf16 %v528
          %v561 = vunpack.c.l.bf16 %v529
          %v562 = vld [vmem:[%s8] sm:$0x1]
          %v563 = vld [vmem:[%s9] sm:$0x1]
          %564 = vadd.xlane.f32.xlu0 %v530
          %v565 = vpop.xlane.xlu0 %564
          %566 = vadd.xlane.f32.xlu0 %v531
          %v567 = vpop.xlane.xlu0 %566
          %568 = vadd.xlane.f32.xlu0 %v532
          %v569 = vpop.xlane.xlu0 %568
          %570 = vadd.xlane.f32.xlu0 %v533
          %v571 = vpop.xlane.xlu0 %570
          %572 = vadd.xlane.f32.xlu0 %v534
          %v573 = vpop.xlane.xlu0 %572
          %574 = vadd.xlane.f32.xlu0 %v535
          %v575 = vpop.xlane.xlu0 %574
          %576 = vadd.xlane.f32.xlu0 %v536
          %v577 = vpop.xlane.xlu0 %576
          %578 = vadd.xlane.f32.xlu0 %v537
          %v579 = vpop.xlane.xlu0 %578
          %580 = vadd.xlane.f32.xlu0 %v538
          %v581 = vpop.xlane.xlu0 %580
          %582 = vadd.xlane.f32.xlu0 %v539
          %v583 = vpop.xlane.xlu0 %582
          %584 = vadd.xlane.f32.xlu0 %v540
          %v585 = vpop.xlane.xlu0 %584
          %586 = vadd.xlane.f32.xlu0 %v541
          %v587 = vpop.xlane.xlu0 %586
          %588 = vadd.xlane.f32.xlu0 %v542
          %v589 = vpop.xlane.xlu0 %588
          %590 = vadd.xlane.f32.xlu0 %v543
          %v591 = vpop.xlane.xlu0 %590
          %592 = vadd.xlane.f32.xlu0 %v544
          %v593 = vpop.xlane.xlu0 %592
          %594 = vadd.xlane.f32.xlu0 %v545
          %v595 = vpop.xlane.xlu0 %594
          %596 = vadd.xlane.f32.xlu0 %v546
          %v597 = vpop.xlane.xlu0 %596
          %598 = vadd.xlane.f32.xlu0 %v547
          %v599 = vpop.xlane.xlu0 %598
          %600 = vadd.xlane.f32.xlu0 %v548
          %v601 = vpop.xlane.xlu0 %600
          %602 = vadd.xlane.f32.xlu0 %v549
          %v603 = vpop.xlane.xlu0 %602
          %604 = vadd.xlane.f32.xlu0 %v550
          %v605 = vpop.xlane.xlu0 %604
          %606 = vadd.xlane.f32.xlu0 %v551
          %v607 = vpop.xlane.xlu0 %606
          %608 = vadd.xlane.f32.xlu0 %v552
          %v609 = vpop.xlane.xlu0 %608
          %610 = vadd.xlane.f32.xlu0 %v553
          %v611 = vpop.xlane.xlu0 %610
          %612 = vadd.xlane.f32.xlu0 %v554
          %v613 = vpop.xlane.xlu0 %612
          %614 = vadd.xlane.f32.xlu0 %v555
          %v615 = vpop.xlane.xlu0 %614
          %616 = vadd.xlane.f32.xlu0 %v556
          %v617 = vpop.xlane.xlu0 %616
          %618 = vadd.xlane.f32.xlu0 %v557
          %v619 = vpop.xlane.xlu0 %618
          %620 = vadd.xlane.f32.xlu0 %v558
          %v621 = vpop.xlane.xlu0 %620
          %622 = vadd.xlane.f32.xlu0 %v559
          %v623 = vpop.xlane.xlu0 %622
          %624 = vadd.xlane.f32.xlu0 %v560
          %v625 = vpop.xlane.xlu0 %624
          %626 = vadd.xlane.f32.xlu0 %v561
          %v627 = vpop.xlane.xlu0 %626
          %v628 = vrcp.pop 128.0
          %v629 = vmul.f32 %v565, %v628
          %v630 = vmul.f32 %v567, %v628
          %v631 = vmul.f32 %v569, %v628
          %v632 = vmul.f32 %v571, %v628
          %v633 = vmul.f32 %v573, %v628
          %v634 = vmul.f32 %v575, %v628
          %v635 = vmul.f32 %v577, %v628
          %v636 = vmul.f32 %v579, %v628
          %v637 = vmul.f32 %v581, %v628
          %v638 = vmul.f32 %v583, %v628
          %v639 = vmul.f32 %v585, %v628
          %v640 = vmul.f32 %v587, %v628
          %v641 = vmul.f32 %v589, %v628
          %v642 = vmul.f32 %v591, %v628
          %v643 = vmul.f32 %v593, %v628
          %v644 = vmul.f32 %v595, %v628
          %v645 = vmul.f32 %v597, %v628
          %v646 = vmul.f32 %v599, %v628
          %v647 = vmul.f32 %v601, %v628
          %v648 = vmul.f32 %v603, %v628
          %v649 = vmul.f32 %v605, %v628
          %v650 = vmul.f32 %v607, %v628
          %v651 = vmul.f32 %v609, %v628
          %v652 = vmul.f32 %v611, %v628
          %v653 = vmul.f32 %v613, %v628
          %v654 = vmul.f32 %v615, %v628
          %v655 = vmul.f32 %v617, %v628
          %v656 = vmul.f32 %v619, %v628
          %v657 = vmul.f32 %v621, %v628
          %v658 = vmul.f32 %v623, %v628
          %v659 = vmul.f32 %v625, %v628
          %v660 = vmul.f32 %v627, %v628
          %v661 = vsub.f32 %v530, %v629
          %v662 = vsub.f32 %v531, %v630
          %v663 = vsub.f32 %v532, %v631
          %v664 = vsub.f32 %v533, %v632
          %v665 = vsub.f32 %v534, %v633
          %v666 = vsub.f32 %v535, %v634
          %v667 = vsub.f32 %v536, %v635
          %v668 = vsub.f32 %v537, %v636
          %v669 = vsub.f32 %v538, %v637
          %v670 = vsub.f32 %v539, %v638
          %v671 = vsub.f32 %v540, %v639
          %v672 = vsub.f32 %v541, %v640
          %v673 = vsub.f32 %v542, %v641
          %v674 = vsub.f32 %v543, %v642
          %v675 = vsub.f32 %v544, %v643
          %v676 = vsub.f32 %v545, %v644
          %v677 = vsub.f32 %v546, %v645
          %v678 = vsub.f32 %v547, %v646
          %v679 = vsub.f32 %v548, %v647
          %v680 = vsub.f32 %v549, %v648
          %v681 = vsub.f32 %v550, %v649
          %v682 = vsub.f32 %v551, %v650
          %v683 = vsub.f32 %v552, %v651
          %v684 = vsub.f32 %v553, %v652
          %v685 = vsub.f32 %v554, %v653
          %v686 = vsub.f32 %v555, %v654
          %v687 = vsub.f32 %v556, %v655
          %v688 = vsub.f32 %v557, %v656
          %v689 = vsub.f32 %v558, %v657
          %v690 = vsub.f32 %v559, %v658
          %v691 = vsub.f32 %v560, %v659
          %v692 = vsub.f32 %v561, %v660
          %v693 = vmul.f32 %v661, %v661
          %v694 = vmul.f32 %v662, %v662
          %v695 = vmul.f32 %v663, %v663
          %v696 = vmul.f32 %v664, %v664
          %v697 = vmul.f32 %v665, %v665
          %v698 = vmul.f32 %v666, %v666
          %v699 = vmul.f32 %v667, %v667
          %v700 = vmul.f32 %v668, %v668
          %v701 = vmul.f32 %v669, %v669
          %v702 = vmul.f32 %v670, %v670
          %v703 = vmul.f32 %v671, %v671
          %v704 = vmul.f32 %v672, %v672
          %v705 = vmul.f32 %v673, %v673
          %v706 = vmul.f32 %v674, %v674
          %v707 = vmul.f32 %v675, %v675
          %v708 = vmul.f32 %v676, %v676
          %v709 = vmul.f32 %v677, %v677
          %v710 = vmul.f32 %v678, %v678
          %v711 = vmul.f32 %v679, %v679
          %v712 = vmul.f32 %v680, %v680
          %v713 = vmul.f32 %v681, %v681
          %v714 = vmul.f32 %v682, %v682
          %v715 = vmul.f32 %v683, %v683
          %v716 = vmul.f32 %v684, %v684
          %v717 = vmul.f32 %v685, %v685
          %v718 = vmul.f32 %v686, %v686
          %v719 = vmul.f32 %v687, %v687
          %v720 = vmul.f32 %v688, %v688
          %v721 = vmul.f32 %v689, %v689
          %v722 = vmul.f32 %v690, %v690
          %v723 = vmul.f32 %v691, %v691
          %v724 = vmul.f32 %v692, %v692
          %725 = vadd.xlane.f32.xlu0 %v693
          %v726 = vpop.xlane.xlu0 %725
          %727 = vadd.xlane.f32.xlu0 %v694
          %v728 = vpop.xlane.xlu0 %727
          %729 = vadd.xlane.f32.xlu0 %v695
          %v730 = vpop.xlane.xlu0 %729
          %731 = vadd.xlane.f32.xlu0 %v696
          %v732 = vpop.xlane.xlu0 %731
          %733 = vadd.xlane.f32.xlu0 %v697
          %v734 = vpop.xlane.xlu0 %733
          %735 = vadd.xlane.f32.xlu0 %v698
          %v736 = vpop.xlane.xlu0 %735
          %737 = vadd.xlane.f32.xlu0 %v699
          %v738 = vpop.xlane.xlu0 %737
          %739 = vadd.xlane.f32.xlu0 %v700
          %v740 = vpop.xlane.xlu0 %739
          %741 = vadd.xlane.f32.xlu0 %v701
          %v742 = vpop.xlane.xlu0 %741
          %743 = vadd.xlane.f32.xlu0 %v702
          %v744 = vpop.xlane.xlu0 %743
          %745 = vadd.xlane.f32.xlu0 %v703
          %v746 = vpop.xlane.xlu0 %745
          %747 = vadd.xlane.f32.xlu0 %v704
          %v748 = vpop.xlane.xlu0 %747
          %749 = vadd.xlane.f32.xlu0 %v705
          %v750 = vpop.xlane.xlu0 %749
          %751 = vadd.xlane.f32.xlu0 %v706
          %v752 = vpop.xlane.xlu0 %751
          %753 = vadd.xlane.f32.xlu0 %v707
          %v754 = vpop.xlane.xlu0 %753
          %755 = vadd.xlane.f32.xlu0 %v708
          %v756 = vpop.xlane.xlu0 %755
          %757 = vadd.xlane.f32.xlu0 %v709
          %v758 = vpop.xlane.xlu0 %757
          %759 = vadd.xlane.f32.xlu0 %v710
          %v760 = vpop.xlane.xlu0 %759
          %761 = vadd.xlane.f32.xlu0 %v711
          %v762 = vpop.xlane.xlu0 %761
          %763 = vadd.xlane.f32.xlu0 %v712
          %v764 = vpop.xlane.xlu0 %763
          %765 = vadd.xlane.f32.xlu0 %v713
          %v766 = vpop.xlane.xlu0 %765
          %767 = vadd.xlane.f32.xlu0 %v714
          %v768 = vpop.xlane.xlu0 %767
          %769 = vadd.xlane.f32.xlu0 %v715
          %v770 = vpop.xlane.xlu0 %769
          %771 = vadd.xlane.f32.xlu0 %v716
          %v772 = vpop.xlane.xlu0 %771
          %773 = vadd.xlane.f32.xlu0 %v717
          %v774 = vpop.xlane.xlu0 %773
          %775 = vadd.xlane.f32.xlu0 %v718
          %v776 = vpop.xlane.xlu0 %775
          %777 = vadd.xlane.f32.xlu0 %v719
          %v778 = vpop.xlane.xlu0 %777
          %779 = vadd.xlane.f32.xlu0 %v720
          %v780 = vpop.xlane.xlu0 %779
          %781 = vadd.xlane.f32.xlu0 %v721
          %v782 = vpop.xlane.xlu0 %781
          %783 = vadd.xlane.f32.xlu0 %v722
          %v784 = vpop.xlane.xlu0 %783
          %785 = vadd.xlane.f32.xlu0 %v723
          %v786 = vpop.xlane.xlu0 %785
          %787 = vadd.xlane.f32.xlu0 %v724
          %v788 = vpop.xlane.xlu0 %787
          %v789 = vmul.f32 %v726, %v628
          %v790 = vmul.f32 %v728, %v628
          %v791 = vmul.f32 %v730, %v628
          %v792 = vmul.f32 %v732, %v628
          %v793 = vmul.f32 %v734, %v628
          %v794 = vmul.f32 %v736, %v628
          %v795 = vmul.f32 %v738, %v628
          %v796 = vmul.f32 %v740, %v628
          %v797 = vmul.f32 %v742, %v628
          %v798 = vmul.f32 %v744, %v628
          %v799 = vmul.f32 %v746, %v628
          %v800 = vmul.f32 %v748, %v628
          %v801 = vmul.f32 %v750, %v628
          %v802 = vmul.f32 %v752, %v628
          %v803 = vmul.f32 %v754, %v628
          %v804 = vmul.f32 %v756, %v628
          %v805 = vmul.f32 %v758, %v628
          %v806 = vmul.f32 %v760, %v628
          %v807 = vmul.f32 %v762, %v628
          %v808 = vmul.f32 %v764, %v628
          %v809 = vmul.f32 %v766, %v628
          %v810 = vmul.f32 %v768, %v628
          %v811 = vmul.f32 %v770, %v628
          %v812 = vmul.f32 %v772, %v628
          %v813 = vmul.f32 %v774, %v628
          %v814 = vmul.f32 %v776, %v628
          %v815 = vmul.f32 %v778, %v628
          %v816 = vmul.f32 %v780, %v628
          %v817 = vmul.f32 %v782, %v628
          %v818 = vmul.f32 %v784, %v628
          %v819 = vmul.f32 %v786, %v628
          %v820 = vmul.f32 %v788, %v628
          %v821 = vadd.f32 %v789, 1e-05
          %v822 = vadd.f32 %v790, 1e-05
          %v823 = vadd.f32 %v791, 1e-05
          %v824 = vadd.f32 %v792, 1e-05
          %v825 = vadd.f32 %v793, 1e-05
          %v826 = vadd.f32 %v794, 1e-05
          %v827 = vadd.f32 %v795, 1e-05
          %v828 = vadd.f32 %v796, 1e-05
          %v829 = vadd.f32 %v797, 1e-05
          %v830 = vadd.f32 %v798, 1e-05
          %v831 = vadd.f32 %v799, 1e-05
          %v832 = vadd.f32 %v800, 1e-05
          %v833 = vadd.f32 %v801, 1e-05
          %v834 = vadd.f32 %v802, 1e-05
          %v835 = vadd.f32 %v803, 1e-05
          %v836 = vadd.f32 %v804, 1e-05
          %v837 = vadd.f32 %v805, 1e-05
          %v838 = vadd.f32 %v806, 1e-05
          %v839 = vadd.f32 %v807, 1e-05
          %v840 = vadd.f32 %v808, 1e-05
          %v841 = vadd.f32 %v809, 1e-05
          %v842 = vadd.f32 %v810, 1e-05
          %v843 = vadd.f32 %v811, 1e-05
          %v844 = vadd.f32 %v812, 1e-05
          %v845 = vadd.f32 %v813, 1e-05
          %v846 = vadd.f32 %v814, 1e-05
          %v847 = vadd.f32 %v815, 1e-05
          %v848 = vadd.f32 %v816, 1e-05
          %v849 = vadd.f32 %v817, 1e-05
          %v850 = vadd.f32 %v818, 1e-05
          %v851 = vadd.f32 %v819, 1e-05
          %v852 = vadd.f32 %v820, 1e-05
          %v853 = vrsqrt.pop %v821
          %v854 = vrsqrt.pop %v822
          %v855 = vrsqrt.pop %v823
          %v856 = vrsqrt.pop %v824
          %v857 = vrsqrt.pop %v825
          %v858 = vrsqrt.pop %v826
          %v859 = vrsqrt.pop %v827
          %v860 = vrsqrt.pop %v828
          %v861 = vrsqrt.pop %v829
          %v862 = vrsqrt.pop %v830
          %v863 = vrsqrt.pop %v831
          %v864 = vrsqrt.pop %v832
          %v865 = vrsqrt.pop %v833
          %v866 = vrsqrt.pop %v834
          %v867 = vrsqrt.pop %v835
          %v868 = vrsqrt.pop %v836
          %v869 = vrsqrt.pop %v837
          %v870 = vrsqrt.pop %v838
          %v871 = vrsqrt.pop %v839
          %v872 = vrsqrt.pop %v840
          %v873 = vrsqrt.pop %v841
          %v874 = vrsqrt.pop %v842
          %v875 = vrsqrt.pop %v843
          %v876 = vrsqrt.pop %v844
          %v877 = vrsqrt.pop %v845
          %v878 = vrsqrt.pop %v846
          %v879 = vrsqrt.pop %v847
          %v880 = vrsqrt.pop %v848
          %v881 = vrsqrt.pop %v849
          %v882 = vrsqrt.pop %v850
          %v883 = vrsqrt.pop %v851
          %v884 = vrsqrt.pop %v852
          %v885 = vmul.f32 %v661, %v853
          %v886 = vmul.f32 %v662, %v854
          %v887 = vmul.f32 %v663, %v855
          %v888 = vmul.f32 %v664, %v856
          %v889 = vmul.f32 %v665, %v857
          %v890 = vmul.f32 %v666, %v858
          %v891 = vmul.f32 %v667, %v859
          %v892 = vmul.f32 %v668, %v860
          %v893 = vmul.f32 %v669, %v861
          %v894 = vmul.f32 %v670, %v862
          %v895 = vmul.f32 %v671, %v863
          %v896 = vmul.f32 %v672, %v864
          %v897 = vmul.f32 %v673, %v865
          %v898 = vmul.f32 %v674, %v866
          %v899 = vmul.f32 %v675, %v867
          %v900 = vmul.f32 %v676, %v868
          %v901 = vmul.f32 %v677, %v869
          %v902 = vmul.f32 %v678, %v870
          %v903 = vmul.f32 %v679, %v871
          %v904 = vmul.f32 %v680, %v872
          %v905 = vmul.f32 %v681, %v873
          %v906 = vmul.f32 %v682, %v874
          %v907 = vmul.f32 %v683, %v875
          %v908 = vmul.f32 %v684, %v876
          %v909 = vmul.f32 %v685, %v877
          %v910 = vmul.f32 %v686, %v878
          %v911 = vmul.f32 %v687, %v879
          %v912 = vmul.f32 %v688, %v880
          %v913 = vmul.f32 %v689, %v881
          %v914 = vmul.f32 %v690, %v882
          %v915 = vmul.f32 %v691, %v883
          %v916 = vmul.f32 %v692, %v884
          %v918 = vlaneseq
          %v919 = vshrl.u32 %v918, 7
          %v920 = vsub.s32 0, %v919
          %v921 = vrot.slane %v562, %v920
          %v923 = vmul.f32 %v885, %v921
          %v924 = vmul.f32 %v886, %v921
          %v925 = vmul.f32 %v887, %v921
          %v926 = vmul.f32 %v888, %v921
          %v927 = vmul.f32 %v889, %v921
          %v928 = vmul.f32 %v890, %v921
          %v929 = vmul.f32 %v891, %v921
          %v930 = vmul.f32 %v892, %v921
          %v931 = vmul.f32 %v893, %v921
          %v932 = vmul.f32 %v894, %v921
          %v933 = vmul.f32 %v895, %v921
          %v934 = vmul.f32 %v896, %v921
          %v935 = vmul.f32 %v897, %v921
          %v936 = vmul.f32 %v898, %v921
          %v937 = vmul.f32 %v899, %v921
          %v938 = vmul.f32 %v900, %v921
          %v939 = vmul.f32 %v901, %v921
          %v940 = vmul.f32 %v902, %v921
          %v941 = vmul.f32 %v903, %v921
          %v942 = vmul.f32 %v904, %v921
          %v943 = vmul.f32 %v905, %v921
          %v944 = vmul.f32 %v906, %v921
          %v945 = vmul.f32 %v907, %v921
          %v946 = vmul.f32 %v908, %v921
          %v947 = vmul.f32 %v909, %v921
          %v948 = vmul.f32 %v910, %v921
          %v949 = vmul.f32 %v911, %v921
          %v950 = vmul.f32 %v912, %v921
          %v951 = vmul.f32 %v913, %v921
          %v952 = vmul.f32 %v914, %v921
          %v953 = vmul.f32 %v915, %v921
          %v954 = vmul.f32 %v916, %v921
          %v956 = vlaneseq
          %v957 = vshrl.u32 %v956, 7
          %v958 = vsub.s32 0, %v957
          %v959 = vrot.slane %v563, %v958
          %v961 = vadd.f32 %v923, %v959
          %v962 = vadd.f32 %v924, %v959
          %v963 = vadd.f32 %v925, %v959
          %v964 = vadd.f32 %v926, %v959
          %v965 = vadd.f32 %v927, %v959
          %v966 = vadd.f32 %v928, %v959
          %v967 = vadd.f32 %v929, %v959
          %v968 = vadd.f32 %v930, %v959
          %v969 = vadd.f32 %v931, %v959
          %v970 = vadd.f32 %v932, %v959
          %v971 = vadd.f32 %v933, %v959
          %v972 = vadd.f32 %v934, %v959
          %v973 = vadd.f32 %v935, %v959
          %v974 = vadd.f32 %v936, %v959
          %v975 = vadd.f32 %v937, %v959
          %v976 = vadd.f32 %v938, %v959
          %v977 = vadd.f32 %v939, %v959
          %v978 = vadd.f32 %v940, %v959
          %v979 = vadd.f32 %v941, %v959
          %v980 = vadd.f32 %v942, %v959
          %v981 = vadd.f32 %v943, %v959
          %v982 = vadd.f32 %v944, %v959
          %v983 = vadd.f32 %v945, %v959
          %v984 = vadd.f32 %v946, %v959
          %v985 = vadd.f32 %v947, %v959
          %v986 = vadd.f32 %v948, %v959
          %v987 = vadd.f32 %v949, %v959
          %v988 = vadd.f32 %v950, %v959
          %v989 = vadd.f32 %v951, %v959
          %v990 = vadd.f32 %v952, %v959
          %v991 = vadd.f32 %v953, %v959
          %v992 = vadd.f32 %v954, %v959
          %v993 = vld [vmem:[%s2] sm:$0xff]
          %v994 = vld [vmem:[%s2 + $0x8] sm:$0xf]
          %v995 = vld [vmem:[%s2 + $0xc] sm:$0xff]
          %v996 = vld [vmem:[%s2 + $0x14] sm:$0xf]
          %v997 = vld [vmem:[%s2 + $0x18] sm:$0xff]
          %v998 = vld [vmem:[%s2 + $0x20] sm:$0xf]
          %v999 = vld [vmem:[%s2 + $0x24] sm:$0xff]
          %v1000 = vld [vmem:[%s2 + $0x2c] sm:$0xf]
          %v1001 = vld [vmem:[%s2 + $0x30] sm:$0xff]
          %v1002 = vld [vmem:[%s2 + $0x38] sm:$0xf]
          %v1003 = vld [vmem:[%s2 + $0x3c] sm:$0xff]
          %v1004 = vld [vmem:[%s2 + $0x44] sm:$0xf]
          %v1005 = vld [vmem:[%s2 + $0x48] sm:$0xff]
          %v1006 = vld [vmem:[%s2 + $0x50] sm:$0xf]
          %v1007 = vld [vmem:[%s2 + $0x54] sm:$0xff]
          %v1008 = vld [vmem:[%s2 + $0x5c] sm:$0xf]
          %v1009 = vld [vmem:[%s2 + $0x60] sm:$0xff]
          %v1010 = vld [vmem:[%s2 + $0x68] sm:$0xf]
          %v1011 = vld [vmem:[%s2 + $0x6c] sm:$0xff]
          %v1012 = vld [vmem:[%s2 + $0x74] sm:$0xf]
          %v1013 = vld [vmem:[%s2 + $0x78] sm:$0xff]
          %v1014 = vld [vmem:[%s2 + $0x80] sm:$0xf]
          %v1015 = vld [vmem:[%s2 + $0x84] sm:$0xff]
          %v1016 = vld [vmem:[%s2 + $0x8c] sm:$0xf]
          %v1017 = vld [vmem:[%s2 + $0x90] sm:$0xff]
          %v1018 = vld [vmem:[%s2 + $0x98] sm:$0xf]
          %v1019 = vld [vmem:[%s2 + $0x9c] sm:$0xff]
          %v1020 = vld [vmem:[%s2 + $0xa4] sm:$0xf]
          %v1021 = vld [vmem:[%s2 + $0xa8] sm:$0xff]
          %v1022 = vld [vmem:[%s2 + $0xb0] sm:$0xf]
          %v1023 = vld [vmem:[%s2 + $0xb4] sm:$0xff]
          %v1024 = vld [vmem:[%s2 + $0xbc] sm:$0xf]
          %v1025 = vpack.c.bf16 %v962, %v961
          %v1026 = vpack.c.bf16 %v964, %v963
          %v1027 = vpack.c.bf16 %v966, %v965
          %v1028 = vpack.c.bf16 %v968, %v967
          %v1029 = vpack.c.bf16 %v970, %v969
          %v1030 = vpack.c.bf16 %v972, %v971
          %v1031 = vpack.c.bf16 %v974, %v973
          %v1032 = vpack.c.bf16 %v976, %v975
          %v1033 = vpack.c.bf16 %v978, %v977
          %v1034 = vpack.c.bf16 %v980, %v979
          %v1035 = vpack.c.bf16 %v982, %v981
          %v1036 = vpack.c.bf16 %v984, %v983
          %v1037 = vpack.c.bf16 %v986, %v985
          %v1038 = vpack.c.bf16 %v988, %v987
          %v1039 = vpack.c.bf16 %v990, %v989
          %v1040 = vpack.c.bf16 %v992, %v991
          %v1073 = vunpack.c.l.b16 %v993
          %v1074 = vunpack.c.h.b16 %v993
          %v1075 = vunpack.c.l.b16 %v994
          %v1076 = vunpack.c.l.b16 %v995
          %v1077 = vunpack.c.h.b16 %v995
          %v1078 = vunpack.c.l.b16 %v996
          %v1079 = vunpack.c.l.b16 %v997
          %v1080 = vunpack.c.h.b16 %v997
          %v1081 = vunpack.c.l.b16 %v998
          %v1082 = vunpack.c.l.b16 %v999
          %v1083 = vunpack.c.h.b16 %v999
          %v1084 = vunpack.c.l.b16 %v1000
          %v1085 = vunpack.c.l.b16 %v1001
          %v1086 = vunpack.c.h.b16 %v1001
          %v1087 = vunpack.c.l.b16 %v1002
          %v1088 = vunpack.c.l.b16 %v1003
          %v1089 = vunpack.c.h.b16 %v1003
          %v1090 = vunpack.c.l.b16 %v1004
          %v1091 = vunpack.c.l.b16 %v1005
          %v1092 = vunpack.c.h.b16 %v1005
          %v1093 = vunpack.c.l.b16 %v1006
          %v1094 = vunpack.c.l.b16 %v1007
          %v1095 = vunpack.c.h.b16 %v1007
          %v1096 = vunpack.c.l.b16 %v1008
          %v1097 = vunpack.c.l.b16 %v1009
          %v1098 = vunpack.c.h.b16 %v1009
          %v1099 = vunpack.c.l.b16 %v1010
          %v1100 = vunpack.c.l.b16 %v1011
          %v1101 = vunpack.c.h.b16 %v1011
          %v1102 = vunpack.c.l.b16 %v1012
          %v1103 = vunpack.c.l.b16 %v1013
          %v1104 = vunpack.c.h.b16 %v1013
          %v1105 = vunpack.c.l.b16 %v1014
          %v1106 = vunpack.c.l.b16 %v1015
          %v1107 = vunpack.c.h.b16 %v1015
          %v1108 = vunpack.c.l.b16 %v1016
          %v1109 = vunpack.c.l.b16 %v1017
          %v1110 = vunpack.c.h.b16 %v1017
          %v1111 = vunpack.c.l.b16 %v1018
          %v1112 = vunpack.c.l.b16 %v1019
          %v1113 = vunpack.c.h.b16 %v1019
          %v1114 = vunpack.c.l.b16 %v1020
          %v1115 = vunpack.c.l.b16 %v1021
          %v1116 = vunpack.c.h.b16 %v1021
          %v1117 = vunpack.c.l.b16 %v1022
          %v1118 = vunpack.c.l.b16 %v1023
          %v1119 = vunpack.c.h.b16 %v1023
          %v1120 = vunpack.c.l.b16 %v1024
          %v1121 = vpack.c.b16 %v1076, %v1073
          %v1122 = vpack.c.b16 %v1077, %v1074
          %v1123 = vpack.c.b16 %v1078, %v1075
          %v1124 = vpack.c.b16 %v1082, %v1079
          %v1125 = vpack.c.b16 %v1083, %v1080
          %v1126 = vpack.c.b16 %v1084, %v1081
          %v1127 = vpack.c.b16 %v1088, %v1085
          %v1128 = vpack.c.b16 %v1089, %v1086
          %v1129 = vpack.c.b16 %v1090, %v1087
          %v1130 = vpack.c.b16 %v1094, %v1091
          %v1131 = vpack.c.b16 %v1095, %v1092
          %v1132 = vpack.c.b16 %v1096, %v1093
          %v1133 = vpack.c.b16 %v1100, %v1097
          %v1134 = vpack.c.b16 %v1101, %v1098
          %v1135 = vpack.c.b16 %v1102, %v1099
          %v1136 = vpack.c.b16 %v1106, %v1103
          %v1137 = vpack.c.b16 %v1107, %v1104
          %v1138 = vpack.c.b16 %v1108, %v1105
          %v1139 = vpack.c.b16 %v1112, %v1109
          %v1140 = vpack.c.b16 %v1113, %v1110
          %v1141 = vpack.c.b16 %v1114, %v1111
          %v1142 = vpack.c.b16 %v1118, %v1115
          %v1143 = vpack.c.b16 %v1119, %v1116
          %v1144 = vpack.c.b16 %v1120, %v1117
          %1169 = vmatprep.subr.bf16.mxu0 %v1143
          %1170 = vmatpush1.bf16.msra.mxu0 %v1142
          %1171 = vmatprep.subr.bf16.mxu0 %v1140
          %1172 = vmatpush1.bf16.msra.mxu0 %v1139
          %1173 = vmatprep.subr.bf16.mxu0 %v1137
          %1174 = vmatpush1.bf16.msra.mxu0 %v1136
          %1175 = vmatprep.subr.bf16.mxu0 %v1134
          %1176 = vmatpush1.bf16.msra.mxu0 %v1133
          %1177 = vmatprep.subr.bf16.mxu0 %v1131
          %1178 = vmatpush1.bf16.msra.mxu0 %v1130
          %1179 = vmatprep.subr.bf16.mxu0 %v1128
          %1180 = vmatpush1.bf16.msra.mxu0 %v1127
          %1181 = vmatprep.subr.bf16.mxu0 %v1125
          %1182 = vmatpush1.bf16.msra.mxu0 %v1124
          %1183 = vmatprep.subr.bf16.mxu0 %v1122
          %1184 = vmatpush1.bf16.msra.mxu0 %v1121
          %1185 = vmatprep.subr.bf16.mxu0 0
          %1186 = vmatpush2.bf16.msra.mxu0 0
          %1187 = vmatprep.subr.bf16.mxu0 0
          %1188 = vmatpush2.bf16.msra.mxu0 0
          %1189 = vmatprep.subr.bf16.mxu0 0
          %1190 = vmatpush2.bf16.msra.mxu0 0
          %1191 = vmatprep.subr.bf16.mxu0 0
          %1192 = vmatpush2.bf16.msra.mxu0 0
          %1193 = vmatprep.subr.bf16.mxu0 0
          %1194 = vmatpush2.bf16.msra.mxu0 0
          %1195 = vmatprep.subr.bf16.mxu0 0
          %1196 = vmatpush2.bf16.msra.mxu0 0
          %1197 = vmatprep.subr.bf16.mxu0 0
          %1198 = vmatpush2.bf16.msra.mxu0 0
          %1199 = vmatprep.subr.bf16.mxu0 0
          %1200 = vmatpush2.bf16.msra.mxu0 0
          %1201 = vmatprep.mubr.bf16.mxu0 0
          %1202 = vmatmul.mubr.bf16.gmra.mxu0 %v1025
          %v1203 = vpop.f32.mrf.mxu0
          %v1204 = vadd.f32 0.0, %v1203
          %v1205 = vpop.f32.mrf.mxu0
          %v1206 = vadd.f32 0.0, %v1205
          %v1207 = vpop.f32.mrf.mxu0
          %v1208 = vadd.f32 0.0, %v1207
          %v1209 = vpop.f32.mrf.mxu0
          %v1210 = vadd.f32 0.0, %v1209
          %1211 = vmatprep.mubr.bf16.mxu0 0
          %1212 = vmatmul.mubr.bf16.gmra.mxu0 %v1026
          %v1213 = vpop.f32.mrf.mxu0
          %v1214 = vadd.f32 0.0, %v1213
          %v1215 = vpop.f32.mrf.mxu0
          %v1216 = vadd.f32 0.0, %v1215
          %v1217 = vpop.f32.mrf.mxu0
          %v1218 = vadd.f32 0.0, %v1217
          %v1219 = vpop.f32.mrf.mxu0
          %v1220 = vadd.f32 0.0, %v1219
          %1221 = vmatprep.mubr.bf16.mxu0 0
          %1222 = vmatmul.mubr.bf16.gmra.mxu0 %v1027
          %v1223 = vpop.f32.mrf.mxu0
          %v1224 = vadd.f32 0.0, %v1223
          %v1225 = vpop.f32.mrf.mxu0
          %v1226 = vadd.f32 0.0, %v1225
          %v1227 = vpop.f32.mrf.mxu0
          %v1228 = vadd.f32 0.0, %v1227
          %v1229 = vpop.f32.mrf.mxu0
          %v1230 = vadd.f32 0.0, %v1229
          %1231 = vmatprep.mubr.bf16.mxu0 0
          %1232 = vmatmul.mubr.bf16.gmra.mxu0 %v1028
          %v1233 = vpop.f32.mrf.mxu0
          %v1234 = vadd.f32 0.0, %v1233
          %v1235 = vpop.f32.mrf.mxu0
          %v1236 = vadd.f32 0.0, %v1235
          %v1237 = vpop.f32.mrf.mxu0
          %v1238 = vadd.f32 0.0, %v1237
          %v1239 = vpop.f32.mrf.mxu0
          %v1240 = vadd.f32 0.0, %v1239
          %1241 = vmatprep.mubr.bf16.mxu0 0
          %1242 = vmatmul.mubr.bf16.gmra.mxu0 %v1029
          %v1243 = vpop.f32.mrf.mxu0
          %v1244 = vadd.f32 0.0, %v1243
          %v1245 = vpop.f32.mrf.mxu0
          %v1246 = vadd.f32 0.0, %v1245
          %v1247 = vpop.f32.mrf.mxu0
          %v1248 = vadd.f32 0.0, %v1247
          %v1249 = vpop.f32.mrf.mxu0
          %v1250 = vadd.f32 0.0, %v1249
          %1251 = vmatprep.mubr.bf16.mxu0 0
          %1252 = vmatmul.mubr.bf16.gmra.mxu0 %v1030
          %v1253 = vpop.f32.mrf.mxu0
          %v1254 = vadd.f32 0.0, %v1253
          %v1255 = vpop.f32.mrf.mxu0
          %v1256 = vadd.f32 0.0, %v1255
          %v1257 = vpop.f32.mrf.mxu0
          %v1258 = vadd.f32 0.0, %v1257
          %v1259 = vpop.f32.mrf.mxu0
          %v1260 = vadd.f32 0.0, %v1259
          %1261 = vmatprep.mubr.bf16.mxu0 0
          %1262 = vmatmul.mubr.bf16.gmra.mxu0 %v1031
          %v1263 = vpop.f32.mrf.mxu0
          %v1264 = vadd.f32 0.0, %v1263
          %v1265 = vpop.f32.mrf.mxu0
          %v1266 = vadd.f32 0.0, %v1265
          %v1267 = vpop.f32.mrf.mxu0
          %v1268 = vadd.f32 0.0, %v1267
          %v1269 = vpop.f32.mrf.mxu0
          %v1270 = vadd.f32 0.0, %v1269
          %1271 = vmatprep.mubr.bf16.mxu0 0
          %1272 = vmatmul.mubr.bf16.gmra.mxu0 %v1032
          %v1273 = vpop.f32.mrf.mxu0
          %v1274 = vadd.f32 0.0, %v1273
          %v1275 = vpop.f32.mrf.mxu0
          %v1276 = vadd.f32 0.0, %v1275
          %v1277 = vpop.f32.mrf.mxu0
          %v1278 = vadd.f32 0.0, %v1277
          %v1279 = vpop.f32.mrf.mxu0
          %v1280 = vadd.f32 0.0, %v1279
          %1281 = vmatprep.mubr.bf16.mxu0 0
          %1282 = vmatmul.mubr.bf16.gmra.mxu0 %v1033
          %v1283 = vpop.f32.mrf.mxu0
          %v1284 = vadd.f32 0.0, %v1283
          %v1285 = vpop.f32.mrf.mxu0
          %v1286 = vadd.f32 0.0, %v1285
          %v1287 = vpop.f32.mrf.mxu0
          %v1288 = vadd.f32 0.0, %v1287
          %v1289 = vpop.f32.mrf.mxu0
          %v1290 = vadd.f32 0.0, %v1289
          %1291 = vmatprep.mubr.bf16.mxu0 0
          %1292 = vmatmul.mubr.bf16.gmra.mxu0 %v1034
          %v1293 = vpop.f32.mrf.mxu0
          %v1294 = vadd.f32 0.0, %v1293
          %v1295 = vpop.f32.mrf.mxu0
          %v1296 = vadd.f32 0.0, %v1295
          %v1297 = vpop.f32.mrf.mxu0
          %v1298 = vadd.f32 0.0, %v1297
          %v1299 = vpop.f32.mrf.mxu0
          %v1300 = vadd.f32 0.0, %v1299
          %1301 = vmatprep.mubr.bf16.mxu0 0
          %1302 = vmatmul.mubr.bf16.gmra.mxu0 %v1035
          %v1303 = vpop.f32.mrf.mxu0
          %v1304 = vadd.f32 0.0, %v1303
          %v1305 = vpop.f32.mrf.mxu0
          %v1306 = vadd.f32 0.0, %v1305
          %v1307 = vpop.f32.mrf.mxu0
          %v1308 = vadd.f32 0.0, %v1307
          %v1309 = vpop.f32.mrf.mxu0
          %v1310 = vadd.f32 0.0, %v1309
          %1311 = vmatprep.mubr.bf16.mxu0 0
          %1312 = vmatmul.mubr.bf16.gmra.mxu0 %v1036
          %v1313 = vpop.f32.mrf.mxu0
          %v1314 = vadd.f32 0.0, %v1313
          %v1315 = vpop.f32.mrf.mxu0
          %v1316 = vadd.f32 0.0, %v1315
          %v1317 = vpop.f32.mrf.mxu0
          %v1318 = vadd.f32 0.0, %v1317
          %v1319 = vpop.f32.mrf.mxu0
          %v1320 = vadd.f32 0.0, %v1319
          %1321 = vmatprep.mubr.bf16.mxu0 0
          %1322 = vmatmul.mubr.bf16.gmra.mxu0 %v1037
          %v1323 = vpop.f32.mrf.mxu0
          %v1324 = vadd.f32 0.0, %v1323
          %v1325 = vpop.f32.mrf.mxu0
          %v1326 = vadd.f32 0.0, %v1325
          %v1327 = vpop.f32.mrf.mxu0
          %v1328 = vadd.f32 0.0, %v1327
          %v1329 = vpop.f32.mrf.mxu0
          %v1330 = vadd.f32 0.0, %v1329
          %1331 = vmatprep.mubr.bf16.mxu0 0
          %1332 = vmatmul.mubr.bf16.gmra.mxu0 %v1038
          %v1333 = vpop.f32.mrf.mxu0
          %v1334 = vadd.f32 0.0, %v1333
          %v1335 = vpop.f32.mrf.mxu0
          %v1336 = vadd.f32 0.0, %v1335
          %v1337 = vpop.f32.mrf.mxu0
          %v1338 = vadd.f32 0.0, %v1337
          %v1339 = vpop.f32.mrf.mxu0
          %v1340 = vadd.f32 0.0, %v1339
          %1341 = vmatprep.mubr.bf16.mxu0 0
          %1342 = vmatmul.mubr.bf16.gmra.mxu0 %v1039
          %v1343 = vpop.f32.mrf.mxu0
          %v1344 = vadd.f32 0.0, %v1343
          %v1345 = vpop.f32.mrf.mxu0
          %v1346 = vadd.f32 0.0, %v1345
          %v1347 = vpop.f32.mrf.mxu0
          %v1348 = vadd.f32 0.0, %v1347
          %v1349 = vpop.f32.mrf.mxu0
          %v1350 = vadd.f32 0.0, %v1349
          %1351 = vmatprep.mubr.bf16.mxu0 0
          %1352 = vmatmul.mubr.bf16.gmra.mxu0 %v1040
          %v1353 = vpop.f32.mrf.mxu0
          %v1354 = vadd.f32 0.0, %v1353
          %v1355 = vpop.f32.mrf.mxu0
          %v1356 = vadd.f32 0.0, %v1355
          %v1357 = vpop.f32.mrf.mxu0
          %v1358 = vadd.f32 0.0, %v1357
          %v1359 = vpop.f32.mrf.mxu0
          %v1360 = vadd.f32 0.0, %v1359
          %1361 = vdwg.mxu0
          %1362 = vmatprep.subr.bf16.mxu0 0
          %1363 = vmatpush1.bf16.msra.mxu0 %v1144
          %1364 = vmatprep.subr.bf16.mxu0 0
          %1365 = vmatpush1.bf16.msra.mxu0 %v1141
          %1366 = vmatprep.subr.bf16.mxu0 0
          %1367 = vmatpush1.bf16.msra.mxu0 %v1138
          %1368 = vmatprep.subr.bf16.mxu0 0
          %1369 = vmatpush1.bf16.msra.mxu0 %v1135
          %1370 = vmatprep.subr.bf16.mxu0 0
          %1371 = vmatpush1.bf16.msra.mxu0 %v1132
          %1372 = vmatprep.subr.bf16.mxu0 0
          %1373 = vmatpush1.bf16.msra.mxu0 %v1129
          %1374 = vmatprep.subr.bf16.mxu0 0
          %1375 = vmatpush1.bf16.msra.mxu0 %v1126
          %1376 = vmatprep.subr.bf16.mxu0 0
          %1377 = vmatpush1.bf16.msra.mxu0 %v1123
          %1378 = vmatprep.subr.bf16.mxu0 0
          %1379 = vmatpush2.bf16.msra.mxu0 0
          %1380 = vmatprep.subr.bf16.mxu0 0
          %1381 = vmatpush2.bf16.msra.mxu0 0
          %1382 = vmatprep.subr.bf16.mxu0 0
          %1383 = vmatpush2.bf16.msra.mxu0 0
          %1384 = vmatprep.subr.bf16.mxu0 0
          %1385 = vmatpush2.bf16.msra.mxu0 0
          %1386 = vmatprep.subr.bf16.mxu0 0
          %1387 = vmatpush2.bf16.msra.mxu0 0
          %1388 = vmatprep.subr.bf16.mxu0 0
          %1389 = vmatpush2.bf16.msra.mxu0 0
          %1390 = vmatprep.subr.bf16.mxu0 0
          %1391 = vmatpush2.bf16.msra.mxu0 0
          %1392 = vmatprep.subr.bf16.mxu0 0
          %1393 = vmatpush2.bf16.msra.mxu0 0
          %1394 = vmatprep.mubr.bf16.mxu0 0
          %1395 = vmatmul.mubr.bf16.gmra.mxu0 %v1025
          %v1396 = vpop.f32.mrf.mxu0
          %v1397 = vadd.f32 0.0, %v1396
          %v1398 = vpop.f32.mrf.mxu0
          %v1399 = vpop.f32.mrf.mxu0
          %v1400 = vadd.f32 0.0, %v1399
          %v1401 = vpop.f32.mrf.mxu0
          %1402 = vmatprep.mubr.bf16.mxu0 0
          %1403 = vmatmul.mubr.bf16.gmra.mxu0 %v1026
          %v1404 = vpop.f32.mrf.mxu0
          %v1405 = vadd.f32 0.0, %v1404
          %v1406 = vpop.f32.mrf.mxu0
          %v1407 = vpop.f32.mrf.mxu0
          %v1408 = vadd.f32 0.0, %v1407
          %v1409 = vpop.f32.mrf.mxu0
          %1410 = vmatprep.mubr.bf16.mxu0 0
          %1411 = vmatmul.mubr.bf16.gmra.mxu0 %v1027
          %v1412 = vpop.f32.mrf.mxu0
          %v1413 = vadd.f32 0.0, %v1412
          %v1414 = vpop.f32.mrf.mxu0
          %v1415 = vpop.f32.mrf.mxu0
          %v1416 = vadd.f32 0.0, %v1415
          %v1417 = vpop.f32.mrf.mxu0
          %1418 = vmatprep.mubr.bf16.mxu0 0
          %1419 = vmatmul.mubr.bf16.gmra.mxu0 %v1028
          %v1420 = vpop.f32.mrf.mxu0
          %v1421 = vadd.f32 0.0, %v1420
          %v1422 = vpop.f32.mrf.mxu0
          %v1423 = vpop.f32.mrf.mxu0
          %v1424 = vadd.f32 0.0, %v1423
          %v1425 = vpop.f32.mrf.mxu0
          %1426 = vmatprep.mubr.bf16.mxu0 0
          %1427 = vmatmul.mubr.bf16.gmra.mxu0 %v1029
          %v1428 = vpop.f32.mrf.mxu0
          %v1429 = vadd.f32 0.0, %v1428
          %v1430 = vpop.f32.mrf.mxu0
          %v1431 = vpop.f32.mrf.mxu0
          %v1432 = vadd.f32 0.0, %v1431
          %v1433 = vpop.f32.mrf.mxu0
          %1434 = vmatprep.mubr.bf16.mxu0 0
          %1435 = vmatmul.mubr.bf16.gmra.mxu0 %v1030
          %v1436 = vpop.f32.mrf.mxu0
          %v1437 = vadd.f32 0.0, %v1436
          %v1438 = vpop.f32.mrf.mxu0
          %v1439 = vpop.f32.mrf.mxu0
          %v1440 = vadd.f32 0.0, %v1439
          %v1441 = vpop.f32.mrf.mxu0
          %1442 = vmatprep.mubr.bf16.mxu0 0
          %1443 = vmatmul.mubr.bf16.gmra.mxu0 %v1031
          %v1444 = vpop.f32.mrf.mxu0
          %v1445 = vadd.f32 0.0, %v1444
          %v1446 = vpop.f32.mrf.mxu0
          %v1447 = vpop.f32.mrf.mxu0
          %v1448 = vadd.f32 0.0, %v1447
          %v1449 = vpop.f32.mrf.mxu0
          %1450 = vmatprep.mubr.bf16.mxu0 0
          %1451 = vmatmul.mubr.bf16.gmra.mxu0 %v1032
          %v1452 = vpop.f32.mrf.mxu0
          %v1453 = vadd.f32 0.0, %v1452
          %v1454 = vpop.f32.mrf.mxu0
          %v1455 = vpop.f32.mrf.mxu0
          %v1456 = vadd.f32 0.0, %v1455
          %v1457 = vpop.f32.mrf.mxu0
          %1458 = vmatprep.mubr.bf16.mxu0 0
          %1459 = vmatmul.mubr.bf16.gmra.mxu0 %v1033
          %v1460 = vpop.f32.mrf.mxu0
          %v1461 = vadd.f32 0.0, %v1460
          %v1462 = vpop.f32.mrf.mxu0
          %v1463 = vpop.f32.mrf.mxu0
          %v1464 = vadd.f32 0.0, %v1463
          %v1465 = vpop.f32.mrf.mxu0
          %1466 = vmatprep.mubr.bf16.mxu0 0
          %1467 = vmatmul.mubr.bf16.gmra.mxu0 %v1034
          %v1468 = vpop.f32.mrf.mxu0
          %v1469 = vadd.f32 0.0, %v1468
          %v1470 = vpop.f32.mrf.mxu0
          %v1471 = vpop.f32.mrf.mxu0
          %v1472 = vadd.f32 0.0, %v1471
          %v1473 = vpop.f32.mrf.mxu0
          %1474 = vmatprep.mubr.bf16.mxu0 0
          %1475 = vmatmul.mubr.bf16.gmra.mxu0 %v1035
          %v1476 = vpop.f32.mrf.mxu0
          %v1477 = vadd.f32 0.0, %v1476
          %v1478 = vpop.f32.mrf.mxu0
          %v1479 = vpop.f32.mrf.mxu0
          %v1480 = vadd.f32 0.0, %v1479
          %v1481 = vpop.f32.mrf.mxu0
          %1482 = vmatprep.mubr.bf16.mxu0 0
          %1483 = vmatmul.mubr.bf16.gmra.mxu0 %v1036
          %v1484 = vpop.f32.mrf.mxu0
          %v1485 = vadd.f32 0.0, %v1484
          %v1486 = vpop.f32.mrf.mxu0
          %v1487 = vpop.f32.mrf.mxu0
          %v1488 = vadd.f32 0.0, %v1487
          %v1489 = vpop.f32.mrf.mxu0
          %1490 = vmatprep.mubr.bf16.mxu0 0
          %1491 = vmatmul.mubr.bf16.gmra.mxu0 %v1037
          %v1492 = vpop.f32.mrf.mxu0
          %v1493 = vadd.f32 0.0, %v1492
          %v1494 = vpop.f32.mrf.mxu0
          %v1495 = vpop.f32.mrf.mxu0
          %v1496 = vadd.f32 0.0, %v1495
          %v1497 = vpop.f32.mrf.mxu0
          %1498 = vmatprep.mubr.bf16.mxu0 0
          %1499 = vmatmul.mubr.bf16.gmra.mxu0 %v1038
          %v1500 = vpop.f32.mrf.mxu0
          %v1501 = vadd.f32 0.0, %v1500
          %v1502 = vpop.f32.mrf.mxu0
          %v1503 = vpop.f32.mrf.mxu0
          %v1504 = vadd.f32 0.0, %v1503
          %v1505 = vpop.f32.mrf.mxu0
          %1506 = vmatprep.mubr.bf16.mxu0 0
          %1507 = vmatmul.mubr.bf16.gmra.mxu0 %v1039
          %v1508 = vpop.f32.mrf.mxu0
          %v1509 = vadd.f32 0.0, %v1508
          %v1510 = vpop.f32.mrf.mxu0
          %v1511 = vpop.f32.mrf.mxu0
          %v1512 = vadd.f32 0.0, %v1511
          %v1513 = vpop.f32.mrf.mxu0
          %1514 = vmatprep.mubr.bf16.mxu0 0
          %1515 = vmatmul.mubr.bf16.gmra.mxu0 %v1040
          %v1516 = vpop.f32.mrf.mxu0
          %v1517 = vadd.f32 0.0, %v1516
          %v1518 = vpop.f32.mrf.mxu0
          %v1519 = vpop.f32.mrf.mxu0
          %v1520 = vadd.f32 0.0, %v1519
          %v1521 = vpop.f32.mrf.mxu0
          %1522 = vdwg.mxu0
          %v1523 = vpack.c.bf16 %v1208, %v1204
          %v1524 = vpack.c.bf16 %v1218, %v1214
          %v1525 = vpack.c.bf16 %v1228, %v1224
          %v1526 = vpack.c.bf16 %v1238, %v1234
          %v1527 = vpack.c.bf16 %v1248, %v1244
          %v1528 = vpack.c.bf16 %v1258, %v1254
          %v1529 = vpack.c.bf16 %v1268, %v1264
          %v1530 = vpack.c.bf16 %v1278, %v1274
          %v1531 = vpack.c.bf16 %v1288, %v1284
          %v1532 = vpack.c.bf16 %v1298, %v1294
          %v1533 = vpack.c.bf16 %v1308, %v1304
          %v1534 = vpack.c.bf16 %v1318, %v1314
          %v1535 = vpack.c.bf16 %v1328, %v1324
          %v1536 = vpack.c.bf16 %v1338, %v1334
          %v1537 = vpack.c.bf16 %v1348, %v1344
          %v1538 = vpack.c.bf16 %v1358, %v1354
          %v1555 = vunpack.c.l.b16 %v1523
          %v1556 = vunpack.c.h.b16 %v1523
          %v1557 = vunpack.c.l.b16 %v1524
          %v1558 = vunpack.c.h.b16 %v1524
          %v1559 = vunpack.c.l.b16 %v1525
          %v1560 = vunpack.c.h.b16 %v1525
          %v1561 = vunpack.c.l.b16 %v1526
          %v1562 = vunpack.c.h.b16 %v1526
          %v1563 = vunpack.c.l.b16 %v1527
          %v1564 = vunpack.c.h.b16 %v1527
          %v1565 = vunpack.c.l.b16 %v1528
          %v1566 = vunpack.c.h.b16 %v1528
          %v1567 = vunpack.c.l.b16 %v1529
          %v1568 = vunpack.c.h.b16 %v1529
          %v1569 = vunpack.c.l.b16 %v1530
          %v1570 = vunpack.c.h.b16 %v1530
          %v1571 = vunpack.c.l.b16 %v1531
          %v1572 = vunpack.c.h.b16 %v1531
          %v1573 = vunpack.c.l.b16 %v1532
          %v1574 = vunpack.c.h.b16 %v1532
          %v1575 = vunpack.c.l.b16 %v1533
          %v1576 = vunpack.c.h.b16 %v1533
          %v1577 = vunpack.c.l.b16 %v1534
          %v1578 = vunpack.c.h.b16 %v1534
          %v1579 = vunpack.c.l.b16 %v1535
          %v1580 = vunpack.c.h.b16 %v1535
          %v1581 = vunpack.c.l.b16 %v1536
          %v1582 = vunpack.c.h.b16 %v1536
          %v1583 = vunpack.c.l.b16 %v1537
          %v1584 = vunpack.c.h.b16 %v1537
          %v1585 = vunpack.c.l.b16 %v1538
          %v1586 = vunpack.c.h.b16 %v1538
          %v1587 = vpack.c.b16 %v1555, %v1555
          %v1588 = vpack.c.b16 %v1556, %v1556
          %v1589 = vpack.c.b16 %v1557, %v1557
          %v1590 = vpack.c.b16 %v1558, %v1558
          %v1591 = vpack.c.b16 %v1559, %v1559
          %v1592 = vpack.c.b16 %v1560, %v1560
          %v1593 = vpack.c.b16 %v1561, %v1561
          %v1594 = vpack.c.b16 %v1562, %v1562
          %v1595 = vpack.c.b16 %v1563, %v1563
          %v1596 = vpack.c.b16 %v1564, %v1564
          %v1597 = vpack.c.b16 %v1565, %v1565
          %v1598 = vpack.c.b16 %v1566, %v1566
          %v1599 = vpack.c.b16 %v1567, %v1567
          %v1600 = vpack.c.b16 %v1568, %v1568
          %v1601 = vpack.c.b16 %v1569, %v1569
          %v1602 = vpack.c.b16 %v1570, %v1570
          %v1603 = vpack.c.b16 %v1571, %v1571
          %v1604 = vpack.c.b16 %v1572, %v1572
          %v1605 = vpack.c.b16 %v1573, %v1573
          %v1606 = vpack.c.b16 %v1574, %v1574
          %v1607 = vpack.c.b16 %v1575, %v1575
          %v1608 = vpack.c.b16 %v1576, %v1576
          %v1609 = vpack.c.b16 %v1577, %v1577
          %v1610 = vpack.c.b16 %v1578, %v1578
          %v1611 = vpack.c.b16 %v1579, %v1579
          %v1612 = vpack.c.b16 %v1580, %v1580
          %v1613 = vpack.c.b16 %v1581, %v1581
          %v1614 = vpack.c.b16 %v1582, %v1582
          %v1615 = vpack.c.b16 %v1583, %v1583
          %v1616 = vpack.c.b16 %v1584, %v1584
          %v1617 = vpack.c.b16 %v1585, %v1585
          %v1618 = vpack.c.b16 %v1586, %v1586
          %1651 = vst [vmem:[#allocation2] sm:$0xf] %v1587
          %1652 = vst [vmem:[#allocation2 + $0x4] sm:$0xf] %v1588
          %1653 = vst [vmem:[#allocation2 + $0x8] sm:$0xf] %v1589
          %1654 = vst [vmem:[#allocation2 + $0xc] sm:$0xf] %v1590
          %1655 = vst [vmem:[#allocation2 + $0x10] sm:$0xf] %v1591
          %1656 = vst [vmem:[#allocation2 + $0x14] sm:$0xf] %v1592
          %1657 = vst [vmem:[#allocation2 + $0x18] sm:$0xf] %v1593
          %1658 = vst [vmem:[#allocation2 + $0x1c] sm:$0xf] %v1594
          %1659 = vst [vmem:[#allocation2 + $0x20] sm:$0xf] %v1595
          %1660 = vst [vmem:[#allocation2 + $0x24] sm:$0xf] %v1596
          %1661 = vst [vmem:[#allocation2 + $0x28] sm:$0xf] %v1597
          %1662 = vst [vmem:[#allocation2 + $0x2c] sm:$0xf] %v1598
          %1663 = vst [vmem:[#allocation2 + $0x30] sm:$0xf] %v1599
          %1664 = vst [vmem:[#allocation2 + $0x34] sm:$0xf] %v1600
          %1665 = vst [vmem:[#allocation2 + $0x38] sm:$0xf] %v1601
          %1666 = vst [vmem:[#allocation2 + $0x3c] sm:$0xf] %v1602
          %1667 = vst [vmem:[#allocation2 + $0x40] sm:$0xf] %v1603
          %1668 = vst [vmem:[#allocation2 + $0x44] sm:$0xf] %v1604
          %1669 = vst [vmem:[#allocation2 + $0x48] sm:$0xf] %v1605
          %1670 = vst [vmem:[#allocation2 + $0x4c] sm:$0xf] %v1606
          %1671 = vst [vmem:[#allocation2 + $0x50] sm:$0xf] %v1607
          %1672 = vst [vmem:[#allocation2 + $0x54] sm:$0xf] %v1608
          %1673 = vst [vmem:[#allocation2 + $0x58] sm:$0xf] %v1609
          %1674 = vst [vmem:[#allocation2 + $0x5c] sm:$0xf] %v1610
          %1675 = vst [vmem:[#allocation2 + $0x60] sm:$0xf] %v1611
          %1676 = vst [vmem:[#allocation2 + $0x64] sm:$0xf] %v1612
          %1677 = vst [vmem:[#allocation2 + $0x68] sm:$0xf] %v1613
          %1678 = vst [vmem:[#allocation2 + $0x6c] sm:$0xf] %v1614
          %1679 = vst [vmem:[#allocation2 + $0x70] sm:$0xf] %v1615
          %1680 = vst [vmem:[#allocation2 + $0x74] sm:$0xf] %v1616
          %1681 = vst [vmem:[#allocation2 + $0x78] sm:$0xf] %v1617
          %1682 = vst [vmem:[#allocation2 + $0x7c] sm:$0xf] %v1618
          %v1683 = vpack.c.bf16 %v1210, %v1206
          %v1684 = vpack.c.bf16 %v1220, %v1216
          %v1685 = vpack.c.bf16 %v1230, %v1226
          %v1686 = vpack.c.bf16 %v1240, %v1236
          %v1687 = vpack.c.bf16 %v1250, %v1246
          %v1688 = vpack.c.bf16 %v1260, %v1256
          %v1689 = vpack.c.bf16 %v1270, %v1266
          %v1690 = vpack.c.bf16 %v1280, %v1276
          %v1691 = vpack.c.bf16 %v1290, %v1286
          %v1692 = vpack.c.bf16 %v1300, %v1296
          %v1693 = vpack.c.bf16 %v1310, %v1306
          %v1694 = vpack.c.bf16 %v1320, %v1316
          %v1695 = vpack.c.bf16 %v1330, %v1326
          %v1696 = vpack.c.bf16 %v1340, %v1336
          %v1697 = vpack.c.bf16 %v1350, %v1346
          %v1698 = vpack.c.bf16 %v1360, %v1356
          %v1715 = vunpack.c.l.b16 %v1683
          %v1716 = vunpack.c.h.b16 %v1683
          %v1717 = vunpack.c.l.b16 %v1684
          %v1718 = vunpack.c.h.b16 %v1684
          %v1719 = vunpack.c.l.b16 %v1685
          %v1720 = vunpack.c.h.b16 %v1685
          %v1721 = vunpack.c.l.b16 %v1686
          %v1722 = vunpack.c.h.b16 %v1686
          %v1723 = vunpack.c.l.b16 %v1687
          %v1724 = vunpack.c.h.b16 %v1687
          %v1725 = vunpack.c.l.b16 %v1688
          %v1726 = vunpack.c.h.b16 %v1688
          %v1727 = vunpack.c.l.b16 %v1689
          %v1728 = vunpack.c.h.b16 %v1689
          %v1729 = vunpack.c.l.b16 %v1690
          %v1730 = vunpack.c.h.b16 %v1690
          %v1731 = vunpack.c.l.b16 %v1691
          %v1732 = vunpack.c.h.b16 %v1691
          %v1733 = vunpack.c.l.b16 %v1692
          %v1734 = vunpack.c.h.b16 %v1692
          %v1735 = vunpack.c.l.b16 %v1693
          %v1736 = vunpack.c.h.b16 %v1693
          %v1737 = vunpack.c.l.b16 %v1694
          %v1738 = vunpack.c.h.b16 %v1694
          %v1739 = vunpack.c.l.b16 %v1695
          %v1740 = vunpack.c.h.b16 %v1695
          %v1741 = vunpack.c.l.b16 %v1696
          %v1742 = vunpack.c.h.b16 %v1696
          %v1743 = vunpack.c.l.b16 %v1697
          %v1744 = vunpack.c.h.b16 %v1697
          %v1745 = vunpack.c.l.b16 %v1698
          %v1746 = vunpack.c.h.b16 %v1698
          %v1747 = vpack.c.b16 %v1715, %v1715
          %v1748 = vpack.c.b16 %v1716, %v1716
          %v1749 = vpack.c.b16 %v1717, %v1717
          %v1750 = vpack.c.b16 %v1718, %v1718
          %v1751 = vpack.c.b16 %v1719, %v1719
          %v1752 = vpack.c.b16 %v1720, %v1720
          %v1753 = vpack.c.b16 %v1721, %v1721
          %v1754 = vpack.c.b16 %v1722, %v1722
          %v1755 = vpack.c.b16 %v1723, %v1723
          %v1756 = vpack.c.b16 %v1724, %v1724
          %v1757 = vpack.c.b16 %v1725, %v1725
          %v1758 = vpack.c.b16 %v1726, %v1726
          %v1759 = vpack.c.b16 %v1727, %v1727
          %v1760 = vpack.c.b16 %v1728, %v1728
          %v1761 = vpack.c.b16 %v1729, %v1729
          %v1762 = vpack.c.b16 %v1730, %v1730
          %v1763 = vpack.c.b16 %v1731, %v1731
          %v1764 = vpack.c.b16 %v1732, %v1732
          %v1765 = vpack.c.b16 %v1733, %v1733
          %v1766 = vpack.c.b16 %v1734, %v1734
          %v1767 = vpack.c.b16 %v1735, %v1735
          %v1768 = vpack.c.b16 %v1736, %v1736
          %v1769 = vpack.c.b16 %v1737, %v1737
          %v1770 = vpack.c.b16 %v1738, %v1738
          %v1771 = vpack.c.b16 %v1739, %v1739
          %v1772 = vpack.c.b16 %v1740, %v1740
          %v1773 = vpack.c.b16 %v1741, %v1741
          %v1774 = vpack.c.b16 %v1742, %v1742
          %v1775 = vpack.c.b16 %v1743, %v1743
          %v1776 = vpack.c.b16 %v1744, %v1744
          %v1777 = vpack.c.b16 %v1745, %v1745
          %v1778 = vpack.c.b16 %v1746, %v1746
          %1811 = vst [vmem:[#allocation3] sm:$0xf] %v1747
          %1812 = vst [vmem:[#allocation3 + $0x4] sm:$0xf] %v1748
          %1813 = vst [vmem:[#allocation3 + $0x8] sm:$0xf] %v1749
          %1814 = vst [vmem:[#allocation3 + $0xc] sm:$0xf] %v1750
          %1815 = vst [vmem:[#allocation3 + $0x10] sm:$0xf] %v1751
          %1816 = vst [vmem:[#allocation3 + $0x14] sm:$0xf] %v1752
          %1817 = vst [vmem:[#allocation3 + $0x18] sm:$0xf] %v1753
          %1818 = vst [vmem:[#allocation3 + $0x1c] sm:$0xf] %v1754
          %1819 = vst [vmem:[#allocation3 + $0x20] sm:$0xf] %v1755
          %1820 = vst [vmem:[#allocation3 + $0x24] sm:$0xf] %v1756
          %1821 = vst [vmem:[#allocation3 + $0x28] sm:$0xf] %v1757
          %1822 = vst [vmem:[#allocation3 + $0x2c] sm:$0xf] %v1758
          %1823 = vst [vmem:[#allocation3 + $0x30] sm:$0xf] %v1759
          %1824 = vst [vmem:[#allocation3 + $0x34] sm:$0xf] %v1760
          %1825 = vst [vmem:[#allocation3 + $0x38] sm:$0xf] %v1761
          %1826 = vst [vmem:[#allocation3 + $0x3c] sm:$0xf] %v1762
          %1827 = vst [vmem:[#allocation3 + $0x40] sm:$0xf] %v1763
          %1828 = vst [vmem:[#allocation3 + $0x44] sm:$0xf] %v1764
          %1829 = vst [vmem:[#allocation3 + $0x48] sm:$0xf] %v1765
          %1830 = vst [vmem:[#allocation3 + $0x4c] sm:$0xf] %v1766
          %1831 = vst [vmem:[#allocation3 + $0x50] sm:$0xf] %v1767
          %1832 = vst [vmem:[#allocation3 + $0x54] sm:$0xf] %v1768
          %1833 = vst [vmem:[#allocation3 + $0x58] sm:$0xf] %v1769
          %1834 = vst [vmem:[#allocation3 + $0x5c] sm:$0xf] %v1770
          %1835 = vst [vmem:[#allocation3 + $0x60] sm:$0xf] %v1771
          %1836 = vst [vmem:[#allocation3 + $0x64] sm:$0xf] %v1772
          %1837 = vst [vmem:[#allocation3 + $0x68] sm:$0xf] %v1773
          %1838 = vst [vmem:[#allocation3 + $0x6c] sm:$0xf] %v1774
          %1839 = vst [vmem:[#allocation3 + $0x70] sm:$0xf] %v1775
          %1840 = vst [vmem:[#allocation3 + $0x74] sm:$0xf] %v1776
          %1841 = vst [vmem:[#allocation3 + $0x78] sm:$0xf] %v1777
          %1842 = vst [vmem:[#allocation3 + $0x7c] sm:$0xf] %v1778
          %v1843 = vpack.c.bf16 %v1400, %v1397
          %v1844 = vpack.c.bf16 %v1408, %v1405
          %v1845 = vpack.c.bf16 %v1416, %v1413
          %v1846 = vpack.c.bf16 %v1424, %v1421
          %v1847 = vpack.c.bf16 %v1432, %v1429
          %v1848 = vpack.c.bf16 %v1440, %v1437
          %v1849 = vpack.c.bf16 %v1448, %v1445
          %v1850 = vpack.c.bf16 %v1456, %v1453
          %v1851 = vpack.c.bf16 %v1464, %v1461
          %v1852 = vpack.c.bf16 %v1472, %v1469
          %v1853 = vpack.c.bf16 %v1480, %v1477
          %v1854 = vpack.c.bf16 %v1488, %v1485
          %v1855 = vpack.c.bf16 %v1496, %v1493
          %v1856 = vpack.c.bf16 %v1504, %v1501
          %v1857 = vpack.c.bf16 %v1512, %v1509
          %v1858 = vpack.c.bf16 %v1520, %v1517
          %v1875 = vunpack.c.l.b16 %v1843
          %v1876 = vunpack.c.h.b16 %v1843
          %v1877 = vunpack.c.l.b16 %v1844
          %v1878 = vunpack.c.h.b16 %v1844
          %v1879 = vunpack.c.l.b16 %v1845
          %v1880 = vunpack.c.h.b16 %v1845
          %v1881 = vunpack.c.l.b16 %v1846
          %v1882 = vunpack.c.h.b16 %v1846
          %v1883 = vunpack.c.l.b16 %v1847
          %v1884 = vunpack.c.h.b16 %v1847
          %v1885 = vunpack.c.l.b16 %v1848
          %v1886 = vunpack.c.h.b16 %v1848
          %v1887 = vunpack.c.l.b16 %v1849
          %v1888 = vunpack.c.h.b16 %v1849
          %v1889 = vunpack.c.l.b16 %v1850
          %v1890 = vunpack.c.h.b16 %v1850
          %v1891 = vunpack.c.l.b16 %v1851
          %v1892 = vunpack.c.h.b16 %v1851
          %v1893 = vunpack.c.l.b16 %v1852
          %v1894 = vunpack.c.h.b16 %v1852
          %v1895 = vunpack.c.l.b16 %v1853
          %v1896 = vunpack.c.h.b16 %v1853
          %v1897 = vunpack.c.l.b16 %v1854
          %v1898 = vunpack.c.h.b16 %v1854
          %v1899 = vunpack.c.l.b16 %v1855
          %v1900 = vunpack.c.h.b16 %v1855
          %v1901 = vunpack.c.l.b16 %v1856
          %v1902 = vunpack.c.h.b16 %v1856
          %v1903 = vunpack.c.l.b16 %v1857
          %v1904 = vunpack.c.h.b16 %v1857
          %v1905 = vunpack.c.l.b16 %v1858
          %v1906 = vunpack.c.h.b16 %v1858
          %v1907 = vpack.c.b16 %v1875, %v1875
          %v1908 = vpack.c.b16 %v1876, %v1876
          %v1909 = vpack.c.b16 %v1877, %v1877
          %v1910 = vpack.c.b16 %v1878, %v1878
          %v1911 = vpack.c.b16 %v1879, %v1879
          %v1912 = vpack.c.b16 %v1880, %v1880
          %v1913 = vpack.c.b16 %v1881, %v1881
          %v1914 = vpack.c.b16 %v1882, %v1882
          %v1915 = vpack.c.b16 %v1883, %v1883
          %v1916 = vpack.c.b16 %v1884, %v1884
          %v1917 = vpack.c.b16 %v1885, %v1885
          %v1918 = vpack.c.b16 %v1886, %v1886
          %v1919 = vpack.c.b16 %v1887, %v1887
          %v1920 = vpack.c.b16 %v1888, %v1888
          %v1921 = vpack.c.b16 %v1889, %v1889
          %v1922 = vpack.c.b16 %v1890, %v1890
          %v1923 = vpack.c.b16 %v1891, %v1891
          %v1924 = vpack.c.b16 %v1892, %v1892
          %v1925 = vpack.c.b16 %v1893, %v1893
          %v1926 = vpack.c.b16 %v1894, %v1894
          %v1927 = vpack.c.b16 %v1895, %v1895
          %v1928 = vpack.c.b16 %v1896, %v1896
          %v1929 = vpack.c.b16 %v1897, %v1897
          %v1930 = vpack.c.b16 %v1898, %v1898
          %v1931 = vpack.c.b16 %v1899, %v1899
          %v1932 = vpack.c.b16 %v1900, %v1900
          %v1933 = vpack.c.b16 %v1901, %v1901
          %v1934 = vpack.c.b16 %v1902, %v1902
          %v1935 = vpack.c.b16 %v1903, %v1903
          %v1936 = vpack.c.b16 %v1904, %v1904
          %v1937 = vpack.c.b16 %v1905, %v1905
          %v1938 = vpack.c.b16 %v1906, %v1906
          %1971 = vst [vmem:[#allocation4] sm:$0xf] %v1907
          %1972 = vst [vmem:[#allocation4 + $0x4] sm:$0xf] %v1908
          %1973 = vst [vmem:[#allocation4 + $0x8] sm:$0xf] %v1909
          %1974 = vst [vmem:[#allocation4 + $0xc] sm:$0xf] %v1910
          %1975 = vst [vmem:[#allocation4 + $0x10] sm:$0xf] %v1911
          %1976 = vst [vmem:[#allocation4 + $0x14] sm:$0xf] %v1912
          %1977 = vst [vmem:[#allocation4 + $0x18] sm:$0xf] %v1913
          %1978 = vst [vmem:[#allocation4 + $0x1c] sm:$0xf] %v1914
          %1979 = vst [vmem:[#allocation4 + $0x20] sm:$0xf] %v1915
          %1980 = vst [vmem:[#allocation4 + $0x24] sm:$0xf] %v1916
          %1981 = vst [vmem:[#allocation4 + $0x28] sm:$0xf] %v1917
          %1982 = vst [vmem:[#allocation4 + $0x2c] sm:$0xf] %v1918
          %1983 = vst [vmem:[#allocation4 + $0x30] sm:$0xf] %v1919
          %1984 = vst [vmem:[#allocation4 + $0x34] sm:$0xf] %v1920
          %1985 = vst [vmem:[#allocation4 + $0x38] sm:$0xf] %v1921
          %1986 = vst [vmem:[#allocation4 + $0x3c] sm:$0xf] %v1922
          %1987 = vst [vmem:[#allocation4 + $0x40] sm:$0xf] %v1923
          %1988 = vst [vmem:[#allocation4 + $0x44] sm:$0xf] %v1924
          %1989 = vst [vmem:[#allocation4 + $0x48] sm:$0xf] %v1925
          %1990 = vst [vmem:[#allocation4 + $0x4c] sm:$0xf] %v1926
          %1991 = vst [vmem:[#allocation4 + $0x50] sm:$0xf] %v1927
          %1992 = vst [vmem:[#allocation4 + $0x54] sm:$0xf] %v1928
          %1993 = vst [vmem:[#allocation4 + $0x58] sm:$0xf] %v1929
          %1994 = vst [vmem:[#allocation4 + $0x5c] sm:$0xf] %v1930
          %1995 = vst [vmem:[#allocation4 + $0x60] sm:$0xf] %v1931
          %1996 = vst [vmem:[#allocation4 + $0x64] sm:$0xf] %v1932
          %1997 = vst [vmem:[#allocation4 + $0x68] sm:$0xf] %v1933
          %1998 = vst [vmem:[#allocation4 + $0x6c] sm:$0xf] %v1934
          %1999 = vst [vmem:[#allocation4 + $0x70] sm:$0xf] %v1935
          %2000 = vst [vmem:[#allocation4 + $0x74] sm:$0xf] %v1936
          %2001 = vst [vmem:[#allocation4 + $0x78] sm:$0xf] %v1937
          %2002 = vst [vmem:[#allocation4 + $0x7c] sm:$0xf] %v1938
        $region80: #{encoder_forward.1} parent=67 // pred_fallthru
          _
        %v2003 = vld [vmem:[%s485] sm:$0xff]
        %v2004 = vld [vmem:[%s485 + $0x8] sm:$0xff]
        %v2005 = vld [vmem:[%s485 + $0x10] sm:$0xff]
        %v2006 = vld [vmem:[%s485 + $0x18] sm:$0xff]
        %v2007 = vld [vmem:[%s485 + $0x20] sm:$0xff]
        %v2008 = vld [vmem:[%s485 + $0x28] sm:$0xff]
        %v2009 = vld [vmem:[%s485 + $0x30] sm:$0xff]
        %v2010 = vld [vmem:[%s485 + $0x38] sm:$0xff]
        %v2011 = vld [vmem:[%s485 + $0x40] sm:$0xff]
        %v2012 = vld [vmem:[%s485 + $0x48] sm:$0xff]
        %v2013 = vld [vmem:[%s485 + $0x50] sm:$0xff]
        %v2014 = vld [vmem:[%s485 + $0x58] sm:$0xff]
        %v2015 = vld [vmem:[%s485 + $0x60] sm:$0xff]
        %v2016 = vld [vmem:[%s485 + $0x68] sm:$0xff]
        %v2017 = vld [vmem:[%s485 + $0x70] sm:$0xff]
        %v2018 = vld [vmem:[%s485 + $0x78] sm:$0xff]
        %s2019 = smul.u32 %s33, 128
        %s2020 = sshra.s32 %s2019, 3
        %s2021 = sand.u32 %s2019, 7
        %s2022 = smul.addr %s2020, 4
        %s2023 = scalar_lea.vmem [#allocation2], %s2022
        %v2024 = vld [vmem:[%s2023] sm:$0xf]
        %v2025 = vld [vmem:[%s2023 + $0x4] sm:$0xf]
        %v2026 = vld [vmem:[%s2023 + $0x8] sm:$0xf]
        %v2027 = vld [vmem:[%s2023 + $0xc] sm:$0xf]
        %v2028 = vld [vmem:[%s2023 + $0x10] sm:$0xf]
        %v2029 = vld [vmem:[%s2023 + $0x14] sm:$0xf]
        %v2030 = vld [vmem:[%s2023 + $0x18] sm:$0xf]
        %v2031 = vld [vmem:[%s2023 + $0x1c] sm:$0xf]
        %v2032 = vld [vmem:[%s2023 + $0x20] sm:$0xf]
        %v2033 = vld [vmem:[%s2023 + $0x24] sm:$0xf]
        %v2034 = vld [vmem:[%s2023 + $0x28] sm:$0xf]
        %v2035 = vld [vmem:[%s2023 + $0x2c] sm:$0xf]
        %v2036 = vld [vmem:[%s2023 + $0x30] sm:$0xf]
        %v2037 = vld [vmem:[%s2023 + $0x34] sm:$0xf]
        %v2038 = vld [vmem:[%s2023 + $0x38] sm:$0xf]
        %v2039 = vld [vmem:[%s2023 + $0x3c] sm:$0xf]
        loop: start=0, step=1, limit=2
        $region81: #{encoder_forward.1} parent=67 // loop_pre_header
          _
        $region82: #{encoder_forward.1} parent=67 // loop_header
          %s2041 = sphi 0, %s2045
          %p2042 = scmp.ge.s32.totalorder %s2041, 2
          %v2046 = vphi -1e+30, %v2358
          %v2047 = vphi -1e+30, %v2359
          %v2048 = vphi -1e+30, %v2360
          %v2049 = vphi -1e+30, %v2361
          %v2050 = vphi -1e+30, %v2362
          %v2051 = vphi -1e+30, %v2363
          %v2052 = vphi -1e+30, %v2364
          %v2053 = vphi -1e+30, %v2365
          %v2054 = vphi -1e+30, %v2366
          %v2055 = vphi -1e+30, %v2367
          %v2056 = vphi -1e+30, %v2368
          %v2057 = vphi -1e+30, %v2369
          %v2058 = vphi -1e+30, %v2370
          %v2059 = vphi -1e+30, %v2371
          %v2060 = vphi -1e+30, %v2372
          %v2061 = vphi -1e+30, %v2373
          %v2062 = vphi 0.0, %v2518
          %v2063 = vphi 0.0, %v2519
          %v2064 = vphi 0.0, %v2520
          %v2065 = vphi 0.0, %v2521
          %v2066 = vphi 0.0, %v2522
          %v2067 = vphi 0.0, %v2523
          %v2068 = vphi 0.0, %v2524
          %v2069 = vphi 0.0, %v2525
          %v2070 = vphi 0.0, %v2526
          %v2071 = vphi 0.0, %v2527
          %v2072 = vphi 0.0, %v2528
          %v2073 = vphi 0.0, %v2529
          %v2074 = vphi 0.0, %v2530
          %v2075 = vphi 0.0, %v2531
          %v2076 = vphi 0.0, %v2532
          %v2077 = vphi 0.0, %v2533
          %v2078 = vphi 0.0, %v2703
          %v2079 = vphi 0.0, %v2704
          %v2080 = vphi 0.0, %v2705
          %v2081 = vphi 0.0, %v2706
          %v2082 = vphi 0.0, %v2707
          %v2083 = vphi 0.0, %v2708
          %v2084 = vphi 0.0, %v2709
          %v2085 = vphi 0.0, %v2710
          %v2086 = vphi 0.0, %v2711
          %v2087 = vphi 0.0, %v2712
          %v2088 = vphi 0.0, %v2713
          %v2089 = vphi 0.0, %v2714
          %v2090 = vphi 0.0, %v2715
          %v2091 = vphi 0.0, %v2716
          %v2092 = vphi 0.0, %v2717
          %v2093 = vphi 0.0, %v2718
        $region83: #{encoder_forward.1} parent=67 // loop_header_branch
          %2044 = sbr.rel (%p2042) target = $region87
        $region84: #{encoder_forward.1} parent=67 // loop_body
          %s2094 = smul.u32 %s2041, 128
          %s2095 = sshra.s32 %s2094, 3
          %s2096 = sand.u32 %s2094, 7
          %s2097 = smul.addr %s2095, 4
          %s2098 = scalar_lea.vmem [#allocation3], %s2097
          %v2099 = vld [vmem:[%s2098] sm:$0xf]
          %v2100 = vld [vmem:[%s2098 + $0x4] sm:$0xf]
          %v2101 = vld [vmem:[%s2098 + $0x8] sm:$0xf]
          %v2102 = vld [vmem:[%s2098 + $0xc] sm:$0xf]
          %v2103 = vld [vmem:[%s2098 + $0x10] sm:$0xf]
          %v2104 = vld [vmem:[%s2098 + $0x14] sm:$0xf]
          %v2105 = vld [vmem:[%s2098 + $0x18] sm:$0xf]
          %v2106 = vld [vmem:[%s2098 + $0x1c] sm:$0xf]
          %v2107 = vld [vmem:[%s2098 + $0x20] sm:$0xf]
          %v2108 = vld [vmem:[%s2098 + $0x24] sm:$0xf]
          %v2109 = vld [vmem:[%s2098 + $0x28] sm:$0xf]
          %v2110 = vld [vmem:[%s2098 + $0x2c] sm:$0xf]
          %v2111 = vld [vmem:[%s2098 + $0x30] sm:$0xf]
          %v2112 = vld [vmem:[%s2098 + $0x34] sm:$0xf]
          %v2113 = vld [vmem:[%s2098 + $0x38] sm:$0xf]
          %v2114 = vld [vmem:[%s2098 + $0x3c] sm:$0xf]
          %s2115 = smul.addr %s2095, 4
          %s2116 = scalar_lea.vmem [#allocation4], %s2115
          %v2117 = vld [vmem:[%s2116] sm:$0xf]
          %v2118 = vld [vmem:[%s2116 + $0x4] sm:$0xf]
          %v2119 = vld [vmem:[%s2116 + $0x8] sm:$0xf]
          %v2120 = vld [vmem:[%s2116 + $0xc] sm:$0xf]
          %v2121 = vld [vmem:[%s2116 + $0x10] sm:$0xf]
          %v2122 = vld [vmem:[%s2116 + $0x14] sm:$0xf]
          %v2123 = vld [vmem:[%s2116 + $0x18] sm:$0xf]
          %v2124 = vld [vmem:[%s2116 + $0x1c] sm:$0xf]
          %v2125 = vld [vmem:[%s2116 + $0x20] sm:$0xf]
          %v2126 = vld [vmem:[%s2116 + $0x24] sm:$0xf]
          %v2127 = vld [vmem:[%s2116 + $0x28] sm:$0xf]
          %v2128 = vld [vmem:[%s2116 + $0x2c] sm:$0xf]
          %v2129 = vld [vmem:[%s2116 + $0x30] sm:$0xf]
          %v2130 = vld [vmem:[%s2116 + $0x34] sm:$0xf]
          %v2131 = vld [vmem:[%s2116 + $0x38] sm:$0xf]
          %v2132 = vld [vmem:[%s2116 + $0x3c] sm:$0xf]
          %v2149 = vunpack.c.l.b16 %v2024
          %v2150 = vunpack.c.l.b16 %v2025
          %v2151 = vunpack.c.l.b16 %v2026
          %v2152 = vunpack.c.l.b16 %v2027
          %v2153 = vunpack.c.l.b16 %v2028
          %v2154 = vunpack.c.l.b16 %v2029
          %v2155 = vunpack.c.l.b16 %v2030
          %v2156 = vunpack.c.l.b16 %v2031
          %v2157 = vunpack.c.l.b16 %v2032
          %v2158 = vunpack.c.l.b16 %v2033
          %v2159 = vunpack.c.l.b16 %v2034
          %v2160 = vunpack.c.l.b16 %v2035
          %v2161 = vunpack.c.l.b16 %v2036
          %v2162 = vunpack.c.l.b16 %v2037
          %v2163 = vunpack.c.l.b16 %v2038
          %v2164 = vunpack.c.l.b16 %v2039
          %v2165 = vpack.c.b16 %v2150, %v2149
          %v2166 = vpack.c.b16 %v2152, %v2151
          %v2167 = vpack.c.b16 %v2154, %v2153
          %v2168 = vpack.c.b16 %v2156, %v2155
          %v2169 = vpack.c.b16 %v2158, %v2157
          %v2170 = vpack.c.b16 %v2160, %v2159
          %v2171 = vpack.c.b16 %v2162, %v2161
          %v2172 = vpack.c.b16 %v2164, %v2163
          %v2197 = vunpack.c.l.b16 %v2099
          %v2198 = vunpack.c.l.b16 %v2100
          %v2199 = vunpack.c.l.b16 %v2101
          %v2200 = vunpack.c.l.b16 %v2102
          %v2201 = vunpack.c.l.b16 %v2103
          %v2202 = vunpack.c.l.b16 %v2104
          %v2203 = vunpack.c.l.b16 %v2105
          %v2204 = vunpack.c.l.b16 %v2106
          %v2205 = vunpack.c.l.b16 %v2107
          %v2206 = vunpack.c.l.b16 %v2108
          %v2207 = vunpack.c.l.b16 %v2109
          %v2208 = vunpack.c.l.b16 %v2110
          %v2209 = vunpack.c.l.b16 %v2111
          %v2210 = vunpack.c.l.b16 %v2112
          %v2211 = vunpack.c.l.b16 %v2113
          %v2212 = vunpack.c.l.b16 %v2114
          %v2213 = vpack.c.b16 %v2198, %v2197
          %v2214 = vpack.c.b16 %v2200, %v2199
          %v2215 = vpack.c.b16 %v2202, %v2201
          %v2216 = vpack.c.b16 %v2204, %v2203
          %v2217 = vpack.c.b16 %v2206, %v2205
          %v2218 = vpack.c.b16 %v2208, %v2207
          %v2219 = vpack.c.b16 %v2210, %v2209
          %v2220 = vpack.c.b16 %v2212, %v2211
          %2229 = vmatprep.subr.bf16.mxu0 0
          %2230 = vmatpush1.bf16.xpose.msra.mxu0 %v2220
          %2231 = vmatprep.subr.bf16.mxu0 0
          %2232 = vmatpush1.bf16.xpose.msra.mxu0 %v2219
          %2233 = vmatprep.subr.bf16.mxu0 0
          %2234 = vmatpush1.bf16.xpose.msra.mxu0 %v2218
          %2235 = vmatprep.subr.bf16.mxu0 0
          %2236 = vmatpush1.bf16.xpose.msra.mxu0 %v2217
          %2237 = vmatprep.subr.bf16.mxu0 0
          %2238 = vmatpush1.bf16.xpose.msra.mxu0 %v2216
          %2239 = vmatprep.subr.bf16.mxu0 0
          %2240 = vmatpush1.bf16.xpose.msra.mxu0 %v2215
          %2241 = vmatprep.subr.bf16.mxu0 0
          %2242 = vmatpush1.bf16.xpose.msra.mxu0 %v2214
          %2243 = vmatprep.subr.bf16.mxu0 0
          %2244 = vmatpush1.bf16.xpose.msra.mxu0 %v2213
          %2245 = vmatprep.subr.bf16.mxu0 0
          %2246 = vmatpush2.bf16.xpose.msra.mxu0 0
          %2247 = vmatprep.subr.bf16.mxu0 0
          %2248 = vmatpush2.bf16.xpose.msra.mxu0 0
          %2249 = vmatprep.subr.bf16.mxu0 0
          %2250 = vmatpush2.bf16.xpose.msra.mxu0 0
          %2251 = vmatprep.subr.bf16.mxu0 0
          %2252 = vmatpush2.bf16.xpose.msra.mxu0 0
          %2253 = vmatprep.subr.bf16.mxu0 0
          %2254 = vmatpush2.bf16.xpose.msra.mxu0 0
          %2255 = vmatprep.subr.bf16.mxu0 0
          %2256 = vmatpush2.bf16.xpose.msra.mxu0 0
          %2257 = vmatprep.subr.bf16.mxu0 0
          %2258 = vmatpush2.bf16.xpose.msra.mxu0 0
          %2259 = vmatprep.subr.bf16.mxu0 0
          %2260 = vmatpush2.bf16.xpose.msra.mxu0 0
          %2261 = vmatprep.mubr.bf16.mxu0 0
          %2262 = vmatmul.mubr.bf16.gmra.mxu0 %v2165
          %v2263 = vpop.f32.mrf.mxu0
          %v2264 = vadd.f32 0.0, %v2263
          %v2265 = vpop.f32.mrf.mxu0
          %v2266 = vpop.f32.mrf.mxu0
          %v2267 = vadd.f32 0.0, %v2266
          %v2268 = vpop.f32.mrf.mxu0
          %2269 = vmatprep.mubr.bf16.mxu0 0
          %2270 = vmatmul.mubr.bf16.gmra.mxu0 %v2166
          %v2271 = vpop.f32.mrf.mxu0
          %v2272 = vadd.f32 0.0, %v2271
          %v2273 = vpop.f32.mrf.mxu0
          %v2274 = vpop.f32.mrf.mxu0
          %v2275 = vadd.f32 0.0, %v2274
          %v2276 = vpop.f32.mrf.mxu0
          %2277 = vmatprep.mubr.bf16.mxu0 0
          %2278 = vmatmul.mubr.bf16.gmra.mxu0 %v2167
          %v2279 = vpop.f32.mrf.mxu0
          %v2280 = vadd.f32 0.0, %v2279
          %v2281 = vpop.f32.mrf.mxu0
          %v2282 = vpop.f32.mrf.mxu0
          %v2283 = vadd.f32 0.0, %v2282
          %v2284 = vpop.f32.mrf.mxu0
          %2285 = vmatprep.mubr.bf16.mxu0 0
          %2286 = vmatmul.mubr.bf16.gmra.mxu0 %v2168
          %v2287 = vpop.f32.mrf.mxu0
          %v2288 = vadd.f32 0.0, %v2287
          %v2289 = vpop.f32.mrf.mxu0
          %v2290 = vpop.f32.mrf.mxu0
          %v2291 = vadd.f32 0.0, %v2290
          %v2292 = vpop.f32.mrf.mxu0
          %2293 = vmatprep.mubr.bf16.mxu0 0
          %2294 = vmatmul.mubr.bf16.gmra.mxu0 %v2169
          %v2295 = vpop.f32.mrf.mxu0
          %v2296 = vadd.f32 0.0, %v2295
          %v2297 = vpop.f32.mrf.mxu0
          %v2298 = vpop.f32.mrf.mxu0
          %v2299 = vadd.f32 0.0, %v2298
          %v2300 = vpop.f32.mrf.mxu0
          %2301 = vmatprep.mubr.bf16.mxu0 0
          %2302 = vmatmul.mubr.bf16.gmra.mxu0 %v2170
          %v2303 = vpop.f32.mrf.mxu0
          %v2304 = vadd.f32 0.0, %v2303
          %v2305 = vpop.f32.mrf.mxu0
          %v2306 = vpop.f32.mrf.mxu0
          %v2307 = vadd.f32 0.0, %v2306
          %v2308 = vpop.f32.mrf.mxu0
          %2309 = vmatprep.mubr.bf16.mxu0 0
          %2310 = vmatmul.mubr.bf16.gmra.mxu0 %v2171
          %v2311 = vpop.f32.mrf.mxu0
          %v2312 = vadd.f32 0.0, %v2311
          %v2313 = vpop.f32.mrf.mxu0
          %v2314 = vpop.f32.mrf.mxu0
          %v2315 = vadd.f32 0.0, %v2314
          %v2316 = vpop.f32.mrf.mxu0
          %2317 = vmatprep.mubr.bf16.mxu0 0
          %2318 = vmatmul.mubr.bf16.gmra.mxu0 %v2172
          %v2319 = vpop.f32.mrf.mxu0
          %v2320 = vadd.f32 0.0, %v2319
          %v2321 = vpop.f32.mrf.mxu0
          %v2322 = vpop.f32.mrf.mxu0
          %v2323 = vadd.f32 0.0, %v2322
          %v2324 = vpop.f32.mrf.mxu0
          %2325 = vdwg.mxu0
          %2326 = vmax.xlane.f32.xlu0 %v2264
          %v2327 = vpop.xlane.xlu0 %2326
          %2328 = vmax.xlane.f32.xlu0 %v2267
          %v2329 = vpop.xlane.xlu0 %2328
          %2330 = vmax.xlane.f32.xlu0 %v2272
          %v2331 = vpop.xlane.xlu0 %2330
          %2332 = vmax.xlane.f32.xlu0 %v2275
          %v2333 = vpop.xlane.xlu0 %2332
          %2334 = vmax.xlane.f32.xlu0 %v2280
          %v2335 = vpop.xlane.xlu0 %2334
          %2336 = vmax.xlane.f32.xlu0 %v2283
          %v2337 = vpop.xlane.xlu0 %2336
          %2338 = vmax.xlane.f32.xlu0 %v2288
          %v2339 = vpop.xlane.xlu0 %2338
          %2340 = vmax.xlane.f32.xlu0 %v2291
          %v2341 = vpop.xlane.xlu0 %2340
          %2342 = vmax.xlane.f32.xlu0 %v2296
          %v2343 = vpop.xlane.xlu0 %2342
          %2344 = vmax.xlane.f32.xlu0 %v2299
          %v2345 = vpop.xlane.xlu0 %2344
          %2346 = vmax.xlane.f32.xlu0 %v2304
          %v2347 = vpop.xlane.xlu0 %2346
          %2348 = vmax.xlane.f32.xlu0 %v2307
          %v2349 = vpop.xlane.xlu0 %2348
          %2350 = vmax.xlane.f32.xlu0 %v2312
          %v2351 = vpop.xlane.xlu0 %2350
          %2352 = vmax.xlane.f32.xlu0 %v2315
          %v2353 = vpop.xlane.xlu0 %2352
          %2354 = vmax.xlane.f32.xlu0 %v2320
          %v2355 = vpop.xlane.xlu0 %2354
          %2356 = vmax.xlane.f32.xlu0 %v2323
          %v2357 = vpop.xlane.xlu0 %2356
          %v2358 = vmax.f32 %v2046, %v2327
          %v2359 = vmax.f32 %v2047, %v2329
          %v2360 = vmax.f32 %v2048, %v2331
          %v2361 = vmax.f32 %v2049, %v2333
          %v2362 = vmax.f32 %v2050, %v2335
          %v2363 = vmax.f32 %v2051, %v2337
          %v2364 = vmax.f32 %v2052, %v2339
          %v2365 = vmax.f32 %v2053, %v2341
          %v2366 = vmax.f32 %v2054, %v2343
          %v2367 = vmax.f32 %v2055, %v2345
          %v2368 = vmax.f32 %v2056, %v2347
          %v2369 = vmax.f32 %v2057, %v2349
          %v2370 = vmax.f32 %v2058, %v2351
          %v2371 = vmax.f32 %v2059, %v2353
          %v2372 = vmax.f32 %v2060, %v2355
          %v2373 = vmax.f32 %v2061, %v2357
          %v2374 = vsub.f32 %v2046, %v2358
          %v2375 = vsub.f32 %v2047, %v2359
          %v2376 = vsub.f32 %v2048, %v2360
          %v2377 = vsub.f32 %v2049, %v2361
          %v2378 = vsub.f32 %v2050, %v2362
          %v2379 = vsub.f32 %v2051, %v2363
          %v2380 = vsub.f32 %v2052, %v2364
          %v2381 = vsub.f32 %v2053, %v2365
          %v2382 = vsub.f32 %v2054, %v2366
          %v2383 = vsub.f32 %v2055, %v2367
          %v2384 = vsub.f32 %v2056, %v2368
          %v2385 = vsub.f32 %v2057, %v2369
          %v2386 = vsub.f32 %v2058, %v2370
          %v2387 = vsub.f32 %v2059, %v2371
          %v2388 = vsub.f32 %v2060, %v2372
          %v2389 = vsub.f32 %v2061, %v2373
          %v2390 = vmul.f32 %v2374, 1.442695
          %v2391 = vpow.pop %v2390
          %v2392 = vmul.f32 %v2375, 1.442695
          %v2393 = vpow.pop %v2392
          %v2394 = vmul.f32 %v2376, 1.442695
          %v2395 = vpow.pop %v2394
          %v2396 = vmul.f32 %v2377, 1.442695
          %v2397 = vpow.pop %v2396
          %v2398 = vmul.f32 %v2378, 1.442695
          %v2399 = vpow.pop %v2398
          %v2400 = vmul.f32 %v2379, 1.442695
          %v2401 = vpow.pop %v2400
          %v2402 = vmul.f32 %v2380, 1.442695
          %v2403 = vpow.pop %v2402
          %v2404 = vmul.f32 %v2381, 1.442695
          %v2405 = vpow.pop %v2404
          %v2406 = vmul.f32 %v2382, 1.442695
          %v2407 = vpow.pop %v2406
          %v2408 = vmul.f32 %v2383, 1.442695
          %v2409 = vpow.pop %v2408
          %v2410 = vmul.f32 %v2384, 1.442695
          %v2411 = vpow.pop %v2410
          %v2412 = vmul.f32 %v2385, 1.442695
          %v2413 = vpow.pop %v2412
          %v2414 = vmul.f32 %v2386, 1.442695
          %v2415 = vpow.pop %v2414
          %v2416 = vmul.f32 %v2387, 1.442695
          %v2417 = vpow.pop %v2416
          %v2418 = vmul.f32 %v2388, 1.442695
          %v2419 = vpow.pop %v2418
          %v2420 = vmul.f32 %v2389, 1.442695
          %v2421 = vpow.pop %v2420
          %v2422 = vsub.f32 %v2264, %v2358
          %v2423 = vsub.f32 %v2267, %v2359
          %v2424 = vsub.f32 %v2272, %v2360
          %v2425 = vsub.f32 %v2275, %v2361
          %v2426 = vsub.f32 %v2280, %v2362
          %v2427 = vsub.f32 %v2283, %v2363
          %v2428 = vsub.f32 %v2288, %v2364
          %v2429 = vsub.f32 %v2291, %v2365
          %v2430 = vsub.f32 %v2296, %v2366
          %v2431 = vsub.f32 %v2299, %v2367
          %v2432 = vsub.f32 %v2304, %v2368
          %v2433 = vsub.f32 %v2307, %v2369
          %v2434 = vsub.f32 %v2312, %v2370
          %v2435 = vsub.f32 %v2315, %v2371
          %v2436 = vsub.f32 %v2320, %v2372
          %v2437 = vsub.f32 %v2323, %v2373
          %v2438 = vmul.f32 %v2422, 1.442695
          %v2439 = vpow.pop %v2438
          %v2440 = vmul.f32 %v2423, 1.442695
          %v2441 = vpow.pop %v2440
          %v2442 = vmul.f32 %v2424, 1.442695
          %v2443 = vpow.pop %v2442
          %v2444 = vmul.f32 %v2425, 1.442695
          %v2445 = vpow.pop %v2444
          %v2446 = vmul.f32 %v2426, 1.442695
          %v2447 = vpow.pop %v2446
          %v2448 = vmul.f32 %v2427, 1.442695
          %v2449 = vpow.pop %v2448
          %v2450 = vmul.f32 %v2428, 1.442695
          %v2451 = vpow.pop %v2450
          %v2452 = vmul.f32 %v2429, 1.442695
          %v2453 = vpow.pop %v2452
          %v2454 = vmul.f32 %v2430, 1.442695
          %v2455 = vpow.pop %v2454
          %v2456 = vmul.f32 %v2431, 1.442695
          %v2457 = vpow.pop %v2456
          %v2458 = vmul.f32 %v2432, 1.442695
          %v2459 = vpow.pop %v2458
          %v2460 = vmul.f32 %v2433, 1.442695
          %v2461 = vpow.pop %v2460
          %v2462 = vmul.f32 %v2434, 1.442695
          %v2463 = vpow.pop %v2462
          %v2464 = vmul.f32 %v2435, 1.442695
          %v2465 = vpow.pop %v2464
          %v2466 = vmul.f32 %v2436, 1.442695
          %v2467 = vpow.pop %v2466
          %v2468 = vmul.f32 %v2437, 1.442695
          %v2469 = vpow.pop %v2468
          %v2470 = vmul.f32 %v2391, %v2062
          %v2471 = vmul.f32 %v2393, %v2063
          %v2472 = vmul.f32 %v2395, %v2064
          %v2473 = vmul.f32 %v2397, %v2065
          %v2474 = vmul.f32 %v2399, %v2066
          %v2475 = vmul.f32 %v2401, %v2067
          %v2476 = vmul.f32 %v2403, %v2068
          %v2477 = vmul.f32 %v2405, %v2069
          %v2478 = vmul.f32 %v2407, %v2070
          %v2479 = vmul.f32 %v2409, %v2071
          %v2480 = vmul.f32 %v2411, %v2072
          %v2481 = vmul.f32 %v2413, %v2073
          %v2482 = vmul.f32 %v2415, %v2074
          %v2483 = vmul.f32 %v2417, %v2075
          %v2484 = vmul.f32 %v2419, %v2076
          %v2485 = vmul.f32 %v2421, %v2077
          %2486 = vadd.xlane.f32.xlu0 %v2439
          %v2487 = vpop.xlane.xlu0 %2486
          %2488 = vadd.xlane.f32.xlu0 %v2441
          %v2489 = vpop.xlane.xlu0 %2488
          %2490 = vadd.xlane.f32.xlu0 %v2443
          %v2491 = vpop.xlane.xlu0 %2490
          %2492 = vadd.xlane.f32.xlu0 %v2445
          %v2493 = vpop.xlane.xlu0 %2492
          %2494 = vadd.xlane.f32.xlu0 %v2447
          %v2495 = vpop.xlane.xlu0 %2494
          %2496 = vadd.xlane.f32.xlu0 %v2449
          %v2497 = vpop.xlane.xlu0 %2496
          %2498 = vadd.xlane.f32.xlu0 %v2451
          %v2499 = vpop.xlane.xlu0 %2498
          %2500 = vadd.xlane.f32.xlu0 %v2453
          %v2501 = vpop.xlane.xlu0 %2500
          %2502 = vadd.xlane.f32.xlu0 %v2455
          %v2503 = vpop.xlane.xlu0 %2502
          %2504 = vadd.xlane.f32.xlu0 %v2457
          %v2505 = vpop.xlane.xlu0 %2504
          %2506 = vadd.xlane.f32.xlu0 %v2459
          %v2507 = vpop.xlane.xlu0 %2506
          %2508 = vadd.xlane.f32.xlu0 %v2461
          %v2509 = vpop.xlane.xlu0 %2508
          %2510 = vadd.xlane.f32.xlu0 %v2463
          %v2511 = vpop.xlane.xlu0 %2510
          %2512 = vadd.xlane.f32.xlu0 %v2465
          %v2513 = vpop.xlane.xlu0 %2512
          %2514 = vadd.xlane.f32.xlu0 %v2467
          %v2515 = vpop.xlane.xlu0 %2514
          %2516 = vadd.xlane.f32.xlu0 %v2469
          %v2517 = vpop.xlane.xlu0 %2516
          %v2518 = vadd.f32 %v2470, %v2487
          %v2519 = vadd.f32 %v2471, %v2489
          %v2520 = vadd.f32 %v2472, %v2491
          %v2521 = vadd.f32 %v2473, %v2493
          %v2522 = vadd.f32 %v2474, %v2495
          %v2523 = vadd.f32 %v2475, %v2497
          %v2524 = vadd.f32 %v2476, %v2499
          %v2525 = vadd.f32 %v2477, %v2501
          %v2526 = vadd.f32 %v2478, %v2503
          %v2527 = vadd.f32 %v2479, %v2505
          %v2528 = vadd.f32 %v2480, %v2507
          %v2529 = vadd.f32 %v2481, %v2509
          %v2530 = vadd.f32 %v2482, %v2511
          %v2531 = vadd.f32 %v2483, %v2513
          %v2532 = vadd.f32 %v2484, %v2515
          %v2533 = vadd.f32 %v2485, %v2517
          %v2534 = vmul.f32 %v2391, %v2078
          %v2535 = vmul.f32 %v2393, %v2079
          %v2536 = vmul.f32 %v2395, %v2080
          %v2537 = vmul.f32 %v2397, %v2081
          %v2538 = vmul.f32 %v2399, %v2082
          %v2539 = vmul.f32 %v2401, %v2083
          %v2540 = vmul.f32 %v2403, %v2084
          %v2541 = vmul.f32 %v2405, %v2085
          %v2542 = vmul.f32 %v2407, %v2086
          %v2543 = vmul.f32 %v2409, %v2087
          %v2544 = vmul.f32 %v2411, %v2088
          %v2545 = vmul.f32 %v2413, %v2089
          %v2546 = vmul.f32 %v2415, %v2090
          %v2547 = vmul.f32 %v2417, %v2091
          %v2548 = vmul.f32 %v2419, %v2092
          %v2549 = vmul.f32 %v2421, %v2093
          %v2550 = vpack.c.bf16 %v2441, %v2439
          %v2551 = vpack.c.bf16 %v2445, %v2443
          %v2552 = vpack.c.bf16 %v2449, %v2447
          %v2553 = vpack.c.bf16 %v2453, %v2451
          %v2554 = vpack.c.bf16 %v2457, %v2455
          %v2555 = vpack.c.bf16 %v2461, %v2459
          %v2556 = vpack.c.bf16 %v2465, %v2463
          %v2557 = vpack.c.bf16 %v2469, %v2467
          %v2574 = vunpack.c.l.b16 %v2117
          %v2575 = vunpack.c.l.b16 %v2118
          %v2576 = vunpack.c.l.b16 %v2119
          %v2577 = vunpack.c.l.b16 %v2120
          %v2578 = vunpack.c.l.b16 %v2121
          %v2579 = vunpack.c.l.b16 %v2122
          %v2580 = vunpack.c.l.b16 %v2123
          %v2581 = vunpack.c.l.b16 %v2124
          %v2582 = vunpack.c.l.b16 %v2125
          %v2583 = vunpack.c.l.b16 %v2126
          %v2584 = vunpack.c.l.b16 %v2127
          %v2585 = vunpack.c.l.b16 %v2128
          %v2586 = vunpack.c.l.b16 %v2129
          %v2587 = vunpack.c.l.b16 %v2130
          %v2588 = vunpack.c.l.b16 %v2131
          %v2589 = vunpack.c.l.b16 %v2132
          %v2590 = vpack.c.b16 %v2575, %v2574
          %v2591 = vpack.c.b16 %v2577, %v2576
          %v2592 = vpack.c.b16 %v2579, %v2578
          %v2593 = vpack.c.b16 %v2581, %v2580
          %v2594 = vpack.c.b16 %v2583, %v2582
          %v2595 = vpack.c.b16 %v2585, %v2584
          %v2596 = vpack.c.b16 %v2587, %v2586
          %v2597 = vpack.c.b16 %v2589, %v2588
          %2606 = vmatprep.subr.bf16.mxu0 0
          %2607 = vmatpush1.bf16.msra.mxu0 %v2597
          %2608 = vmatprep.subr.bf16.mxu0 0
          %2609 = vmatpush1.bf16.msra.mxu0 %v2596
          %2610 = vmatprep.subr.bf16.mxu0 0
          %2611 = vmatpush1.bf16.msra.mxu0 %v2595
          %2612 = vmatprep.subr.bf16.mxu0 0
          %2613 = vmatpush1.bf16.msra.mxu0 %v2594
          %2614 = vmatprep.subr.bf16.mxu0 0
          %2615 = vmatpush1.bf16.msra.mxu0 %v2593
          %2616 = vmatprep.subr.bf16.mxu0 0
          %2617 = vmatpush1.bf16.msra.mxu0 %v2592
          %2618 = vmatprep.subr.bf16.mxu0 0
          %2619 = vmatpush1.bf16.msra.mxu0 %v2591
          %2620 = vmatprep.subr.bf16.mxu0 0
          %2621 = vmatpush1.bf16.msra.mxu0 %v2590
          %2622 = vmatprep.subr.bf16.mxu0 0
          %2623 = vmatpush2.bf16.msra.mxu0 0
          %2624 = vmatprep.subr.bf16.mxu0 0
          %2625 = vmatpush2.bf16.msra.mxu0 0
          %2626 = vmatprep.subr.bf16.mxu0 0
          %2627 = vmatpush2.bf16.msra.mxu0 0
          %2628 = vmatprep.subr.bf16.mxu0 0
          %2629 = vmatpush2.bf16.msra.mxu0 0
          %2630 = vmatprep.subr.bf16.mxu0 0
          %2631 = vmatpush2.bf16.msra.mxu0 0
          %2632 = vmatprep.subr.bf16.mxu0 0
          %2633 = vmatpush2.bf16.msra.mxu0 0
          %2634 = vmatprep.subr.bf16.mxu0 0
          %2635 = vmatpush2.bf16.msra.mxu0 0
          %2636 = vmatprep.subr.bf16.mxu0 0
          %2637 = vmatpush2.bf16.msra.mxu0 0
          %2638 = vmatprep.mubr.bf16.mxu0 0
          %2639 = vmatmul.mubr.bf16.gmra.mxu0 %v2550
          %v2640 = vpop.f32.mrf.mxu0
          %v2641 = vadd.f32 0.0, %v2640
          %v2642 = vpop.f32.mrf.mxu0
          %v2643 = vpop.f32.mrf.mxu0
          %v2644 = vadd.f32 0.0, %v2643
          %v2645 = vpop.f32.mrf.mxu0
          %2646 = vmatprep.mubr.bf16.mxu0 0
          %2647 = vmatmul.mubr.bf16.gmra.mxu0 %v2551
          %v2648 = vpop.f32.mrf.mxu0
          %v2649 = vadd.f32 0.0, %v2648
          %v2650 = vpop.f32.mrf.mxu0
          %v2651 = vpop.f32.mrf.mxu0
          %v2652 = vadd.f32 0.0, %v2651
          %v2653 = vpop.f32.mrf.mxu0
          %2654 = vmatprep.mubr.bf16.mxu0 0
          %2655 = vmatmul.mubr.bf16.gmra.mxu0 %v2552
          %v2656 = vpop.f32.mrf.mxu0
          %v2657 = vadd.f32 0.0, %v2656
          %v2658 = vpop.f32.mrf.mxu0
          %v2659 = vpop.f32.mrf.mxu0
          %v2660 = vadd.f32 0.0, %v2659
          %v2661 = vpop.f32.mrf.mxu0
          %2662 = vmatprep.mubr.bf16.mxu0 0
          %2663 = vmatmul.mubr.bf16.gmra.mxu0 %v2553
          %v2664 = vpop.f32.mrf.mxu0
          %v2665 = vadd.f32 0.0, %v2664
          %v2666 = vpop.f32.mrf.mxu0
          %v2667 = vpop.f32.mrf.mxu0
          %v2668 = vadd.f32 0.0, %v2667
          %v2669 = vpop.f32.mrf.mxu0
          %2670 = vmatprep.mubr.bf16.mxu0 0
          %2671 = vmatmul.mubr.bf16.gmra.mxu0 %v2554
          %v2672 = vpop.f32.mrf.mxu0
          %v2673 = vadd.f32 0.0, %v2672
          %v2674 = vpop.f32.mrf.mxu0
          %v2675 = vpop.f32.mrf.mxu0
          %v2676 = vadd.f32 0.0, %v2675
          %v2677 = vpop.f32.mrf.mxu0
          %2678 = vmatprep.mubr.bf16.mxu0 0
          %2679 = vmatmul.mubr.bf16.gmra.mxu0 %v2555
          %v2680 = vpop.f32.mrf.mxu0
          %v2681 = vadd.f32 0.0, %v2680
          %v2682 = vpop.f32.mrf.mxu0
          %v2683 = vpop.f32.mrf.mxu0
          %v2684 = vadd.f32 0.0, %v2683
          %v2685 = vpop.f32.mrf.mxu0
          %2686 = vmatprep.mubr.bf16.mxu0 0
          %2687 = vmatmul.mubr.bf16.gmra.mxu0 %v2556
          %v2688 = vpop.f32.mrf.mxu0
          %v2689 = vadd.f32 0.0, %v2688
          %v2690 = vpop.f32.mrf.mxu0
          %v2691 = vpop.f32.mrf.mxu0
          %v2692 = vadd.f32 0.0, %v2691
          %v2693 = vpop.f32.mrf.mxu0
          %2694 = vmatprep.mubr.bf16.mxu0 0
          %2695 = vmatmul.mubr.bf16.gmra.mxu0 %v2557
          %v2696 = vpop.f32.mrf.mxu0
          %v2697 = vadd.f32 0.0, %v2696
          %v2698 = vpop.f32.mrf.mxu0
          %v2699 = vpop.f32.mrf.mxu0
          %v2700 = vadd.f32 0.0, %v2699
          %v2701 = vpop.f32.mrf.mxu0
          %2702 = vdwg.mxu0
          %v2703 = vadd.f32 %v2534, %v2641
          %v2704 = vadd.f32 %v2535, %v2644
          %v2705 = vadd.f32 %v2536, %v2649
          %v2706 = vadd.f32 %v2537, %v2652
          %v2707 = vadd.f32 %v2538, %v2657
          %v2708 = vadd.f32 %v2539, %v2660
          %v2709 = vadd.f32 %v2540, %v2665
          %v2710 = vadd.f32 %v2541, %v2668
          %v2711 = vadd.f32 %v2542, %v2673
          %v2712 = vadd.f32 %v2543, %v2676
          %v2713 = vadd.f32 %v2544, %v2681
          %v2714 = vadd.f32 %v2545, %v2684
          %v2715 = vadd.f32 %v2546, %v2689
          %v2716 = vadd.f32 %v2547, %v2692
          %v2717 = vadd.f32 %v2548, %v2697
          %v2718 = vadd.f32 %v2549, %v2700
        $region85: #{encoder_forward.1} parent=67 // loop_footer
          %s2045 = sadd.s32 1, %s2041
        $region86: #{encoder_forward.1} parent=67 // loop_footer_branch
          %2040 = sbr.rel target = $region82
        $region87: #{encoder_forward.1} parent=67 // loop_exit
          _
        %v2719 = vrcp.pop %v2062
        %v2720 = vrcp.pop %v2063
        %v2721 = vrcp.pop %v2064
        %v2722 = vrcp.pop %v2065
        %v2723 = vrcp.pop %v2066
        %v2724 = vrcp.pop %v2067
        %v2725 = vrcp.pop %v2068
        %v2726 = vrcp.pop %v2069
        %v2727 = vrcp.pop %v2070
        %v2728 = vrcp.pop %v2071
        %v2729 = vrcp.pop %v2072
        %v2730 = vrcp.pop %v2073
        %v2731 = vrcp.pop %v2074
        %v2732 = vrcp.pop %v2075
        %v2733 = vrcp.pop %v2076
        %v2734 = vrcp.pop %v2077
        %v2735 = vmul.f32 %v2078, %v2719
        %v2736 = vmul.f32 %v2079, %v2720
        %v2737 = vmul.f32 %v2080, %v2721
        %v2738 = vmul.f32 %v2081, %v2722
        %v2739 = vmul.f32 %v2082, %v2723
        %v2740 = vmul.f32 %v2083, %v2724
        %v2741 = vmul.f32 %v2084, %v2725
        %v2742 = vmul.f32 %v2085, %v2726
        %v2743 = vmul.f32 %v2086, %v2727
        %v2744 = vmul.f32 %v2087, %v2728
        %v2745 = vmul.f32 %v2088, %v2729
        %v2746 = vmul.f32 %v2089, %v2730
        %v2747 = vmul.f32 %v2090, %v2731
        %v2748 = vmul.f32 %v2091, %v2732
        %v2749 = vmul.f32 %v2092, %v2733
        %v2750 = vmul.f32 %v2093, %v2734
        %v2751 = vld [vmem:[%s3] sm:$0xf]
        %v2752 = vld [vmem:[%s3 + $0x4] sm:$0xf]
        %v2753 = vld [vmem:[%s3 + $0x8] sm:$0xf]
        %v2754 = vld [vmem:[%s3 + $0xc] sm:$0xf]
        %v2755 = vld [vmem:[%s3 + $0x10] sm:$0xf]
        %v2756 = vld [vmem:[%s3 + $0x14] sm:$0xf]
        %v2757 = vld [vmem:[%s3 + $0x18] sm:$0xf]
        %v2758 = vld [vmem:[%s3 + $0x1c] sm:$0xf]
        %v2759 = vld [vmem:[%s3 + $0x20] sm:$0xf]
        %v2760 = vld [vmem:[%s3 + $0x24] sm:$0xf]
        %v2761 = vld [vmem:[%s3 + $0x28] sm:$0xf]
        %v2762 = vld [vmem:[%s3 + $0x2c] sm:$0xf]
        %v2763 = vld [vmem:[%s3 + $0x30] sm:$0xf]
        %v2764 = vld [vmem:[%s3 + $0x34] sm:$0xf]
        %v2765 = vld [vmem:[%s3 + $0x38] sm:$0xf]
        %v2766 = vld [vmem:[%s3 + $0x3c] sm:$0xf]
        %v2767 = vpack.c.bf16 %v2736, %v2735
        %v2768 = vpack.c.bf16 %v2738, %v2737
        %v2769 = vpack.c.bf16 %v2740, %v2739
        %v2770 = vpack.c.bf16 %v2742, %v2741
        %v2771 = vpack.c.bf16 %v2744, %v2743
        %v2772 = vpack.c.bf16 %v2746, %v2745
        %v2773 = vpack.c.bf16 %v2748, %v2747
        %v2774 = vpack.c.bf16 %v2750, %v2749
        %v2791 = vunpack.c.l.b16 %v2751
        %v2792 = vunpack.c.l.b16 %v2752
        %v2793 = vunpack.c.l.b16 %v2753
        %v2794 = vunpack.c.l.b16 %v2754
        %v2795 = vunpack.c.l.b16 %v2755
        %v2796 = vunpack.c.l.b16 %v2756
        %v2797 = vunpack.c.l.b16 %v2757
        %v2798 = vunpack.c.l.b16 %v2758
        %v2799 = vunpack.c.l.b16 %v2759
        %v2800 = vunpack.c.l.b16 %v2760
        %v2801 = vunpack.c.l.b16 %v2761
        %v2802 = vunpack.c.l.b16 %v2762
        %v2803 = vunpack.c.l.b16 %v2763
        %v2804 = vunpack.c.l.b16 %v2764
        %v2805 = vunpack.c.l.b16 %v2765
        %v2806 = vunpack.c.l.b16 %v2766
        %v2807 = vpack.c.b16 %v2792, %v2791
        %v2808 = vpack.c.b16 %v2794, %v2793
        %v2809 = vpack.c.b16 %v2796, %v2795
        %v2810 = vpack.c.b16 %v2798, %v2797
        %v2811 = vpack.c.b16 %v2800, %v2799
        %v2812 = vpack.c.b16 %v2802, %v2801
        %v2813 = vpack.c.b16 %v2804, %v2803
        %v2814 = vpack.c.b16 %v2806, %v2805
        %2823 = vmatprep.subr.bf16.mxu0 0
        %2824 = vmatpush1.bf16.msra.mxu0 %v2814
        %2825 = vmatprep.subr.bf16.mxu0 0
        %2826 = vmatpush1.bf16.msra.mxu0 %v2813
        %2827 = vmatprep.subr.bf16.mxu0 0
        %2828 = vmatpush1.bf16.msra.mxu0 %v2812
        %2829 = vmatprep.subr.bf16.mxu0 0
        %2830 = vmatpush1.bf16.msra.mxu0 %v2811
        %2831 = vmatprep.subr.bf16.mxu0 0
        %2832 = vmatpush1.bf16.msra.mxu0 %v2810
        %2833 = vmatprep.subr.bf16.mxu0 0
        %2834 = vmatpush1.bf16.msra.mxu0 %v2809
        %2835 = vmatprep.subr.bf16.mxu0 0
        %2836 = vmatpush1.bf16.msra.mxu0 %v2808
        %2837 = vmatprep.subr.bf16.mxu0 0
        %2838 = vmatpush1.bf16.msra.mxu0 %v2807
        %2839 = vmatprep.subr.bf16.mxu0 0
        %2840 = vmatpush2.bf16.msra.mxu0 0
        %2841 = vmatprep.subr.bf16.mxu0 0
        %2842 = vmatpush2.bf16.msra.mxu0 0
        %2843 = vmatprep.subr.bf16.mxu0 0
        %2844 = vmatpush2.bf16.msra.mxu0 0
        %2845 = vmatprep.subr.bf16.mxu0 0
        %2846 = vmatpush2.bf16.msra.mxu0 0
        %2847 = vmatprep.subr.bf16.mxu0 0
        %2848 = vmatpush2.bf16.msra.mxu0 0
        %2849 = vmatprep.subr.bf16.mxu0 0
        %2850 = vmatpush2.bf16.msra.mxu0 0
        %2851 = vmatprep.subr.bf16.mxu0 0
        %2852 = vmatpush2.bf16.msra.mxu0 0
        %2853 = vmatprep.subr.bf16.mxu0 0
        %2854 = vmatpush2.bf16.msra.mxu0 0
        %2855 = vmatprep.mubr.bf16.mxu0 0
        %2856 = vmatmul.mubr.bf16.gmra.mxu0 %v2767
        %v2857 = vpop.f32.mrf.mxu0
        %v2858 = vadd.f32 0.0, %v2857
        %v2859 = vpop.f32.mrf.mxu0
        %v2860 = vpop.f32.mrf.mxu0
        %v2861 = vadd.f32 0.0, %v2860
        %v2862 = vpop.f32.mrf.mxu0
        %2863 = vmatprep.mubr.bf16.mxu0 0
        %2864 = vmatmul.mubr.bf16.gmra.mxu0 %v2768
        %v2865 = vpop.f32.mrf.mxu0
        %v2866 = vadd.f32 0.0, %v2865
        %v2867 = vpop.f32.mrf.mxu0
        %v2868 = vpop.f32.mrf.mxu0
        %v2869 = vadd.f32 0.0, %v2868
        %v2870 = vpop.f32.mrf.mxu0
        %2871 = vmatprep.mubr.bf16.mxu0 0
        %2872 = vmatmul.mubr.bf16.gmra.mxu0 %v2769
        %v2873 = vpop.f32.mrf.mxu0
        %v2874 = vadd.f32 0.0, %v2873
        %v2875 = vpop.f32.mrf.mxu0
        %v2876 = vpop.f32.mrf.mxu0
        %v2877 = vadd.f32 0.0, %v2876
        %v2878 = vpop.f32.mrf.mxu0
        %2879 = vmatprep.mubr.bf16.mxu0 0
        %2880 = vmatmul.mubr.bf16.gmra.mxu0 %v2770
        %v2881 = vpop.f32.mrf.mxu0
        %v2882 = vadd.f32 0.0, %v2881
        %v2883 = vpop.f32.mrf.mxu0
        %v2884 = vpop.f32.mrf.mxu0
        %v2885 = vadd.f32 0.0, %v2884
        %v2886 = vpop.f32.mrf.mxu0
        %2887 = vmatprep.mubr.bf16.mxu0 0
        %2888 = vmatmul.mubr.bf16.gmra.mxu0 %v2771
        %v2889 = vpop.f32.mrf.mxu0
        %v2890 = vadd.f32 0.0, %v2889
        %v2891 = vpop.f32.mrf.mxu0
        %v2892 = vpop.f32.mrf.mxu0
        %v2893 = vadd.f32 0.0, %v2892
        %v2894 = vpop.f32.mrf.mxu0
        %2895 = vmatprep.mubr.bf16.mxu0 0
        %2896 = vmatmul.mubr.bf16.gmra.mxu0 %v2772
        %v2897 = vpop.f32.mrf.mxu0
        %v2898 = vadd.f32 0.0, %v2897
        %v2899 = vpop.f32.mrf.mxu0
        %v2900 = vpop.f32.mrf.mxu0
        %v2901 = vadd.f32 0.0, %v2900
        %v2902 = vpop.f32.mrf.mxu0
        %2903 = vmatprep.mubr.bf16.mxu0 0
        %2904 = vmatmul.mubr.bf16.gmra.mxu0 %v2773
        %v2905 = vpop.f32.mrf.mxu0
        %v2906 = vadd.f32 0.0, %v2905
        %v2907 = vpop.f32.mrf.mxu0
        %v2908 = vpop.f32.mrf.mxu0
        %v2909 = vadd.f32 0.0, %v2908
        %v2910 = vpop.f32.mrf.mxu0
        %2911 = vmatprep.mubr.bf16.mxu0 0
        %2912 = vmatmul.mubr.bf16.gmra.mxu0 %v2774
        %v2913 = vpop.f32.mrf.mxu0
        %v2914 = vadd.f32 0.0, %v2913
        %v2915 = vpop.f32.mrf.mxu0
        %v2916 = vpop.f32.mrf.mxu0
        %v2917 = vadd.f32 0.0, %v2916
        %v2918 = vpop.f32.mrf.mxu0
        %2919 = vdwg.mxu0
        %v2920 = vadd.f32 %v2003, %v2858
        %v2921 = vadd.f32 %v2004, %v2861
        %v2922 = vadd.f32 %v2005, %v2866
        %v2923 = vadd.f32 %v2006, %v2869
        %v2924 = vadd.f32 %v2007, %v2874
        %v2925 = vadd.f32 %v2008, %v2877
        %v2926 = vadd.f32 %v2009, %v2882
        %v2927 = vadd.f32 %v2010, %v2885
        %v2928 = vadd.f32 %v2011, %v2890
        %v2929 = vadd.f32 %v2012, %v2893
        %v2930 = vadd.f32 %v2013, %v2898
        %v2931 = vadd.f32 %v2014, %v2901
        %v2932 = vadd.f32 %v2015, %v2906
        %v2933 = vadd.f32 %v2016, %v2909
        %v2934 = vadd.f32 %v2017, %v2914
        %v2935 = vadd.f32 %v2018, %v2917
        %v2936 = vld [vmem:[%s10] sm:$0x1]
        %v2937 = vld [vmem:[%s11] sm:$0x1]
        %2938 = vadd.xlane.f32.xlu0 %v2920
        %v2939 = vpop.xlane.xlu0 %2938
        %2940 = vadd.xlane.f32.xlu0 %v2921
        %v2941 = vpop.xlane.xlu0 %2940
        %2942 = vadd.xlane.f32.xlu0 %v2922
        %v2943 = vpop.xlane.xlu0 %2942
        %2944 = vadd.xlane.f32.xlu0 %v2923
        %v2945 = vpop.xlane.xlu0 %2944
        %2946 = vadd.xlane.f32.xlu0 %v2924
        %v2947 = vpop.xlane.xlu0 %2946
        %2948 = vadd.xlane.f32.xlu0 %v2925
        %v2949 = vpop.xlane.xlu0 %2948
        %2950 = vadd.xlane.f32.xlu0 %v2926
        %v2951 = vpop.xlane.xlu0 %2950
        %2952 = vadd.xlane.f32.xlu0 %v2927
        %v2953 = vpop.xlane.xlu0 %2952
        %2954 = vadd.xlane.f32.xlu0 %v2928
        %v2955 = vpop.xlane.xlu0 %2954
        %2956 = vadd.xlane.f32.xlu0 %v2929
        %v2957 = vpop.xlane.xlu0 %2956
        %2958 = vadd.xlane.f32.xlu0 %v2930
        %v2959 = vpop.xlane.xlu0 %2958
        %2960 = vadd.xlane.f32.xlu0 %v2931
        %v2961 = vpop.xlane.xlu0 %2960
        %2962 = vadd.xlane.f32.xlu0 %v2932
        %v2963 = vpop.xlane.xlu0 %2962
        %2964 = vadd.xlane.f32.xlu0 %v2933
        %v2965 = vpop.xlane.xlu0 %2964
        %2966 = vadd.xlane.f32.xlu0 %v2934
        %v2967 = vpop.xlane.xlu0 %2966
        %2968 = vadd.xlane.f32.xlu0 %v2935
        %v2969 = vpop.xlane.xlu0 %2968
        %v2970 = vrcp.pop 128.0
        %v2971 = vmul.f32 %v2939, %v2970
        %v2972 = vmul.f32 %v2941, %v2970
        %v2973 = vmul.f32 %v2943, %v2970
        %v2974 = vmul.f32 %v2945, %v2970
        %v2975 = vmul.f32 %v2947, %v2970
        %v2976 = vmul.f32 %v2949, %v2970
        %v2977 = vmul.f32 %v2951, %v2970
        %v2978 = vmul.f32 %v2953, %v2970
        %v2979 = vmul.f32 %v2955, %v2970
        %v2980 = vmul.f32 %v2957, %v2970
        %v2981 = vmul.f32 %v2959, %v2970
        %v2982 = vmul.f32 %v2961, %v2970
        %v2983 = vmul.f32 %v2963, %v2970
        %v2984 = vmul.f32 %v2965, %v2970
        %v2985 = vmul.f32 %v2967, %v2970
        %v2986 = vmul.f32 %v2969, %v2970
        %v2987 = vsub.f32 %v2920, %v2971
        %v2988 = vsub.f32 %v2921, %v2972
        %v2989 = vsub.f32 %v2922, %v2973
        %v2990 = vsub.f32 %v2923, %v2974
        %v2991 = vsub.f32 %v2924, %v2975
        %v2992 = vsub.f32 %v2925, %v2976
        %v2993 = vsub.f32 %v2926, %v2977
        %v2994 = vsub.f32 %v2927, %v2978
        %v2995 = vsub.f32 %v2928, %v2979
        %v2996 = vsub.f32 %v2929, %v2980
        %v2997 = vsub.f32 %v2930, %v2981
        %v2998 = vsub.f32 %v2931, %v2982
        %v2999 = vsub.f32 %v2932, %v2983
        %v3000 = vsub.f32 %v2933, %v2984
        %v3001 = vsub.f32 %v2934, %v2985
        %v3002 = vsub.f32 %v2935, %v2986
        %v3003 = vmul.f32 %v2987, %v2987
        %v3004 = vmul.f32 %v2988, %v2988
        %v3005 = vmul.f32 %v2989, %v2989
        %v3006 = vmul.f32 %v2990, %v2990
        %v3007 = vmul.f32 %v2991, %v2991
        %v3008 = vmul.f32 %v2992, %v2992
        %v3009 = vmul.f32 %v2993, %v2993
        %v3010 = vmul.f32 %v2994, %v2994
        %v3011 = vmul.f32 %v2995, %v2995
        %v3012 = vmul.f32 %v2996, %v2996
        %v3013 = vmul.f32 %v2997, %v2997
        %v3014 = vmul.f32 %v2998, %v2998
        %v3015 = vmul.f32 %v2999, %v2999
        %v3016 = vmul.f32 %v3000, %v3000
        %v3017 = vmul.f32 %v3001, %v3001
        %v3018 = vmul.f32 %v3002, %v3002
        %3019 = vadd.xlane.f32.xlu0 %v3003
        %v3020 = vpop.xlane.xlu0 %3019
        %3021 = vadd.xlane.f32.xlu0 %v3004
        %v3022 = vpop.xlane.xlu0 %3021
        %3023 = vadd.xlane.f32.xlu0 %v3005
        %v3024 = vpop.xlane.xlu0 %3023
        %3025 = vadd.xlane.f32.xlu0 %v3006
        %v3026 = vpop.xlane.xlu0 %3025
        %3027 = vadd.xlane.f32.xlu0 %v3007
        %v3028 = vpop.xlane.xlu0 %3027
        %3029 = vadd.xlane.f32.xlu0 %v3008
        %v3030 = vpop.xlane.xlu0 %3029
        %3031 = vadd.xlane.f32.xlu0 %v3009
        %v3032 = vpop.xlane.xlu0 %3031
        %3033 = vadd.xlane.f32.xlu0 %v3010
        %v3034 = vpop.xlane.xlu0 %3033
        %3035 = vadd.xlane.f32.xlu0 %v3011
        %v3036 = vpop.xlane.xlu0 %3035
        %3037 = vadd.xlane.f32.xlu0 %v3012
        %v3038 = vpop.xlane.xlu0 %3037
        %3039 = vadd.xlane.f32.xlu0 %v3013
        %v3040 = vpop.xlane.xlu0 %3039
        %3041 = vadd.xlane.f32.xlu0 %v3014
        %v3042 = vpop.xlane.xlu0 %3041
        %3043 = vadd.xlane.f32.xlu0 %v3015
        %v3044 = vpop.xlane.xlu0 %3043
        %3045 = vadd.xlane.f32.xlu0 %v3016
        %v3046 = vpop.xlane.xlu0 %3045
        %3047 = vadd.xlane.f32.xlu0 %v3017
        %v3048 = vpop.xlane.xlu0 %3047
        %3049 = vadd.xlane.f32.xlu0 %v3018
        %v3050 = vpop.xlane.xlu0 %3049
        %v3051 = vmul.f32 %v3020, %v2970
        %v3052 = vmul.f32 %v3022, %v2970
        %v3053 = vmul.f32 %v3024, %v2970
        %v3054 = vmul.f32 %v3026, %v2970
        %v3055 = vmul.f32 %v3028, %v2970
        %v3056 = vmul.f32 %v3030, %v2970
        %v3057 = vmul.f32 %v3032, %v2970
        %v3058 = vmul.f32 %v3034, %v2970
        %v3059 = vmul.f32 %v3036, %v2970
        %v3060 = vmul.f32 %v3038, %v2970
        %v3061 = vmul.f32 %v3040, %v2970
        %v3062 = vmul.f32 %v3042, %v2970
        %v3063 = vmul.f32 %v3044, %v2970
        %v3064 = vmul.f32 %v3046, %v2970
        %v3065 = vmul.f32 %v3048, %v2970
        %v3066 = vmul.f32 %v3050, %v2970
        %v3067 = vadd.f32 %v3051, 1e-05
        %v3068 = vadd.f32 %v3052, 1e-05
        %v3069 = vadd.f32 %v3053, 1e-05
        %v3070 = vadd.f32 %v3054, 1e-05
        %v3071 = vadd.f32 %v3055, 1e-05
        %v3072 = vadd.f32 %v3056, 1e-05
        %v3073 = vadd.f32 %v3057, 1e-05
        %v3074 = vadd.f32 %v3058, 1e-05
        %v3075 = vadd.f32 %v3059, 1e-05
        %v3076 = vadd.f32 %v3060, 1e-05
        %v3077 = vadd.f32 %v3061, 1e-05
        %v3078 = vadd.f32 %v3062, 1e-05
        %v3079 = vadd.f32 %v3063, 1e-05
        %v3080 = vadd.f32 %v3064, 1e-05
        %v3081 = vadd.f32 %v3065, 1e-05
        %v3082 = vadd.f32 %v3066, 1e-05
        %v3083 = vrsqrt.pop %v3067
        %v3084 = vrsqrt.pop %v3068
        %v3085 = vrsqrt.pop %v3069
        %v3086 = vrsqrt.pop %v3070
        %v3087 = vrsqrt.pop %v3071
        %v3088 = vrsqrt.pop %v3072
        %v3089 = vrsqrt.pop %v3073
        %v3090 = vrsqrt.pop %v3074
        %v3091 = vrsqrt.pop %v3075
        %v3092 = vrsqrt.pop %v3076
        %v3093 = vrsqrt.pop %v3077
        %v3094 = vrsqrt.pop %v3078
        %v3095 = vrsqrt.pop %v3079
        %v3096 = vrsqrt.pop %v3080
        %v3097 = vrsqrt.pop %v3081
        %v3098 = vrsqrt.pop %v3082
        %v3099 = vmul.f32 %v2987, %v3083
        %v3100 = vmul.f32 %v2988, %v3084
        %v3101 = vmul.f32 %v2989, %v3085
        %v3102 = vmul.f32 %v2990, %v3086
        %v3103 = vmul.f32 %v2991, %v3087
        %v3104 = vmul.f32 %v2992, %v3088
        %v3105 = vmul.f32 %v2993, %v3089
        %v3106 = vmul.f32 %v2994, %v3090
        %v3107 = vmul.f32 %v2995, %v3091
        %v3108 = vmul.f32 %v2996, %v3092
        %v3109 = vmul.f32 %v2997, %v3093
        %v3110 = vmul.f32 %v2998, %v3094
        %v3111 = vmul.f32 %v2999, %v3095
        %v3112 = vmul.f32 %v3000, %v3096
        %v3113 = vmul.f32 %v3001, %v3097
        %v3114 = vmul.f32 %v3002, %v3098
        %v3116 = vlaneseq
        %v3117 = vshrl.u32 %v3116, 7
        %v3118 = vsub.s32 0, %v3117
        %v3119 = vrot.slane %v2936, %v3118
        %v3121 = vmul.f32 %v3099, %v3119
        %v3122 = vmul.f32 %v3100, %v3119
        %v3123 = vmul.f32 %v3101, %v3119
        %v3124 = vmul.f32 %v3102, %v3119
        %v3125 = vmul.f32 %v3103, %v3119
        %v3126 = vmul.f32 %v3104, %v3119
        %v3127 = vmul.f32 %v3105, %v3119
        %v3128 = vmul.f32 %v3106, %v3119
        %v3129 = vmul.f32 %v3107, %v3119
        %v3130 = vmul.f32 %v3108, %v3119
        %v3131 = vmul.f32 %v3109, %v3119
        %v3132 = vmul.f32 %v3110, %v3119
        %v3133 = vmul.f32 %v3111, %v3119
        %v3134 = vmul.f32 %v3112, %v3119
        %v3135 = vmul.f32 %v3113, %v3119
        %v3136 = vmul.f32 %v3114, %v3119
        %v3138 = vlaneseq
        %v3139 = vshrl.u32 %v3138, 7
        %v3140 = vsub.s32 0, %v3139
        %v3141 = vrot.slane %v2937, %v3140
        %v3143 = vadd.f32 %v3121, %v3141
        %v3144 = vadd.f32 %v3122, %v3141
        %v3145 = vadd.f32 %v3123, %v3141
        %v3146 = vadd.f32 %v3124, %v3141
        %v3147 = vadd.f32 %v3125, %v3141
        %v3148 = vadd.f32 %v3126, %v3141
        %v3149 = vadd.f32 %v3127, %v3141
        %v3150 = vadd.f32 %v3128, %v3141
        %v3151 = vadd.f32 %v3129, %v3141
        %v3152 = vadd.f32 %v3130, %v3141
        %v3153 = vadd.f32 %v3131, %v3141
        %v3154 = vadd.f32 %v3132, %v3141
        %v3155 = vadd.f32 %v3133, %v3141
        %v3156 = vadd.f32 %v3134, %v3141
        %v3157 = vadd.f32 %v3135, %v3141
        %v3158 = vadd.f32 %v3136, %v3141
        %v3159 = vld [vmem:[#allocation5] sm:$0xff]
        %v3160 = vld [vmem:[#allocation5 + $0x8] sm:$0xff]
        %v3161 = vld [vmem:[#allocation5 + $0x10] sm:$0xff]
        %v3162 = vld [vmem:[#allocation5 + $0x18] sm:$0xff]
        %v3163 = vld [vmem:[#allocation5 + $0x20] sm:$0xff]
        %v3164 = vld [vmem:[#allocation5 + $0x28] sm:$0xff]
        %v3165 = vld [vmem:[#allocation5 + $0x30] sm:$0xff]
        %v3166 = vld [vmem:[#allocation5 + $0x38] sm:$0xff]
        %v3167 = vld [vmem:[#allocation5 + $0x40] sm:$0xff]
        %v3168 = vld [vmem:[#allocation5 + $0x48] sm:$0xff]
        %v3169 = vld [vmem:[#allocation5 + $0x50] sm:$0xff]
        %v3170 = vld [vmem:[#allocation5 + $0x58] sm:$0xff]
        %v3171 = vld [vmem:[#allocation5 + $0x60] sm:$0xff]
        %v3172 = vld [vmem:[#allocation5 + $0x68] sm:$0xff]
        %v3173 = vld [vmem:[#allocation5 + $0x70] sm:$0xff]
        %v3174 = vld [vmem:[#allocation5 + $0x78] sm:$0xff]
        %v3175 = vpack.c.bf16 %v3144, %v3143
        %v3176 = vpack.c.bf16 %v3146, %v3145
        %v3177 = vpack.c.bf16 %v3148, %v3147
        %v3178 = vpack.c.bf16 %v3150, %v3149
        %v3179 = vpack.c.bf16 %v3152, %v3151
        %v3180 = vpack.c.bf16 %v3154, %v3153
        %v3181 = vpack.c.bf16 %v3156, %v3155
        %v3182 = vpack.c.bf16 %v3158, %v3157
        %v3183 = vld [vmem:[%s5] sm:$0x3]
        %v3185 = vlaneseq
        %v3186 = vshrl.u32 %v3185, 7
        %v3187 = vsub.s32 0, %v3186
        %v3188 = vrot.slane %v3183, %v3187
        %v3189 = vlaneseq
        %v3190 = vshrl.u32 %v3189, 7
        %v3191 = vsub.s32 1, %v3190
        %v3192 = vrot.slane %v3183, %v3191
        %v3211 = vunpack.c.l.b16 %v3159
        %v3212 = vunpack.c.h.b16 %v3159
        %v3213 = vunpack.c.l.b16 %v3160
        %v3214 = vunpack.c.h.b16 %v3160
        %v3215 = vunpack.c.l.b16 %v3161
        %v3216 = vunpack.c.h.b16 %v3161
        %v3217 = vunpack.c.l.b16 %v3162
        %v3218 = vunpack.c.h.b16 %v3162
        %v3219 = vunpack.c.l.b16 %v3163
        %v3220 = vunpack.c.h.b16 %v3163
        %v3221 = vunpack.c.l.b16 %v3164
        %v3222 = vunpack.c.h.b16 %v3164
        %v3223 = vunpack.c.l.b16 %v3165
        %v3224 = vunpack.c.h.b16 %v3165
        %v3225 = vunpack.c.l.b16 %v3166
        %v3226 = vunpack.c.h.b16 %v3166
        %v3227 = vunpack.c.l.b16 %v3167
        %v3228 = vunpack.c.h.b16 %v3167
        %v3229 = vunpack.c.l.b16 %v3168
        %v3230 = vunpack.c.h.b16 %v3168
        %v3231 = vunpack.c.l.b16 %v3169
        %v3232 = vunpack.c.h.b16 %v3169
        %v3233 = vunpack.c.l.b16 %v3170
        %v3234 = vunpack.c.h.b16 %v3170
        %v3235 = vunpack.c.l.b16 %v3171
        %v3236 = vunpack.c.h.b16 %v3171
        %v3237 = vunpack.c.l.b16 %v3172
        %v3238 = vunpack.c.h.b16 %v3172
        %v3239 = vunpack.c.l.b16 %v3173
        %v3240 = vunpack.c.h.b16 %v3173
        %v3241 = vunpack.c.l.b16 %v3174
        %v3242 = vunpack.c.h.b16 %v3174
        %v3243 = vpack.c.b16 %v3213, %v3211
        %v3244 = vpack.c.b16 %v3214, %v3212
        %v3245 = vpack.c.b16 %v3217, %v3215
        %v3246 = vpack.c.b16 %v3218, %v3216
        %v3247 = vpack.c.b16 %v3221, %v3219
        %v3248 = vpack.c.b16 %v3222, %v3220
        %v3249 = vpack.c.b16 %v3225, %v3223
        %v3250 = vpack.c.b16 %v3226, %v3224
        %v3251 = vpack.c.b16 %v3229, %v3227
        %v3252 = vpack.c.b16 %v3230, %v3228
        %v3253 = vpack.c.b16 %v3233, %v3231
        %v3254 = vpack.c.b16 %v3234, %v3232
        %v3255 = vpack.c.b16 %v3237, %v3235
        %v3256 = vpack.c.b16 %v3238, %v3236
        %v3257 = vpack.c.b16 %v3241, %v3239
        %v3258 = vpack.c.b16 %v3242, %v3240
        %3275 = vmatprep.subr.bf16.mxu0 %v3258
        %3276 = vmatpush1.bf16.msra.mxu0 %v3257
        %3277 = vmatprep.subr.bf16.mxu0 %v3256
        %3278 = vmatpush1.bf16.msra.mxu0 %v3255
        %3279 = vmatprep.subr.bf16.mxu0 %v3254
        %3280 = vmatpush1.bf16.msra.mxu0 %v3253
        %3281 = vmatprep.subr.bf16.mxu0 %v3252
        %3282 = vmatpush1.bf16.msra.mxu0 %v3251
        %3283 = vmatprep.subr.bf16.mxu0 %v3250
        %3284 = vmatpush1.bf16.msra.mxu0 %v3249
        %3285 = vmatprep.subr.bf16.mxu0 %v3248
        %3286 = vmatpush1.bf16.msra.mxu0 %v3247
        %3287 = vmatprep.subr.bf16.mxu0 %v3246
        %3288 = vmatpush1.bf16.msra.mxu0 %v3245
        %3289 = vmatprep.subr.bf16.mxu0 %v3244
        %3290 = vmatpush1.bf16.msra.mxu0 %v3243
        %3291 = vmatprep.subr.bf16.mxu0 0
        %3292 = vmatpush2.bf16.msra.mxu0 0
        %3293 = vmatprep.subr.bf16.mxu0 0
        %3294 = vmatpush2.bf16.msra.mxu0 0
        %3295 = vmatprep.subr.bf16.mxu0 0
        %3296 = vmatpush2.bf16.msra.mxu0 0
        %3297 = vmatprep.subr.bf16.mxu0 0
        %3298 = vmatpush2.bf16.msra.mxu0 0
        %3299 = vmatprep.subr.bf16.mxu0 0
        %3300 = vmatpush2.bf16.msra.mxu0 0
        %3301 = vmatprep.subr.bf16.mxu0 0
        %3302 = vmatpush2.bf16.msra.mxu0 0
        %3303 = vmatprep.subr.bf16.mxu0 0
        %3304 = vmatpush2.bf16.msra.mxu0 0
        %3305 = vmatprep.subr.bf16.mxu0 0
        %3306 = vmatpush2.bf16.msra.mxu0 0
        %3307 = vmatprep.mubr.bf16.mxu0 0
        %3308 = vmatmul.mubr.bf16.gmra.mxu0 %v3175
        %v3309 = vpop.f32.mrf.mxu0
        %v3310 = vadd.f32 %v3188, %v3309
        %v3311 = vpop.f32.mrf.mxu0
        %v3312 = vadd.f32 %v3192, %v3311
        %v3313 = vpop.f32.mrf.mxu0
        %v3314 = vadd.f32 %v3188, %v3313
        %v3315 = vpop.f32.mrf.mxu0
        %v3316 = vadd.f32 %v3192, %v3315
        %3317 = vmatprep.mubr.bf16.mxu0 0
        %3318 = vmatmul.mubr.bf16.gmra.mxu0 %v3176
        %v3319 = vpop.f32.mrf.mxu0
        %v3320 = vadd.f32 %v3188, %v3319
        %v3321 = vpop.f32.mrf.mxu0
        %v3322 = vadd.f32 %v3192, %v3321
        %v3323 = vpop.f32.mrf.mxu0
        %v3324 = vadd.f32 %v3188, %v3323
        %v3325 = vpop.f32.mrf.mxu0
        %v3326 = vadd.f32 %v3192, %v3325
        %3327 = vmatprep.mubr.bf16.mxu0 0
        %3328 = vmatmul.mubr.bf16.gmra.mxu0 %v3177
        %v3329 = vpop.f32.mrf.mxu0
        %v3330 = vadd.f32 %v3188, %v3329
        %v3331 = vpop.f32.mrf.mxu0
        %v3332 = vadd.f32 %v3192, %v3331
        %v3333 = vpop.f32.mrf.mxu0
        %v3334 = vadd.f32 %v3188, %v3333
        %v3335 = vpop.f32.mrf.mxu0
        %v3336 = vadd.f32 %v3192, %v3335
        %3337 = vmatprep.mubr.bf16.mxu0 0
        %3338 = vmatmul.mubr.bf16.gmra.mxu0 %v3178
        %v3339 = vpop.f32.mrf.mxu0
        %v3340 = vadd.f32 %v3188, %v3339
        %v3341 = vpop.f32.mrf.mxu0
        %v3342 = vadd.f32 %v3192, %v3341
        %v3343 = vpop.f32.mrf.mxu0
        %v3344 = vadd.f32 %v3188, %v3343
        %v3345 = vpop.f32.mrf.mxu0
        %v3346 = vadd.f32 %v3192, %v3345
        %3347 = vmatprep.mubr.bf16.mxu0 0
        %3348 = vmatmul.mubr.bf16.gmra.mxu0 %v3179
        %v3349 = vpop.f32.mrf.mxu0
        %v3350 = vadd.f32 %v3188, %v3349
        %v3351 = vpop.f32.mrf.mxu0
        %v3352 = vadd.f32 %v3192, %v3351
        %v3353 = vpop.f32.mrf.mxu0
        %v3354 = vadd.f32 %v3188, %v3353
        %v3355 = vpop.f32.mrf.mxu0
        %v3356 = vadd.f32 %v3192, %v3355
        %3357 = vmatprep.mubr.bf16.mxu0 0
        %3358 = vmatmul.mubr.bf16.gmra.mxu0 %v3180
        %v3359 = vpop.f32.mrf.mxu0
        %v3360 = vadd.f32 %v3188, %v3359
        %v3361 = vpop.f32.mrf.mxu0
        %v3362 = vadd.f32 %v3192, %v3361
        %v3363 = vpop.f32.mrf.mxu0
        %v3364 = vadd.f32 %v3188, %v3363
        %v3365 = vpop.f32.mrf.mxu0
        %v3366 = vadd.f32 %v3192, %v3365
        %3367 = vmatprep.mubr.bf16.mxu0 0
        %3368 = vmatmul.mubr.bf16.gmra.mxu0 %v3181
        %v3369 = vpop.f32.mrf.mxu0
        %v3370 = vadd.f32 %v3188, %v3369
        %v3371 = vpop.f32.mrf.mxu0
        %v3372 = vadd.f32 %v3192, %v3371
        %v3373 = vpop.f32.mrf.mxu0
        %v3374 = vadd.f32 %v3188, %v3373
        %v3375 = vpop.f32.mrf.mxu0
        %v3376 = vadd.f32 %v3192, %v3375
        %3377 = vmatprep.mubr.bf16.mxu0 0
        %3378 = vmatmul.mubr.bf16.gmra.mxu0 %v3182
        %v3379 = vpop.f32.mrf.mxu0
        %v3380 = vadd.f32 %v3188, %v3379
        %v3381 = vpop.f32.mrf.mxu0
        %v3382 = vadd.f32 %v3192, %v3381
        %v3383 = vpop.f32.mrf.mxu0
        %v3384 = vadd.f32 %v3188, %v3383
        %v3385 = vpop.f32.mrf.mxu0
        %v3386 = vadd.f32 %v3192, %v3385
        %3387 = vdwg.mxu0
        %v3388 = vmax.f32 %v3310, 0.0
        %v3389 = vmax.f32 %v3312, 0.0
        %v3390 = vmax.f32 %v3314, 0.0
        %v3391 = vmax.f32 %v3316, 0.0
        %v3392 = vmax.f32 %v3320, 0.0
        %v3393 = vmax.f32 %v3322, 0.0
        %v3394 = vmax.f32 %v3324, 0.0
        %v3395 = vmax.f32 %v3326, 0.0
        %v3396 = vmax.f32 %v3330, 0.0
        %v3397 = vmax.f32 %v3332, 0.0
        %v3398 = vmax.f32 %v3334, 0.0
        %v3399 = vmax.f32 %v3336, 0.0
        %v3400 = vmax.f32 %v3340, 0.0
        %v3401 = vmax.f32 %v3342, 0.0
        %v3402 = vmax.f32 %v3344, 0.0
        %v3403 = vmax.f32 %v3346, 0.0
        %v3404 = vmax.f32 %v3350, 0.0
        %v3405 = vmax.f32 %v3352, 0.0
        %v3406 = vmax.f32 %v3354, 0.0
        %v3407 = vmax.f32 %v3356, 0.0
        %v3408 = vmax.f32 %v3360, 0.0
        %v3409 = vmax.f32 %v3362, 0.0
        %v3410 = vmax.f32 %v3364, 0.0
        %v3411 = vmax.f32 %v3366, 0.0
        %v3412 = vmax.f32 %v3370, 0.0
        %v3413 = vmax.f32 %v3372, 0.0
        %v3414 = vmax.f32 %v3374, 0.0
        %v3415 = vmax.f32 %v3376, 0.0
        %v3416 = vmax.f32 %v3380, 0.0
        %v3417 = vmax.f32 %v3382, 0.0
        %v3418 = vmax.f32 %v3384, 0.0
        %v3419 = vmax.f32 %v3386, 0.0
        %v3420 = vld [vmem:[#allocation8] sm:$0xf]
        %v3421 = vld [vmem:[#allocation8 + $0x4] sm:$0xf]
        %v3422 = vld [vmem:[#allocation8 + $0x8] sm:$0xf]
        %v3423 = vld [vmem:[#allocation8 + $0xc] sm:$0xf]
        %v3424 = vld [vmem:[#allocation8 + $0x10] sm:$0xf]
        %v3425 = vld [vmem:[#allocation8 + $0x14] sm:$0xf]
        %v3426 = vld [vmem:[#allocation8 + $0x18] sm:$0xf]
        %v3427 = vld [vmem:[#allocation8 + $0x1c] sm:$0xf]
        %v3428 = vld [vmem:[#allocation8 + $0x20] sm:$0xf]
        %v3429 = vld [vmem:[#allocation8 + $0x24] sm:$0xf]
        %v3430 = vld [vmem:[#allocation8 + $0x28] sm:$0xf]
        %v3431 = vld [vmem:[#allocation8 + $0x2c] sm:$0xf]
        %v3432 = vld [vmem:[#allocation8 + $0x30] sm:$0xf]
        %v3433 = vld [vmem:[#allocation8 + $0x34] sm:$0xf]
        %v3434 = vld [vmem:[#allocation8 + $0x38] sm:$0xf]
        %v3435 = vld [vmem:[#allocation8 + $0x3c] sm:$0xf]
        %v3436 = vld [vmem:[#allocation8 + $0x40] sm:$0xf]
        %v3437 = vld [vmem:[#allocation8 + $0x44] sm:$0xf]
        %v3438 = vld [vmem:[#allocation8 + $0x48] sm:$0xf]
        %v3439 = vld [vmem:[#allocation8 + $0x4c] sm:$0xf]
        %v3440 = vld [vmem:[#allocation8 + $0x50] sm:$0xf]
        %v3441 = vld [vmem:[#allocation8 + $0x54] sm:$0xf]
        %v3442 = vld [vmem:[#allocation8 + $0x58] sm:$0xf]
        %v3443 = vld [vmem:[#allocation8 + $0x5c] sm:$0xf]
        %v3444 = vld [vmem:[#allocation8 + $0x60] sm:$0xf]
        %v3445 = vld [vmem:[#allocation8 + $0x64] sm:$0xf]
        %v3446 = vld [vmem:[#allocation8 + $0x68] sm:$0xf]
        %v3447 = vld [vmem:[#allocation8 + $0x6c] sm:$0xf]
        %v3448 = vld [vmem:[#allocation8 + $0x70] sm:$0xf]
        %v3449 = vld [vmem:[#allocation8 + $0x74] sm:$0xf]
        %v3450 = vld [vmem:[#allocation8 + $0x78] sm:$0xf]
        %v3451 = vld [vmem:[#allocation8 + $0x7c] sm:$0xf]
        %v3452 = vpack.c.bf16 %v3390, %v3388
        %v3453 = vpack.c.bf16 %v3391, %v3389
        %v3454 = vpack.c.bf16 %v3394, %v3392
        %v3455 = vpack.c.bf16 %v3395, %v3393
        %v3456 = vpack.c.bf16 %v3398, %v3396
        %v3457 = vpack.c.bf16 %v3399, %v3397
        %v3458 = vpack.c.bf16 %v3402, %v3400
        %v3459 = vpack.c.bf16 %v3403, %v3401
        %v3460 = vpack.c.bf16 %v3406, %v3404
        %v3461 = vpack.c.bf16 %v3407, %v3405
        %v3462 = vpack.c.bf16 %v3410, %v3408
        %v3463 = vpack.c.bf16 %v3411, %v3409
        %v3464 = vpack.c.bf16 %v3414, %v3412
        %v3465 = vpack.c.bf16 %v3415, %v3413
        %v3466 = vpack.c.bf16 %v3418, %v3416
        %v3467 = vpack.c.bf16 %v3419, %v3417
        %v3500 = vunpack.c.l.b16 %v3420
        %v3501 = vunpack.c.l.b16 %v3421
        %v3502 = vunpack.c.l.b16 %v3422
        %v3503 = vunpack.c.l.b16 %v3423
        %v3504 = vunpack.c.l.b16 %v3424
        %v3505 = vunpack.c.l.b16 %v3425
        %v3506 = vunpack.c.l.b16 %v3426
        %v3507 = vunpack.c.l.b16 %v3427
        %v3508 = vunpack.c.l.b16 %v3428
        %v3509 = vunpack.c.l.b16 %v3429
        %v3510 = vunpack.c.l.b16 %v3430
        %v3511 = vunpack.c.l.b16 %v3431
        %v3512 = vunpack.c.l.b16 %v3432
        %v3513 = vunpack.c.l.b16 %v3433
        %v3514 = vunpack.c.l.b16 %v3434
        %v3515 = vunpack.c.l.b16 %v3435
        %v3516 = vunpack.c.l.b16 %v3436
        %v3517 = vunpack.c.l.b16 %v3437
        %v3518 = vunpack.c.l.b16 %v3438
        %v3519 = vunpack.c.l.b16 %v3439
        %v3520 = vunpack.c.l.b16 %v3440
        %v3521 = vunpack.c.l.b16 %v3441
        %v3522 = vunpack.c.l.b16 %v3442
        %v3523 = vunpack.c.l.b16 %v3443
        %v3524 = vunpack.c.l.b16 %v3444
        %v3525 = vunpack.c.l.b16 %v3445
        %v3526 = vunpack.c.l.b16 %v3446
        %v3527 = vunpack.c.l.b16 %v3447
        %v3528 = vunpack.c.l.b16 %v3448
        %v3529 = vunpack.c.l.b16 %v3449
        %v3530 = vunpack.c.l.b16 %v3450
        %v3531 = vunpack.c.l.b16 %v3451
        %v3532 = vpack.c.b16 %v3501, %v3500
        %v3533 = vpack.c.b16 %v3503, %v3502
        %v3534 = vpack.c.b16 %v3505, %v3504
        %v3535 = vpack.c.b16 %v3507, %v3506
        %v3536 = vpack.c.b16 %v3509, %v3508
        %v3537 = vpack.c.b16 %v3511, %v3510
        %v3538 = vpack.c.b16 %v3513, %v3512
        %v3539 = vpack.c.b16 %v3515, %v3514
        %v3540 = vpack.c.b16 %v3517, %v3516
        %v3541 = vpack.c.b16 %v3519, %v3518
        %v3542 = vpack.c.b16 %v3521, %v3520
        %v3543 = vpack.c.b16 %v3523, %v3522
        %v3544 = vpack.c.b16 %v3525, %v3524
        %v3545 = vpack.c.b16 %v3527, %v3526
        %v3546 = vpack.c.b16 %v3529, %v3528
        %v3547 = vpack.c.b16 %v3531, %v3530
        %3564 = vmatprep.subr.bf16.mxu0 0
        %3565 = vmatpush1.bf16.msra.mxu0 %v3539
        %3566 = vmatprep.subr.bf16.mxu0 0
        %3567 = vmatpush1.bf16.msra.mxu0 %v3538
        %3568 = vmatprep.subr.bf16.mxu0 0
        %3569 = vmatpush1.bf16.msra.mxu0 %v3537
        %3570 = vmatprep.subr.bf16.mxu0 0
        %3571 = vmatpush1.bf16.msra.mxu0 %v3536
        %3572 = vmatprep.subr.bf16.mxu0 0
        %3573 = vmatpush1.bf16.msra.mxu0 %v3535
        %3574 = vmatprep.subr.bf16.mxu0 0
        %3575 = vmatpush1.bf16.msra.mxu0 %v3534
        %3576 = vmatprep.subr.bf16.mxu0 0
        %3577 = vmatpush1.bf16.msra.mxu0 %v3533
        %3578 = vmatprep.subr.bf16.mxu0 0
        %3579 = vmatpush1.bf16.msra.mxu0 %v3532
        %3580 = vmatprep.subr.bf16.mxu0 0
        %3581 = vmatpush2.bf16.msra.mxu0 %v3547
        %3582 = vmatprep.subr.bf16.mxu0 0
        %3583 = vmatpush2.bf16.msra.mxu0 %v3546
        %3584 = vmatprep.subr.bf16.mxu0 0
        %3585 = vmatpush2.bf16.msra.mxu0 %v3545
        %3586 = vmatprep.subr.bf16.mxu0 0
        %3587 = vmatpush2.bf16.msra.mxu0 %v3544
        %3588 = vmatprep.subr.bf16.mxu0 0
        %3589 = vmatpush2.bf16.msra.mxu0 %v3543
        %3590 = vmatprep.subr.bf16.mxu0 0
        %3591 = vmatpush2.bf16.msra.mxu0 %v3542
        %3592 = vmatprep.subr.bf16.mxu0 0
        %3593 = vmatpush2.bf16.msra.mxu0 %v3541
        %3594 = vmatprep.subr.bf16.mxu0 0
        %3595 = vmatpush2.bf16.msra.mxu0 %v3540
        %3596 = vmatprep.mubr.bf16.mxu0 %v3453
        %3597 = vmatmul.mubr.bf16.gmra.mxu0 %v3452
        %v3598 = vpop.f32.mrf.mxu0
        %v3599 = vadd.f32 0.0, %v3598
        %v3600 = vpop.f32.mrf.mxu0
        %v3601 = vpop.f32.mrf.mxu0
        %v3602 = vadd.f32 0.0, %v3601
        %v3603 = vpop.f32.mrf.mxu0
        %3604 = vmatprep.mubr.bf16.mxu0 %v3455
        %3605 = vmatmul.mubr.bf16.gmra.mxu0 %v3454
        %v3606 = vpop.f32.mrf.mxu0
        %v3607 = vadd.f32 0.0, %v3606
        %v3608 = vpop.f32.mrf.mxu0
        %v3609 = vpop.f32.mrf.mxu0
        %v3610 = vadd.f32 0.0, %v3609
        %v3611 = vpop.f32.mrf.mxu0
        %3612 = vmatprep.mubr.bf16.mxu0 %v3457
        %3613 = vmatmul.mubr.bf16.gmra.mxu0 %v3456
        %v3614 = vpop.f32.mrf.mxu0
        %v3615 = vadd.f32 0.0, %v3614
        %v3616 = vpop.f32.mrf.mxu0
        %v3617 = vpop.f32.mrf.mxu0
        %v3618 = vadd.f32 0.0, %v3617
        %v3619 = vpop.f32.mrf.mxu0
        %3620 = vmatprep.mubr.bf16.mxu0 %v3459
        %3621 = vmatmul.mubr.bf16.gmra.mxu0 %v3458
        %v3622 = vpop.f32.mrf.mxu0
        %v3623 = vadd.f32 0.0, %v3622
        %v3624 = vpop.f32.mrf.mxu0
        %v3625 = vpop.f32.mrf.mxu0
        %v3626 = vadd.f32 0.0, %v3625
        %v3627 = vpop.f32.mrf.mxu0
        %3628 = vmatprep.mubr.bf16.mxu0 %v3461
        %3629 = vmatmul.mubr.bf16.gmra.mxu0 %v3460
        %v3630 = vpop.f32.mrf.mxu0
        %v3631 = vadd.f32 0.0, %v3630
        %v3632 = vpop.f32.mrf.mxu0
        %v3633 = vpop.f32.mrf.mxu0
        %v3634 = vadd.f32 0.0, %v3633
        %v3635 = vpop.f32.mrf.mxu0
        %3636 = vmatprep.mubr.bf16.mxu0 %v3463
        %3637 = vmatmul.mubr.bf16.gmra.mxu0 %v3462
        %v3638 = vpop.f32.mrf.mxu0
        %v3639 = vadd.f32 0.0, %v3638
        %v3640 = vpop.f32.mrf.mxu0
        %v3641 = vpop.f32.mrf.mxu0
        %v3642 = vadd.f32 0.0, %v3641
        %v3643 = vpop.f32.mrf.mxu0
        %3644 = vmatprep.mubr.bf16.mxu0 %v3465
        %3645 = vmatmul.mubr.bf16.gmra.mxu0 %v3464
        %v3646 = vpop.f32.mrf.mxu0
        %v3647 = vadd.f32 0.0, %v3646
        %v3648 = vpop.f32.mrf.mxu0
        %v3649 = vpop.f32.mrf.mxu0
        %v3650 = vadd.f32 0.0, %v3649
        %v3651 = vpop.f32.mrf.mxu0
        %3652 = vmatprep.mubr.bf16.mxu0 %v3467
        %3653 = vmatmul.mubr.bf16.gmra.mxu0 %v3466
        %v3654 = vpop.f32.mrf.mxu0
        %v3655 = vadd.f32 0.0, %v3654
        %v3656 = vpop.f32.mrf.mxu0
        %v3657 = vpop.f32.mrf.mxu0
        %v3658 = vadd.f32 0.0, %v3657
        %v3659 = vpop.f32.mrf.mxu0
        %3660 = vdwg.mxu0
        %v3661 = vadd.f32 %v2920, %v3599
        %v3662 = vadd.f32 %v2921, %v3602
        %v3663 = vadd.f32 %v2922, %v3607
        %v3664 = vadd.f32 %v2923, %v3610
        %v3665 = vadd.f32 %v2924, %v3615
        %v3666 = vadd.f32 %v2925, %v3618
        %v3667 = vadd.f32 %v2926, %v3623
        %v3668 = vadd.f32 %v2927, %v3626
        %v3669 = vadd.f32 %v2928, %v3631
        %v3670 = vadd.f32 %v2929, %v3634
        %v3671 = vadd.f32 %v2930, %v3639
        %v3672 = vadd.f32 %v2931, %v3642
        %v3673 = vadd.f32 %v2932, %v3647
        %v3674 = vadd.f32 %v2933, %v3650
        %v3675 = vadd.f32 %v2934, %v3655
        %v3676 = vadd.f32 %v2935, %v3658
        %v3677 = vld [vmem:[%s7] sm:$0x1]
        %v3679 = vlaneseq
        %v3680 = vshrl.u32 %v3679, 7
        %v3681 = vsub.s32 0, %v3680
        %v3682 = vrot.slane %v3677, %v3681
        %v3684 = vadd.f32 %v3661, %v3682
        %v3685 = vadd.f32 %v3662, %v3682
        %v3686 = vadd.f32 %v3663, %v3682
        %v3687 = vadd.f32 %v3664, %v3682
        %v3688 = vadd.f32 %v3665, %v3682
        %v3689 = vadd.f32 %v3666, %v3682
        %v3690 = vadd.f32 %v3667, %v3682
        %v3691 = vadd.f32 %v3668, %v3682
        %v3692 = vadd.f32 %v3669, %v3682
        %v3693 = vadd.f32 %v3670, %v3682
        %v3694 = vadd.f32 %v3671, %v3682
        %v3695 = vadd.f32 %v3672, %v3682
        %v3696 = vadd.f32 %v3673, %v3682
        %v3697 = vadd.f32 %v3674, %v3682
        %v3698 = vadd.f32 %v3675, %v3682
        %v3699 = vadd.f32 %v3676, %v3682
        %v3700 = vpack.c.bf16 %v3685, %v3684
        %v3701 = vpack.c.bf16 %v3687, %v3686
        %v3702 = vpack.c.bf16 %v3689, %v3688
        %v3703 = vpack.c.bf16 %v3691, %v3690
        %v3704 = vpack.c.bf16 %v3693, %v3692
        %v3705 = vpack.c.bf16 %v3695, %v3694
        %v3706 = vpack.c.bf16 %v3697, %v3696
        %v3707 = vpack.c.bf16 %v3699, %v3698
        %v3716 = vunpack.c.l.b16 %v3700
        %v3717 = vunpack.c.h.b16 %v3700
        %v3718 = vunpack.c.l.b16 %v3701
        %v3719 = vunpack.c.h.b16 %v3701
        %v3720 = vunpack.c.l.b16 %v3702
        %v3721 = vunpack.c.h.b16 %v3702
        %v3722 = vunpack.c.l.b16 %v3703
        %v3723 = vunpack.c.h.b16 %v3703
        %v3724 = vunpack.c.l.b16 %v3704
        %v3725 = vunpack.c.h.b16 %v3704
        %v3726 = vunpack.c.l.b16 %v3705
        %v3727 = vunpack.c.h.b16 %v3705
        %v3728 = vunpack.c.l.b16 %v3706
        %v3729 = vunpack.c.h.b16 %v3706
        %v3730 = vunpack.c.l.b16 %v3707
        %v3731 = vunpack.c.h.b16 %v3707
        %v3732 = vpack.c.b16 %v3716, %v3716
        %v3733 = vpack.c.b16 %v3717, %v3717
        %v3734 = vpack.c.b16 %v3718, %v3718
        %v3735 = vpack.c.b16 %v3719, %v3719
        %v3736 = vpack.c.b16 %v3720, %v3720
        %v3737 = vpack.c.b16 %v3721, %v3721
        %v3738 = vpack.c.b16 %v3722, %v3722
        %v3739 = vpack.c.b16 %v3723, %v3723
        %v3740 = vpack.c.b16 %v3724, %v3724
        %v3741 = vpack.c.b16 %v3725, %v3725
        %v3742 = vpack.c.b16 %v3726, %v3726
        %v3743 = vpack.c.b16 %v3727, %v3727
        %v3744 = vpack.c.b16 %v3728, %v3728
        %v3745 = vpack.c.b16 %v3729, %v3729
        %v3746 = vpack.c.b16 %v3730, %v3730
        %v3747 = vpack.c.b16 %v3731, %v3731
        %3764 = vst [vmem:[%s476] sm:$0xf] %v3732
        %3765 = vst [vmem:[%s476 + $0x4] sm:$0xf] %v3733
        %3766 = vst [vmem:[%s476 + $0x8] sm:$0xf] %v3734
        %3767 = vst [vmem:[%s476 + $0xc] sm:$0xf] %v3735
        %3768 = vst [vmem:[%s476 + $0x10] sm:$0xf] %v3736
        %3769 = vst [vmem:[%s476 + $0x14] sm:$0xf] %v3737
        %3770 = vst [vmem:[%s476 + $0x18] sm:$0xf] %v3738
        %3771 = vst [vmem:[%s476 + $0x1c] sm:$0xf] %v3739
        %3772 = vst [vmem:[%s476 + $0x20] sm:$0xf] %v3740
        %3773 = vst [vmem:[%s476 + $0x24] sm:$0xf] %v3741
        %3774 = vst [vmem:[%s476 + $0x28] sm:$0xf] %v3742
        %3775 = vst [vmem:[%s476 + $0x2c] sm:$0xf] %v3743
        %3776 = vst [vmem:[%s476 + $0x30] sm:$0xf] %v3744
        %3777 = vst [vmem:[%s476 + $0x34] sm:$0xf] %v3745
        %3778 = vst [vmem:[%s476 + $0x38] sm:$0xf] %v3746
        %3779 = vst [vmem:[%s476 + $0x3c] sm:$0xf] %v3747
        %s3780 = sand.u32 %s314, 1
        %s3781 = scalar_lea.sflag [#allocation7], %s3780
        %s3782 = sand.u32 %s314, 1
        %s3783 = smul.addr %s3782, 64
        %s3784 = scalar_lea.vmem [#allocation10], %s3783
        // Predicated region
        $region88: #{encoder_forward.1} parent=67 // pred_check
          %p3785 = pneg %p324
        $region89: #{encoder_forward.1} parent=67 // pred_check_branch
          %3787 = sbr.rel (%p3785) target = $region91
        $region90: #{encoder_forward.1} parent=67 // pred_region
          %s3788 = smul.u32 16, %s33
          %s3790 = ssub.s32 1024, 1024
          %3791 = vsyncadd %s3781, %s3790
          %s3792 = smul.addr %s32, 32
          %s3793 = sadd.s32 %s3788, %s3792
          %s3794 = smul.addr %s3793, 64
          %s3795 = scalar_lea.hbm %s12, %s3794
          %s3796 = sshll.u32 %s3784, 4
          %s3797 = int_to_ptr.vmem [resolvable:$true] %s3796
          %3802 = dma.vmem_to_hbm [thread:$0]  %s3797, 1024, %s3795, %s3781, 64, 64, 4
        $region91: #{encoder_forward.1} parent=67 // pred_fallthru
          _
      $region68: #{encoder_forward.1} parent=5 // pred_fallthru
        _
      %p3803 = scmp.le.s32.totalorder 2, %s23
      // Predicated region
      $region92: #{encoder_forward.1} parent=5 // pred_check
        %p3804 = pneg %p3803
      $region93: #{encoder_forward.1} parent=5 // pred_check_branch
        %3806 = sbr.rel (%p3804) target = $region95
      $region94: #{encoder_forward.1} parent=5 // pred_region
        %s3807 = ssub.s32 %s23, 2
        // Predicated region
        $region96: #{encoder_forward.1} parent=94 // pred_check
          %p3808 = pneg %p330
        $region97: #{encoder_forward.1} parent=94 // pred_check_branch
          %3810 = sbr.rel (%p3808) target = $region99
        $region98: #{encoder_forward.1} parent=94 // pred_region
          %s3811 = sand.u32 %s315, 1
          %s3812 = scalar_lea.sflag [#allocation7], %s3811
          %s3813 = sand.u32 %s315, 1
          %s3814 = smul.addr %s3813, 64
          %s3815 = scalar_lea.vmem [#allocation10], %s3814
          %3816 = dma.done %s3812, 1024
        $region99: #{encoder_forward.1} parent=94 // pred_fallthru
          _
      $region95: #{encoder_forward.1} parent=5 // pred_fallthru
        _
    $region6: #{encoder_forward.1} parent=1 // loop_footer
      %s27 = sadd.s32 1, %s23
    $region7: #{encoder_forward.1} parent=1 // loop_footer_branch
      %22 = sbr.rel target = $region3
    $region8: #{encoder_forward.1} parent=1 // loop_exit
      _
    %3817 = vsyncpa [#allocation6], 1
    %s3818 = scalar_lea.sflag [#allocation6], 1
    %3819 = vsyncpa %s3818, 1
    %3820 = vsyncpa [#allocation9], 1
    %3821 = vsyncpa [#allocation7], 1
    %s3822 = scalar_lea.sflag [#allocation7], 1
    %3823 = vsyncpa %s3822, 1

</llo_original>
